<compile_context>
chip_gen: v7x
topology: tpu7x:2x2x1
jax: 0.10.0
libtpu: 0.0.40
codegen_flags: <defaults>
</compile_context>

<pallas_src>
import numpy as np
import jax
import jax.numpy as jnp
from jax.experimental import pallas as pl
from jax.experimental.pallas import tpu as pltpu

# ---------------- configuration (small, consistent with the module) ----------------
G = 2               # graphs per batch
NG = 8              # nodes per graph (equal-size graphs; see TODO in forward)
N = G * NG          # total nodes
D = 32              # gconv_dim == tlayer_dim
OUT_DIM = 8         # out_dim
NUM_LAYERS = 2      # num_layers (module default 4, kept small here)
GAT_HEADS = 8       # GATConv heads
GAT_HC = D // GAT_HEADS
T_HEADS = 4         # transformer num_heads
T_HD = D // T_HEADS
FFN = 2 * D
DP = D + 8          # edge-feature matmul K dim (D features + mask column + zero pad)
EPS = 1e-5
NEG = -1e9
f32 = jnp.float32
bf16 = jnp.bfloat16


# ---------------- fused per-graph forward kernel ----------------
def fused_forward_kernel(
        x0_ref, e_aug_ref, rep_cat_ref, pool_dst_ref,
        gat_big_ref, gat_vedge_ref, gat_hmask_ref, gat_bias_ref,
        mid_w_ref, mid_vec_ref,
        tl_wqkv_ref, tl_bqkv_ref, tl_wo_ref, tl_bo_ref,
        tl_w1_ref, tl_b1_ref, tl_w2_ref, tl_b2_ref, tl_ln_ref,
        lin2_w_ref, lin2_b_ref,
        out_ref):
    x = x0_ref[...]                       # [NG, D] f32, VMEM/vreg resident for the whole pass
    e_aug = e_aug_ref[...]                # [NG*NG, DP] bf16 (edge feats + adjacency mask column)
    rep_cat = rep_cat_ref[...]            # [NG*NG, 2*NG] bf16: [onehot(dst) | onehot(src)]
    rep_src = rep_cat[:, NG:2 * NG]       # [NG*NG, NG]
    pool_dst = pool_dst_ref[...]          # [NG, NG*NG] bf16: sums over src per dst
    gat_hmask = gat_hmask_ref[...]        # [GAT_HEADS, D] bf16 block-diagonal head selector

    def mm(a, b):                         # bf16-operand MXU matmul, f32 accumulation
        return jnp.dot(a.astype(bf16), b.astype(bf16), preferred_element_type=f32)

    def layer_norm(y, g, b):
        mu = jnp.mean(y, axis=-1, keepdims=True)
        var = jnp.mean((y - mu) ** 2, axis=-1, keepdims=True)
        return (y - mu) * jax.lax.rsqrt(var + EPS) * g + b

    # ---------------- GAT + (Linear -> LayerNorm -> ReLU) stack ----------------
    for l in range(NUM_LAYERS):
        big = mm(x, gat_big_ref[l])                       # [NG, D+2H] = [xw | att_src | att_dst]
        xw = big[:, 0:D]
        att_src = big[:, D:D + GAT_HEADS]                 # [NG, H]
        att_dst = big[:, D + GAT_HEADS:D + 2 * GAT_HEADS]
        att_cat = jnp.concatenate([att_dst, att_src], axis=0)            # [2*NG, H]
        # edge-feature attention with the adjacency NEG-mask folded into the same matmul
        att_edge = mm(e_aug, gat_vedge_ref[l])                           # [NG*NG, H]
        logits = att_edge + mm(rep_cat, att_cat)                         # att_dst[d]+att_src[s]
        logits = jnp.where(logits > 0, logits, 0.2 * logits)             # LeakyReLU(0.2)

        # softmax over incoming edges (src axis) for all heads at once
        l3 = logits.reshape(NG, NG, GAT_HEADS)
        mmax = jnp.max(l3, axis=1, keepdims=True)
        p = jnp.exp(l3 - mmax)
        denom = jnp.sum(p, axis=1, keepdims=True)
        attn = (p * pl.reciprocal(denom, approx=True)).reshape(NG * NG, GAT_HEADS)

        # aggregation: out[dst,d] = sum_src attn[dst,src,head(d)] * xw[src,d]
        pa = mm(attn, gat_hmask)                           # [NG*NG, D]
        src_vals = mm(rep_src, xw)                         # [NG*NG, D] (matmul replaces broadcast)
        x = mm(pool_dst, pa * src_vals) + gat_bias_ref[l]  # [NG, D]

        # middle_linear -> middle_ln -> relu (dropout p=0)
        mv = mid_vec_ref[l]                                # [3, D] = (bias, gamma, beta)
        y = mm(x, mid_w_ref[l]) + mv[0:1, :]
        x = jnp.maximum(layer_norm(y, mv[1:2, :], mv[2:3, :]), 0.0)

    # ---------------- transformer encoder stack ----------------
    # TODO(synk): GraphTransformerEncoderLayer's clustering / masked_attention internals are not
    #             defined in the reference snippet; standard graph-masked MHA + FFN (post-LN) used
    #             (graph mask is implicit: each grid step only sees one graph's nodes).
    scale = 1.0 / (T_HD ** 0.5)
    for l in range(NUM_LAYERS):
        qkv = mm(x, tl_wqkv_ref[l]) + tl_bqkv_ref[l]       # [NG, 3D]
        ctx_heads = []
        for h in range(T_HEADS):                           # per-head scores directly on the MXU
            qh = qkv[:, h * T_HD:(h + 1) * T_HD]
            kh = qkv[:, D + h * T_HD:D + (h + 1) * T_HD]
            vh = qkv[:, 2 * D + h * T_HD:2 * D + (h + 1) * T_HD]
            s = jax.lax.dot_general(qh.astype(bf16), kh.astype(bf16),
                                    dimension_numbers=(((1,), (1,)), ((), ())),
                                    preferred_element_type=f32) * scale          # [NG, NG]
            smax = jnp.max(s, axis=-1, keepdims=True)
            p = jnp.exp(s - smax)
            a = p * pl.reciprocal(jnp.sum(p, axis=-1, keepdims=True), approx=True)
            ctx_heads.append(mm(a, vh))                    # [NG, T_HD]
        ctx = jnp.concatenate(ctx_heads, axis=-1)          # [NG, D]
        attn_out = mm(ctx, tl_wo_ref[l]) + tl_bo_ref[l]

        ln = tl_ln_ref[l]                                  # [4, D] = (g1, b1, g2, b2)
        h1 = layer_norm(x + attn_out, ln[0:1, :], ln[1:2, :])
        ffn = jnp.maximum(mm(h1, tl_w1_ref[l]) + tl_b1_ref[l], 0.0)
        ffn = mm(ffn, tl_w2_ref[l]) + tl_b2_ref[l]
        x = layer_norm(h1 + ffn, ln[2:3, :], ln[3:4, :])

    # ---------------- mean-pool readout fused with lin2 ----------------
    pooled = jnp.mean(x, axis=0, keepdims=True)            # [1, D]
    out_ref[...] = mm(pooled, lin2_w_ref[...]) + lin2_b_ref[...]


# ---------------- deterministic parameter init ----------------
def init_params(key):
    keys = iter(jax.random.split(key, 64))

    def nrm(shape, s=0.05):
        return np.asarray(jax.random.normal(next(keys), shape, dtype=jnp.float32)) * s

    params = {}
    # AtomEncoder / BondEncoder: sum of per-feature embeddings (synthetic small vocabs).
    params['atom_emb'] = [jnp.asarray(nrm((10, D), 0.1)) for _ in range(3)]
    params['bond_emb'] = [jnp.asarray(nrm((6, D), 0.1)) for _ in range(3)]

    def head_block(vec):   # [heads, hc] per-head attention vectors -> block-diagonal [D, heads]
        m = np.zeros((D, GAT_HEADS), np.float32)
        for h in range(GAT_HEADS):
            m[h * GAT_HC:(h + 1) * GAT_HC, h] = vec[h]
        return m

    gat_big, gat_vedge, gat_bias = [], [], []
    mid_w, mid_vec = [], []
    tl_wqkv, tl_bqkv, tl_wo, tl_bo = [], [], [], []
    tl_w1, tl_b1, tl_w2, tl_b2, tl_ln = [], [], [], [], []

    for _ in range(NUM_LAYERS):
        W = nrm((D, D))                       # shared src/dst projection (GATConv, int in_channels)
        We = nrm((D, D))                      # lin_edge
        A_src = head_block(nrm((GAT_HEADS, GAT_HC), 0.1))
        A_dst = head_block(nrm((GAT_HEADS, GAT_HC), 0.1))
        A_edge = head_block(nrm((GAT_HEADS, GAT_HC), 0.1))
        # fold x@W, att_src, att_dst into one matmul
        gat_big.append(np.concatenate([W, W @ A_src, W @ A_dst], axis=1))        # [D, D+2H]
        # lin_edge folded into per-head edge vector + NEG row pairing with the mask column
        ve = np.zeros((DP, GAT_HEADS), np.float32)
        ve[:D] = We @ A_edge
        ve[D, :] = NEG
        gat_vedge.append(ve)
        gat_bias.append(np.zeros((1, D), np.float32))

        mid_w.append(nrm((D, D)))
        mid_vec.append(np.stack([np.zeros(D), np.ones(D), np.zeros(D)]).astype(np.float32))

        wq, wk, wv = nrm((D, D)), nrm((D, D)), nrm((D, D))
        tl_wqkv.append(np.concatenate([wq, wk, wv], axis=1))                     # fused QKV [D, 3D]
        tl_bqkv.append(np.zeros((1, 3 * D), np.float32))
        tl_wo.append(nrm((D, D)))
        tl_bo.append(np.zeros((1, D), np.float32))
        tl_w1.append(nrm((D, FFN)))
        tl_b1.append(np.zeros((1, FFN), np.float32))
        tl_w2.append(nrm((FFN, D)))
        tl_b2.append(np.zeros((1, D), np.float32))
        tl_ln.append(np.stack([np.ones(D), np.zeros(D), np.ones(D), np.zeros(D)]).astype(np.float32))

    def stk(xs, dt):
        return jnp.asarray(np.stack(xs, axis=0), dtype=dt)

    params['gat_big'] = stk(gat_big, bf16)
    params['gat_vedge'] = stk(gat_vedge, bf16)
    params['gat_bias'] = stk(gat_bias, f32)
    params['mid_w'] = stk(mid_w, bf16)
    params['mid_vec'] = stk(mid_vec, f32)
    params['tl_wqkv'], params['tl_bqkv'] = stk(tl_wqkv, bf16), stk(tl_bqkv, f32)
    params['tl_wo'], params['tl_bo'] = stk(tl_wo, bf16), stk(tl_bo, f32)
    params['tl_w1'], params['tl_b1'] = stk(tl_w1, bf16), stk(tl_b1, f32)
    params['tl_w2'], params['tl_b2'] = stk(tl_w2, bf16), stk(tl_b2, f32)
    params['tl_ln'] = stk(tl_ln, f32)

    # block-diagonal head selector for GAT aggregation
    hm = np.zeros((GAT_HEADS, D), np.float32)
    for h in range(GAT_HEADS):
        hm[h, h * GAT_HC:(h + 1) * GAT_HC] = 1.0
    params['gat_hmask'] = jnp.asarray(hm, dtype=bf16)

    # constant expansion / pooling matrices (flat row index = dst*NG + src), per graph
    eye = np.eye(NG, dtype=np.float32)
    rep_dst = np.repeat(eye, NG, axis=0)                  # row dst*NG+src -> onehot(dst)
    rep_src = np.tile(eye, (NG, 1))                       # row dst*NG+src -> onehot(src)
    params['rep_cat'] = jnp.asarray(np.concatenate([rep_dst, rep_src], axis=1), dtype=bf16)
    params['pool_dst'] = jnp.asarray(rep_dst.T, dtype=bf16)

    params['lin2_w'] = jnp.asarray(nrm((D, OUT_DIM)), dtype=bf16)
    params['lin2_b'] = jnp.zeros((1, OUT_DIM), f32)
    return params


# ---------------- forward (glue + one gridded pallas_call) ----------------
@jax.jit
def forward(params, node_feats, edge_index, edge_attr, batch):
    # node / edge encoders (embedding sums) — glue gathers.
    x0 = sum(params['atom_emb'][i][node_feats[:, i]] for i in range(3))       # [N, D]
    e = sum(params['bond_emb'][i][edge_attr[:, i]] for i in range(3))          # [E, D]

    # densify per graph: adj[g, dst, src], dense edge features; add self-loops (GATConv default).
    # TODO(synk): assumes equal-size graphs stored contiguously (true for this batch); ragged
    #             batches would need padding of the per-graph node dimension.
    src, dst = edge_index[0], edge_index[1]
    g_of_e = batch[src]
    src_l = src - g_of_e * NG
    dst_l = dst - g_of_e * NG
    adj = jnp.zeros((G, NG, NG), f32).at[g_of_e, dst_l, src_l].set(1.0)
    e_dense = jnp.zeros((G, NG, NG, D), f32).at[g_of_e, dst_l, src_l].set(e)
    diag = jnp.arange(NG)
    adj = adj.at[:, diag, diag].set(1.0)
    # TODO(synk): PyG fill_value='mean' uses per-node scatter-mean of incident edge_attr;
    #             global mean of encoded edge_attr used for the self-loop features here.
    e_dense = e_dense.at[:, diag, diag, :].set(jnp.mean(e, axis=0))

    # fold the adjacency NEG-mask into the edge-feature matmul operand (K padded to DP=40)
    mask_col = (1.0 - adj).reshape(G, NG * NG, 1)
    e_flat = e_dense.reshape(G, NG * NG, D)
    pad = jnp.zeros((G, NG * NG, DP - D - 1), f32)
    e_aug = jnp.concatenate([e_flat, mask_col, pad], axis=-1).astype(bf16)     # [G, 64, DP]

    x0g = x0.reshape(G, NG, D)

    per_graph_args = [x0g, e_aug]
    shared_args = [params['rep_cat'], params['pool_dst'],
                   params['gat_big'], params['gat_vedge'], params['gat_hmask'], params['gat_bias'],
                   params['mid_w'], params['mid_vec'],
                   params['tl_wqkv'], params['tl_bqkv'], params['tl_wo'], params['tl_bo'],
                   params['tl_w1'], params['tl_b1'], params['tl_w2'], params['tl_b2'],
                   params['tl_ln'],
                   params['lin2_w'], params['lin2_b']]

    def per_graph_spec(arr):
        nd = arr.ndim
        return pl.BlockSpec((None,) + arr.shape[1:], lambda g, nd=nd: (g,) + (0,) * (nd - 1))

    def shared_spec(arr):
        nd = arr.ndim
        return pl.BlockSpec(arr.shape, lambda g, nd=nd: (0,) * nd)

    in_specs = ([per_graph_spec(a) for a in per_graph_args]
                + [shared_spec(a) for a in shared_args])

    out = pl.pallas_call(
        fused_forward_kernel,
        grid=(G,),
        out_shape=jax.ShapeDtypeStruct((G, 1, OUT_DIM), f32),
        in_specs=in_specs,
        out_specs=pl.BlockSpec((None, 1, OUT_DIM), lambda g: (g, 0, 0)),
        compiler_params=pltpu.CompilerParams(dimension_semantics=("parallel",)),
    )(*(per_graph_args + shared_args))
    return out.reshape(G, OUT_DIM)


if __name__ == "__main__":
    key = jax.random.PRNGKey(0)
    kp, kx, ke = jax.random.split(key, 3)
    params = init_params(kp)

    # synthetic graph batch: 2 graphs x 8 nodes, bidirectional ring edges per graph.
    node_feats = jax.random.randint(kx, (N, 3), 0, 10)
    src_l, dst_l = [], []
    for g in range(G):
        off = g * NG
        for i in range(NG):
            a, b = off + i, off + (i + 1) % NG
            src_l += [a, b]
            dst_l += [b, a]
    edge_index = jnp.asarray([src_l, dst_l], dtype=jnp.int32)          # [2, 32]
    edge_attr = jax.random.randint(ke, (edge_index.shape[1], 3), 0, 6)
    batch = jnp.repeat(jnp.arange(G, dtype=jnp.int32), NG)             # [16]

    out = forward(params, node_feats, edge_index, edge_attr, batch)
    out = jax.block_until_ready(out)
    assert out.shape == (G, OUT_DIM)
    assert bool(jnp.all(jnp.isfinite(out)))
    print("KERNEL_OK")
</pallas_src>

<mosaic_0001>
module attributes {stable_mosaic.version = 11 : i64} {
  func.func @fused_forward_kernel(%arg0: i32, %arg1: memref<1x8x32xf32, #tpu.memory_space<vmem>>, %arg2: memref<1x64x40xbf16, #tpu.memory_space<vmem>>, %arg3: memref<64x16xbf16, #tpu.memory_space<vmem>>, %arg4: memref<8x64xbf16, #tpu.memory_space<vmem>>, %arg5: memref<2x32x48xbf16, #tpu.memory_space<vmem>>, %arg6: memref<2x40x8xbf16, #tpu.memory_space<vmem>>, %arg7: memref<8x32xbf16, #tpu.memory_space<vmem>>, %arg8: memref<2x1x32xf32, #tpu.memory_space<vmem>>, %arg9: memref<2x32x32xbf16, #tpu.memory_space<vmem>>, %arg10: memref<2x3x32xf32, #tpu.memory_space<vmem>>, %arg11: memref<2x32x96xbf16, #tpu.memory_space<vmem>>, %arg12: memref<2x1x96xf32, #tpu.memory_space<vmem>>, %arg13: memref<2x32x32xbf16, #tpu.memory_space<vmem>>, %arg14: memref<2x1x32xf32, #tpu.memory_space<vmem>>, %arg15: memref<2x32x64xbf16, #tpu.memory_space<vmem>>, %arg16: memref<2x1x64xf32, #tpu.memory_space<vmem>>, %arg17: memref<2x64x32xbf16, #tpu.memory_space<vmem>>, %arg18: memref<2x1x32xf32, #tpu.memory_space<vmem>>, %arg19: memref<2x4x32xf32, #tpu.memory_space<vmem>>, %arg20: memref<32x8xbf16, #tpu.memory_space<vmem>>, %arg21: memref<1x8xf32, #tpu.memory_space<vmem>>, %arg22: memref<1x1x8xf32, #tpu.memory_space<vmem>>) attributes {dimension_semantics = [#tpu.dimension_semantics<parallel>], iteration_bounds = array<i64: 2>, scalar_prefetch = 0 : i64, scratch_operands = 0 : i64, tpu.core_type = #tpu.core_type<tc>, window_params = [{transform_indices = @transform_0, window_bounds = array<i64: 1, 8, 32>}, {transform_indices = @transform_1, window_bounds = array<i64: 1, 64, 40>}, {pipeline_mode = #tpu.pipeline_mode<synchronous>, transform_indices = @transform_2, window_bounds = array<i64: 64, 16>}, {pipeline_mode = #tpu.pipeline_mode<synchronous>, transform_indices = @transform_3, window_bounds = array<i64: 8, 64>}, {pipeline_mode = #tpu.pipeline_mode<synchronous>, transform_indices = @transform_4, window_bounds = array<i64: 2, 32, 48>}, {pipeline_mode = #tpu.pipeline_mode<synchronous>, transform_indices = @transform_5, window_bounds = array<i64: 2, 40, 8>}, {pipeline_mode = #tpu.pipeline_mode<synchronous>, transform_indices = @transform_6, window_bounds = array<i64: 8, 32>}, {pipeline_mode = #tpu.pipeline_mode<synchronous>, transform_indices = @transform_7, window_bounds = array<i64: 2, 1, 32>}, {pipeline_mode = #tpu.pipeline_mode<synchronous>, transform_indices = @transform_8, window_bounds = array<i64: 2, 32, 32>}, {pipeline_mode = #tpu.pipeline_mode<synchronous>, transform_indices = @transform_9, window_bounds = array<i64: 2, 3, 32>}, {pipeline_mode = #tpu.pipeline_mode<synchronous>, transform_indices = @transform_10, window_bounds = array<i64: 2, 32, 96>}, {pipeline_mode = #tpu.pipeline_mode<synchronous>, transform_indices = @transform_11, window_bounds = array<i64: 2, 1, 96>}, {pipeline_mode = #tpu.pipeline_mode<synchronous>, transform_indices = @transform_12, window_bounds = array<i64: 2, 32, 32>}, {pipeline_mode = #tpu.pipeline_mode<synchronous>, transform_indices = @transform_13, window_bounds = array<i64: 2, 1, 32>}, {pipeline_mode = #tpu.pipeline_mode<synchronous>, transform_indices = @transform_14, window_bounds = array<i64: 2, 32, 64>}, {pipeline_mode = #tpu.pipeline_mode<synchronous>, transform_indices = @transform_15, window_bounds = array<i64: 2, 1, 64>}, {pipeline_mode = #tpu.pipeline_mode<synchronous>, transform_indices = @transform_16, window_bounds = array<i64: 2, 64, 32>}, {pipeline_mode = #tpu.pipeline_mode<synchronous>, transform_indices = @transform_17, window_bounds = array<i64: 2, 1, 32>}, {pipeline_mode = #tpu.pipeline_mode<synchronous>, transform_indices = @transform_18, window_bounds = array<i64: 2, 4, 32>}, {pipeline_mode = #tpu.pipeline_mode<synchronous>, transform_indices = @transform_19, window_bounds = array<i64: 32, 8>}, {pipeline_mode = #tpu.pipeline_mode<synchronous>, transform_indices = @transform_20, window_bounds = array<i64: 1, 8>}, {transform_indices = @transform_21, window_bounds = array<i64: 1, 1, 8>}]} {
    %c0 = arith.constant 0 : index
    %c0_0 = arith.constant 0 : index
    %c0_1 = arith.constant 0 : index
    %0 = vector.load %arg1[%c0, %c0_0, %c0_1] : memref<1x8x32xf32, #tpu.memory_space<vmem>>, vector<1x8x32xf32>
    %1 = vector.shape_cast %0 : vector<1x8x32xf32> to vector<8x32xf32>
    %c0_2 = arith.constant 0 : index
    %c0_3 = arith.constant 0 : index
    %c0_4 = arith.constant 0 : index
    %2 = vector.load %arg2[%c0_2, %c0_3, %c0_4] : memref<1x64x40xbf16, #tpu.memory_space<vmem>>, vector<1x64x40xbf16>
    %3 = vector.shape_cast %2 : vector<1x64x40xbf16> to vector<64x40xbf16>
    %c0_5 = arith.constant 0 : index
    %c0_6 = arith.constant 0 : index
    %4 = vector.load %arg3[%c0_5, %c0_6] : memref<64x16xbf16, #tpu.memory_space<vmem>>, vector<64x16xbf16>
    %5 = vector.extract_strided_slice %4 {offsets = [0, 8], sizes = [64, 8], strides = [1, 1]} : vector<64x16xbf16> to vector<64x8xbf16>
    %c0_7 = arith.constant 0 : index
    %c0_8 = arith.constant 0 : index
    %6 = vector.load %arg4[%c0_7, %c0_8] : memref<8x64xbf16, #tpu.memory_space<vmem>>, vector<8x64xbf16>
    %c0_9 = arith.constant 0 : index
    %c0_10 = arith.constant 0 : index
    %7 = vector.load %arg7[%c0_9, %c0_10] : memref<8x32xbf16, #tpu.memory_space<vmem>>, vector<8x32xbf16>
    %c0_11 = arith.constant 0 : index
    %c0_12 = arith.constant 0 : index
    %c0_13 = arith.constant 0 : index
    %8 = vector.load %arg5[%c0_11, %c0_12, %c0_13] : memref<2x32x48xbf16, #tpu.memory_space<vmem>>, vector<1x32x48xbf16>
    %9 = vector.shape_cast %8 : vector<1x32x48xbf16> to vector<32x48xbf16>
    %10 = arith.truncf %1 : vector<8x32xf32> to vector<8x32xbf16>
    %cst = arith.constant dense<0.000000e+00> : vector<8x48xf32>
    %11 = tpu.matmul %10, %9, %cst {dimension_numbers = #tpu.dot_dimension_numbers<[1], [0], [0], [1], [0, 0, 1, 1], [], []>} : vector<8x32xbf16>, vector<32x48xbf16>, vector<8x48xf32> -> vector<8x48xf32>
    %12 = vector.extract_strided_slice %11 {offsets = [0, 0], sizes = [8, 32], strides = [1, 1]} : vector<8x48xf32> to vector<8x32xf32>
    %13 = vector.extract_strided_slice %11 {offsets = [0, 32], sizes = [8, 8], strides = [1, 1]} : vector<8x48xf32> to vector<8x8xf32>
    %14 = vector.extract_strided_slice %11 {offsets = [0, 40], sizes = [8, 8], strides = [1, 1]} : vector<8x48xf32> to vector<8x8xf32>
    %15 = tpu.concatenate %14, %13 in 0 : vector<8x8xf32>, vector<8x8xf32> -> vector<16x8xf32>
    %c0_14 = arith.constant 0 : index
    %c0_15 = arith.constant 0 : index
    %c0_16 = arith.constant 0 : index
    %16 = vector.load %arg6[%c0_14, %c0_15, %c0_16] : memref<2x40x8xbf16, #tpu.memory_space<vmem>>, vector<1x40x8xbf16>
    %17 = vector.shape_cast %16 : vector<1x40x8xbf16> to vector<40x8xbf16>
    %cst_17 = arith.constant dense<0.000000e+00> : vector<64x8xf32>
    %18 = tpu.matmul %3, %17, %cst_17 {dimension_numbers = #tpu.dot_dimension_numbers<[1], [0], [0], [1], [0, 0, 1, 1], [], []>} : vector<64x40xbf16>, vector<40x8xbf16>, vector<64x8xf32> -> vector<64x8xf32>
    %19 = arith.truncf %15 : vector<16x8xf32> to vector<16x8xbf16>
    %cst_18 = arith.constant dense<0.000000e+00> : vector<64x8xf32>
    %20 = tpu.matmul %4, %19, %cst_18 {dimension_numbers = #tpu.dot_dimension_numbers<[1], [0], [0], [1], [0, 0, 1, 1], [], []>} : vector<64x16xbf16>, vector<16x8xbf16>, vector<64x8xf32> -> vector<64x8xf32>
    %21 = arith.addf %18, %20 : vector<64x8xf32>
    %cst_19 = arith.constant 0.000000e+00 : f32
    %22 = vector.broadcast %cst_19 : f32 to vector<64x8xf32>
    %23 = arith.cmpf ogt, %21, %22 : vector<64x8xf32>
    %cst_20 = arith.constant 2.000000e-01 : f32
    %24 = vector.broadcast %cst_20 : f32 to vector<64x8xf32>
    %25 = arith.mulf %24, %21 : vector<64x8xf32>
    %26 = arith.select %23, %21, %25 : vector<64x8xi1>, vector<64x8xf32>
    %27 = vector.shape_cast %26 : vector<64x8xf32> to vector<8x8x8xf32>
    %cst_21 = arith.constant dense<0xFF800000> : vector<8x8xf32>
    %28 = vector.multi_reduction <maximumf>, %27, %cst_21 [1] : vector<8x8x8xf32> to vector<8x8xf32>
    %29 = vector.shape_cast %28 : vector<8x8xf32> to vector<8x1x8xf32>
    %30 = vector.broadcast %29 : vector<8x1x8xf32> to vector<8x8x8xf32>
    %31 = arith.subf %27, %30 : vector<8x8x8xf32>
    %32 = math.exp %31 : vector<8x8x8xf32>
    %cst_22 = arith.constant dense<0.000000e+00> : vector<8x8xf32>
    %33 = vector.multi_reduction <add>, %32, %cst_22 [1] : vector<8x8x8xf32> to vector<8x8xf32>
    %34 = vector.shape_cast %33 : vector<8x8xf32> to vector<8x1x8xf32>
    %35 = tpu.reciprocal %34 {approx = true} : vector<8x1x8xf32> -> vector<8x1x8xf32>
    %36 = vector.broadcast %35 : vector<8x1x8xf32> to vector<8x8x8xf32>
    %37 = arith.mulf %32, %36 : vector<8x8x8xf32>
    %38 = vector.shape_cast %37 : vector<8x8x8xf32> to vector<64x8xf32>
    %39 = arith.truncf %38 : vector<64x8xf32> to vector<64x8xbf16>
    %cst_23 = arith.constant dense<0.000000e+00> : vector<64x32xf32>
    %40 = tpu.matmul %39, %7, %cst_23 {dimension_numbers = #tpu.dot_dimension_numbers<[1], [0], [0], [1], [0, 0, 1, 1], [], []>} : vector<64x8xbf16>, vector<8x32xbf16>, vector<64x32xf32> -> vector<64x32xf32>
    %41 = arith.truncf %12 : vector<8x32xf32> to vector<8x32xbf16>
    %cst_24 = arith.constant dense<0.000000e+00> : vector<64x32xf32>
    %42 = tpu.matmul %5, %41, %cst_24 {dimension_numbers = #tpu.dot_dimension_numbers<[1], [0], [0], [1], [0, 0, 1, 1], [], []>} : vector<64x8xbf16>, vector<8x32xbf16>, vector<64x32xf32> -> vector<64x32xf32>
    %43 = arith.mulf %40, %42 : vector<64x32xf32>
    %44 = arith.truncf %43 : vector<64x32xf32> to vector<64x32xbf16>
    %cst_25 = arith.constant dense<0.000000e+00> : vector<8x32xf32>
    %45 = tpu.matmul %6, %44, %cst_25 {dimension_numbers = #tpu.dot_dimension_numbers<[1], [0], [0], [1], [0, 0, 1, 1], [], []>} : vector<8x64xbf16>, vector<64x32xbf16>, vector<8x32xf32> -> vector<8x32xf32>
    %c0_26 = arith.constant 0 : index
    %c0_27 = arith.constant 0 : index
    %c0_28 = arith.constant 0 : index
    %46 = vector.load %arg8[%c0_26, %c0_27, %c0_28] : memref<2x1x32xf32, #tpu.memory_space<vmem>>, vector<1x1x32xf32>
    %47 = vector.shape_cast %46 : vector<1x1x32xf32> to vector<1x32xf32>
    %48 = vector.broadcast %47 : vector<1x32xf32> to vector<8x32xf32>
    %49 = arith.addf %45, %48 : vector<8x32xf32>
    %c0_29 = arith.constant 0 : index
    %c0_30 = arith.constant 0 : index
    %c0_31 = arith.constant 0 : index
    %50 = vector.load %arg10[%c0_29, %c0_30, %c0_31] : memref<2x3x32xf32, #tpu.memory_space<vmem>>, vector<1x3x32xf32>
    %51 = vector.shape_cast %50 : vector<1x3x32xf32> to vector<3x32xf32>
    %c0_32 = arith.constant 0 : index
    %c0_33 = arith.constant 0 : index
    %c0_34 = arith.constant 0 : index
    %52 = vector.load %arg9[%c0_32, %c0_33, %c0_34] : memref<2x32x32xbf16, #tpu.memory_space<vmem>>, vector<1x32x32xbf16>
    %53 = vector.shape_cast %52 : vector<1x32x32xbf16> to vector<32x32xbf16>
    %54 = arith.truncf %49 : vector<8x32xf32> to vector<8x32xbf16>
    %cst_35 = arith.constant dense<0.000000e+00> : vector<8x32xf32>
    %55 = tpu.matmul %54, %53, %cst_35 {dimension_numbers = #tpu.dot_dimension_numbers<[1], [0], [0], [1], [0, 0, 1, 1], [], []>} : vector<8x32xbf16>, vector<32x32xbf16>, vector<8x32xf32> -> vector<8x32xf32>
    %56 = vector.extract_strided_slice %51 {offsets = [0, 0], sizes = [1, 32], strides = [1, 1]} : vector<3x32xf32> to vector<1x32xf32>
    %57 = vector.broadcast %56 : vector<1x32xf32> to vector<8x32xf32>
    %58 = arith.addf %55, %57 : vector<8x32xf32>
    %59 = vector.extract_strided_slice %51 {offsets = [1, 0], sizes = [1, 32], strides = [1, 1]} : vector<3x32xf32> to vector<1x32xf32>
    %60 = vector.extract_strided_slice %51 {offsets = [2, 0], sizes = [1, 32], strides = [1, 1]} : vector<3x32xf32> to vector<1x32xf32>
    %cst_36 = arith.constant dense<0.000000e+00> : vector<8xf32>
    %61 = vector.multi_reduction <add>, %58, %cst_36 [1] : vector<8x32xf32> to vector<8xf32>
    %62 = vector.shape_cast %61 : vector<8xf32> to vector<8x1xf32>
    %cst_37 = arith.constant 3.200000e+01 : f32
    %63 = vector.broadcast %cst_37 : f32 to vector<8x1xf32>
    %64 = arith.divf %62, %63 : vector<8x1xf32>
    %65 = vector.broadcast %64 : vector<8x1xf32> to vector<8x32xf32>
    %66 = arith.subf %58, %65 : vector<8x32xf32>
    %67 = arith.mulf %66, %66 : vector<8x32xf32>
    %cst_38 = arith.constant dense<0.000000e+00> : vector<8xf32>
    %68 = vector.multi_reduction <add>, %67, %cst_38 [1] : vector<8x32xf32> to vector<8xf32>
    %69 = vector.shape_cast %68 : vector<8xf32> to vector<8x1xf32>
    %cst_39 = arith.constant 3.200000e+01 : f32
    %70 = vector.broadcast %cst_39 : f32 to vector<8x1xf32>
    %71 = arith.divf %69, %70 : vector<8x1xf32>
    %72 = vector.broadcast %64 : vector<8x1xf32> to vector<8x32xf32>
    %73 = arith.subf %58, %72 : vector<8x32xf32>
    %cst_40 = arith.constant 9.99999974E-6 : f32
    %74 = vector.broadcast %cst_40 : f32 to vector<8x1xf32>
    %75 = arith.addf %71, %74 : vector<8x1xf32>
    %76 = math.rsqrt %75 : vector<8x1xf32>
    %77 = vector.broadcast %76 : vector<8x1xf32> to vector<8x32xf32>
    %78 = arith.mulf %73, %77 : vector<8x32xf32>
    %79 = vector.broadcast %59 : vector<1x32xf32> to vector<8x32xf32>
    %80 = arith.mulf %78, %79 : vector<8x32xf32>
    %81 = vector.broadcast %60 : vector<1x32xf32> to vector<8x32xf32>
    %82 = arith.addf %80, %81 : vector<8x32xf32>
    %cst_41 = arith.constant 0.000000e+00 : f32
    %83 = vector.broadcast %cst_41 : f32 to vector<8x32xf32>
    %84 = arith.maximumf %82, %83 : vector<8x32xf32>
    %c1 = arith.constant 1 : index
    %c0_42 = arith.constant 0 : index
    %c0_43 = arith.constant 0 : index
    %85 = vector.load %arg5[%c1, %c0_42, %c0_43] : memref<2x32x48xbf16, #tpu.memory_space<vmem>>, vector<1x32x48xbf16>
    %86 = vector.shape_cast %85 : vector<1x32x48xbf16> to vector<32x48xbf16>
    %87 = arith.truncf %84 : vector<8x32xf32> to vector<8x32xbf16>
    %cst_44 = arith.constant dense<0.000000e+00> : vector<8x48xf32>
    %88 = tpu.matmul %87, %86, %cst_44 {dimension_numbers = #tpu.dot_dimension_numbers<[1], [0], [0], [1], [0, 0, 1, 1], [], []>} : vector<8x32xbf16>, vector<32x48xbf16>, vector<8x48xf32> -> vector<8x48xf32>
    %89 = vector.extract_strided_slice %88 {offsets = [0, 0], sizes = [8, 32], strides = [1, 1]} : vector<8x48xf32> to vector<8x32xf32>
    %90 = vector.extract_strided_slice %88 {offsets = [0, 32], sizes = [8, 8], strides = [1, 1]} : vector<8x48xf32> to vector<8x8xf32>
    %91 = vector.extract_strided_slice %88 {offsets = [0, 40], sizes = [8, 8], strides = [1, 1]} : vector<8x48xf32> to vector<8x8xf32>
    %92 = tpu.concatenate %91, %90 in 0 : vector<8x8xf32>, vector<8x8xf32> -> vector<16x8xf32>
    %c1_45 = arith.constant 1 : index
    %c0_46 = arith.constant 0 : index
    %c0_47 = arith.constant 0 : index
    %93 = vector.load %arg6[%c1_45, %c0_46, %c0_47] : memref<2x40x8xbf16, #tpu.memory_space<vmem>>, vector<1x40x8xbf16>
    %94 = vector.shape_cast %93 : vector<1x40x8xbf16> to vector<40x8xbf16>
    %cst_48 = arith.constant dense<0.000000e+00> : vector<64x8xf32>
    %95 = tpu.matmul %3, %94, %cst_48 {dimension_numbers = #tpu.dot_dimension_numbers<[1], [0], [0], [1], [0, 0, 1, 1], [], []>} : vector<64x40xbf16>, vector<40x8xbf16>, vector<64x8xf32> -> vector<64x8xf32>
    %96 = arith.truncf %92 : vector<16x8xf32> to vector<16x8xbf16>
    %cst_49 = arith.constant dense<0.000000e+00> : vector<64x8xf32>
    %97 = tpu.matmul %4, %96, %cst_49 {dimension_numbers = #tpu.dot_dimension_numbers<[1], [0], [0], [1], [0, 0, 1, 1], [], []>} : vector<64x16xbf16>, vector<16x8xbf16>, vector<64x8xf32> -> vector<64x8xf32>
    %98 = arith.addf %95, %97 : vector<64x8xf32>
    %cst_50 = arith.constant 0.000000e+00 : f32
    %99 = vector.broadcast %cst_50 : f32 to vector<64x8xf32>
    %100 = arith.cmpf ogt, %98, %99 : vector<64x8xf32>
    %cst_51 = arith.constant 2.000000e-01 : f32
    %101 = vector.broadcast %cst_51 : f32 to vector<64x8xf32>
    %102 = arith.mulf %101, %98 : vector<64x8xf32>
    %103 = arith.select %100, %98, %102 : vector<64x8xi1>, vector<64x8xf32>
    %104 = vector.shape_cast %103 : vector<64x8xf32> to vector<8x8x8xf32>
    %cst_52 = arith.constant dense<0xFF800000> : vector<8x8xf32>
    %105 = vector.multi_reduction <maximumf>, %104, %cst_52 [1] : vector<8x8x8xf32> to vector<8x8xf32>
    %106 = vector.shape_cast %105 : vector<8x8xf32> to vector<8x1x8xf32>
    %107 = vector.broadcast %106 : vector<8x1x8xf32> to vector<8x8x8xf32>
    %108 = arith.subf %104, %107 : vector<8x8x8xf32>
    %109 = math.exp %108 : vector<8x8x8xf32>
    %cst_53 = arith.constant dense<0.000000e+00> : vector<8x8xf32>
    %110 = vector.multi_reduction <add>, %109, %cst_53 [1] : vector<8x8x8xf32> to vector<8x8xf32>
    %111 = vector.shape_cast %110 : vector<8x8xf32> to vector<8x1x8xf32>
    %112 = tpu.reciprocal %111 {approx = true} : vector<8x1x8xf32> -> vector<8x1x8xf32>
    %113 = vector.broadcast %112 : vector<8x1x8xf32> to vector<8x8x8xf32>
    %114 = arith.mulf %109, %113 : vector<8x8x8xf32>
    %115 = vector.shape_cast %114 : vector<8x8x8xf32> to vector<64x8xf32>
    %116 = arith.truncf %115 : vector<64x8xf32> to vector<64x8xbf16>
    %cst_54 = arith.constant dense<0.000000e+00> : vector<64x32xf32>
    %117 = tpu.matmul %116, %7, %cst_54 {dimension_numbers = #tpu.dot_dimension_numbers<[1], [0], [0], [1], [0, 0, 1, 1], [], []>} : vector<64x8xbf16>, vector<8x32xbf16>, vector<64x32xf32> -> vector<64x32xf32>
    %118 = arith.truncf %89 : vector<8x32xf32> to vector<8x32xbf16>
    %cst_55 = arith.constant dense<0.000000e+00> : vector<64x32xf32>
    %119 = tpu.matmul %5, %118, %cst_55 {dimension_numbers = #tpu.dot_dimension_numbers<[1], [0], [0], [1], [0, 0, 1, 1], [], []>} : vector<64x8xbf16>, vector<8x32xbf16>, vector<64x32xf32> -> vector<64x32xf32>
    %120 = arith.mulf %117, %119 : vector<64x32xf32>
    %121 = arith.truncf %120 : vector<64x32xf32> to vector<64x32xbf16>
    %cst_56 = arith.constant dense<0.000000e+00> : vector<8x32xf32>
    %122 = tpu.matmul %6, %121, %cst_56 {dimension_numbers = #tpu.dot_dimension_numbers<[1], [0], [0], [1], [0, 0, 1, 1], [], []>} : vector<8x64xbf16>, vector<64x32xbf16>, vector<8x32xf32> -> vector<8x32xf32>
    %c1_57 = arith.constant 1 : index
    %c0_58 = arith.constant 0 : index
    %c0_59 = arith.constant 0 : index
    %123 = vector.load %arg8[%c1_57, %c0_58, %c0_59] : memref<2x1x32xf32, #tpu.memory_space<vmem>>, vector<1x1x32xf32>
    %124 = vector.shape_cast %123 : vector<1x1x32xf32> to vector<1x32xf32>
    %125 = vector.broadcast %124 : vector<1x32xf32> to vector<8x32xf32>
    %126 = arith.addf %122, %125 : vector<8x32xf32>
    %c1_60 = arith.constant 1 : index
    %c0_61 = arith.constant 0 : index
    %c0_62 = arith.constant 0 : index
    %127 = vector.load %arg10[%c1_60, %c0_61, %c0_62] : memref<2x3x32xf32, #tpu.memory_space<vmem>>, vector<1x3x32xf32>
    %128 = vector.shape_cast %127 : vector<1x3x32xf32> to vector<3x32xf32>
    %c1_63 = arith.constant 1 : index
    %c0_64 = arith.constant 0 : index
    %c0_65 = arith.constant 0 : index
    %129 = vector.load %arg9[%c1_63, %c0_64, %c0_65] : memref<2x32x32xbf16, #tpu.memory_space<vmem>>, vector<1x32x32xbf16>
    %130 = vector.shape_cast %129 : vector<1x32x32xbf16> to vector<32x32xbf16>
    %131 = arith.truncf %126 : vector<8x32xf32> to vector<8x32xbf16>
    %cst_66 = arith.constant dense<0.000000e+00> : vector<8x32xf32>
    %132 = tpu.matmul %131, %130, %cst_66 {dimension_numbers = #tpu.dot_dimension_numbers<[1], [0], [0], [1], [0, 0, 1, 1], [], []>} : vector<8x32xbf16>, vector<32x32xbf16>, vector<8x32xf32> -> vector<8x32xf32>
    %133 = vector.extract_strided_slice %128 {offsets = [0, 0], sizes = [1, 32], strides = [1, 1]} : vector<3x32xf32> to vector<1x32xf32>
    %134 = vector.broadcast %133 : vector<1x32xf32> to vector<8x32xf32>
    %135 = arith.addf %132, %134 : vector<8x32xf32>
    %136 = vector.extract_strided_slice %128 {offsets = [1, 0], sizes = [1, 32], strides = [1, 1]} : vector<3x32xf32> to vector<1x32xf32>
    %137 = vector.extract_strided_slice %128 {offsets = [2, 0], sizes = [1, 32], strides = [1, 1]} : vector<3x32xf32> to vector<1x32xf32>
    %cst_67 = arith.constant dense<0.000000e+00> : vector<8xf32>
    %138 = vector.multi_reduction <add>, %135, %cst_67 [1] : vector<8x32xf32> to vector<8xf32>
    %139 = vector.shape_cast %138 : vector<8xf32> to vector<8x1xf32>
    %cst_68 = arith.constant 3.200000e+01 : f32
    %140 = vector.broadcast %cst_68 : f32 to vector<8x1xf32>
    %141 = arith.divf %139, %140 : vector<8x1xf32>
    %142 = vector.broadcast %141 : vector<8x1xf32> to vector<8x32xf32>
    %143 = arith.subf %135, %142 : vector<8x32xf32>
    %144 = arith.mulf %143, %143 : vector<8x32xf32>
    %cst_69 = arith.constant dense<0.000000e+00> : vector<8xf32>
    %145 = vector.multi_reduction <add>, %144, %cst_69 [1] : vector<8x32xf32> to vector<8xf32>
    %146 = vector.shape_cast %145 : vector<8xf32> to vector<8x1xf32>
    %cst_70 = arith.constant 3.200000e+01 : f32
    %147 = vector.broadcast %cst_70 : f32 to vector<8x1xf32>
    %148 = arith.divf %146, %147 : vector<8x1xf32>
    %149 = vector.broadcast %141 : vector<8x1xf32> to vector<8x32xf32>
    %150 = arith.subf %135, %149 : vector<8x32xf32>
    %cst_71 = arith.constant 9.99999974E-6 : f32
    %151 = vector.broadcast %cst_71 : f32 to vector<8x1xf32>
    %152 = arith.addf %148, %151 : vector<8x1xf32>
    %153 = math.rsqrt %152 : vector<8x1xf32>
    %154 = vector.broadcast %153 : vector<8x1xf32> to vector<8x32xf32>
    %155 = arith.mulf %150, %154 : vector<8x32xf32>
    %156 = vector.broadcast %136 : vector<1x32xf32> to vector<8x32xf32>
    %157 = arith.mulf %155, %156 : vector<8x32xf32>
    %158 = vector.broadcast %137 : vector<1x32xf32> to vector<8x32xf32>
    %159 = arith.addf %157, %158 : vector<8x32xf32>
    %cst_72 = arith.constant 0.000000e+00 : f32
    %160 = vector.broadcast %cst_72 : f32 to vector<8x32xf32>
    %161 = arith.maximumf %159, %160 : vector<8x32xf32>
    %c0_73 = arith.constant 0 : index
    %c0_74 = arith.constant 0 : index
    %c0_75 = arith.constant 0 : index
    %162 = vector.load %arg11[%c0_73, %c0_74, %c0_75] : memref<2x32x96xbf16, #tpu.memory_space<vmem>>, vector<1x32x96xbf16>
    %163 = vector.shape_cast %162 : vector<1x32x96xbf16> to vector<32x96xbf16>
    %164 = arith.truncf %161 : vector<8x32xf32> to vector<8x32xbf16>
    %cst_76 = arith.constant dense<0.000000e+00> : vector<8x96xf32>
    %165 = tpu.matmul %164, %163, %cst_76 {dimension_numbers = #tpu.dot_dimension_numbers<[1], [0], [0], [1], [0, 0, 1, 1], [], []>} : vector<8x32xbf16>, vector<32x96xbf16>, vector<8x96xf32> -> vector<8x96xf32>
    %c0_77 = arith.constant 0 : index
    %c0_78 = arith.constant 0 : index
    %c0_79 = arith.constant 0 : index
    %166 = vector.load %arg12[%c0_77, %c0_78, %c0_79] : memref<2x1x96xf32, #tpu.memory_space<vmem>>, vector<1x1x96xf32>
    %167 = vector.shape_cast %166 : vector<1x1x96xf32> to vector<1x96xf32>
    %168 = vector.broadcast %167 : vector<1x96xf32> to vector<8x96xf32>
    %169 = arith.addf %165, %168 : vector<8x96xf32>
    %170 = vector.extract_strided_slice %169 {offsets = [0, 0], sizes = [8, 8], strides = [1, 1]} : vector<8x96xf32> to vector<8x8xf32>
    %171 = vector.extract_strided_slice %169 {offsets = [0, 32], sizes = [8, 8], strides = [1, 1]} : vector<8x96xf32> to vector<8x8xf32>
    %172 = vector.extract_strided_slice %169 {offsets = [0, 64], sizes = [8, 8], strides = [1, 1]} : vector<8x96xf32> to vector<8x8xf32>
    %173 = arith.truncf %170 : vector<8x8xf32> to vector<8x8xbf16>
    %174 = arith.truncf %171 : vector<8x8xf32> to vector<8x8xbf16>
    %cst_80 = arith.constant dense<0.000000e+00> : vector<8x8xf32>
    %175 = tpu.matmul %173, %174, %cst_80 {dimension_numbers = #tpu.dot_dimension_numbers<[1], [1], [0], [0], [0, 0, 1, 0], [], []>} : vector<8x8xbf16>, vector<8x8xbf16>, vector<8x8xf32> -> vector<8x8xf32>
    %cst_81 = arith.constant 0.353553385 : f32
    %176 = vector.broadcast %cst_81 : f32 to vector<8x8xf32>
    %177 = arith.mulf %175, %176 : vector<8x8xf32>
    %cst_82 = arith.constant dense<0xFF800000> : vector<8xf32>
    %178 = vector.multi_reduction <maximumf>, %177, %cst_82 [1] : vector<8x8xf32> to vector<8xf32>
    %179 = vector.shape_cast %178 : vector<8xf32> to vector<8x1xf32>
    %180 = vector.broadcast %179 : vector<8x1xf32> to vector<8x8xf32>
    %181 = arith.subf %177, %180 : vector<8x8xf32>
    %182 = math.exp %181 : vector<8x8xf32>
    %cst_83 = arith.constant dense<0.000000e+00> : vector<8xf32>
    %183 = vector.multi_reduction <add>, %182, %cst_83 [1] : vector<8x8xf32> to vector<8xf32>
    %184 = vector.shape_cast %183 : vector<8xf32> to vector<8x1xf32>
    %185 = tpu.reciprocal %184 {approx = true} : vector<8x1xf32> -> vector<8x1xf32>
    %186 = vector.broadcast %185 : vector<8x1xf32> to vector<8x8xf32>
    %187 = arith.mulf %182, %186 : vector<8x8xf32>
    %188 = arith.truncf %187 : vector<8x8xf32> to vector<8x8xbf16>
    %189 = arith.truncf %172 : vector<8x8xf32> to vector<8x8xbf16>
    %cst_84 = arith.constant dense<0.000000e+00> : vector<8x8xf32>
    %190 = tpu.matmul %188, %189, %cst_84 {dimension_numbers = #tpu.dot_dimension_numbers<[1], [0], [0], [1], [0, 0, 1, 1], [], []>} : vector<8x8xbf16>, vector<8x8xbf16>, vector<8x8xf32> -> vector<8x8xf32>
    %191 = vector.extract_strided_slice %169 {offsets = [0, 8], sizes = [8, 8], strides = [1, 1]} : vector<8x96xf32> to vector<8x8xf32>
    %192 = vector.extract_strided_slice %169 {offsets = [0, 40], sizes = [8, 8], strides = [1, 1]} : vector<8x96xf32> to vector<8x8xf32>
    %193 = vector.extract_strided_slice %169 {offsets = [0, 72], sizes = [8, 8], strides = [1, 1]} : vector<8x96xf32> to vector<8x8xf32>
    %194 = arith.truncf %191 : vector<8x8xf32> to vector<8x8xbf16>
    %195 = arith.truncf %192 : vector<8x8xf32> to vector<8x8xbf16>
    %cst_85 = arith.constant dense<0.000000e+00> : vector<8x8xf32>
    %196 = tpu.matmul %194, %195, %cst_85 {dimension_numbers = #tpu.dot_dimension_numbers<[1], [1], [0], [0], [0, 0, 1, 0], [], []>} : vector<8x8xbf16>, vector<8x8xbf16>, vector<8x8xf32> -> vector<8x8xf32>
    %cst_86 = arith.constant 0.353553385 : f32
    %197 = vector.broadcast %cst_86 : f32 to vector<8x8xf32>
    %198 = arith.mulf %196, %197 : vector<8x8xf32>
    %cst_87 = arith.constant dense<0xFF800000> : vector<8xf32>
    %199 = vector.multi_reduction <maximumf>, %198, %cst_87 [1] : vector<8x8xf32> to vector<8xf32>
    %200 = vector.shape_cast %199 : vector<8xf32> to vector<8x1xf32>
    %201 = vector.broadcast %200 : vector<8x1xf32> to vector<8x8xf32>
    %202 = arith.subf %198, %201 : vector<8x8xf32>
    %203 = math.exp %202 : vector<8x8xf32>
    %cst_88 = arith.constant dense<0.000000e+00> : vector<8xf32>
    %204 = vector.multi_reduction <add>, %203, %cst_88 [1] : vector<8x8xf32> to vector<8xf32>
    %205 = vector.shape_cast %204 : vector<8xf32> to vector<8x1xf32>
    %206 = tpu.reciprocal %205 {approx = true} : vector<8x1xf32> -> vector<8x1xf32>
    %207 = vector.broadcast %206 : vector<8x1xf32> to vector<8x8xf32>
    %208 = arith.mulf %203, %207 : vector<8x8xf32>
    %209 = arith.truncf %208 : vector<8x8xf32> to vector<8x8xbf16>
    %210 = arith.truncf %193 : vector<8x8xf32> to vector<8x8xbf16>
    %cst_89 = arith.constant dense<0.000000e+00> : vector<8x8xf32>
    %211 = tpu.matmul %209, %210, %cst_89 {dimension_numbers = #tpu.dot_dimension_numbers<[1], [0], [0], [1], [0, 0, 1, 1], [], []>} : vector<8x8xbf16>, vector<8x8xbf16>, vector<8x8xf32> -> vector<8x8xf32>
    %212 = vector.extract_strided_slice %169 {offsets = [0, 16], sizes = [8, 8], strides = [1, 1]} : vector<8x96xf32> to vector<8x8xf32>
    %213 = vector.extract_strided_slice %169 {offsets = [0, 48], sizes = [8, 8], strides = [1, 1]} : vector<8x96xf32> to vector<8x8xf32>
    %214 = vector.extract_strided_slice %169 {offsets = [0, 80], sizes = [8, 8], strides = [1, 1]} : vector<8x96xf32> to vector<8x8xf32>
    %215 = arith.truncf %212 : vector<8x8xf32> to vector<8x8xbf16>
    %216 = arith.truncf %213 : vector<8x8xf32> to vector<8x8xbf16>
    %cst_90 = arith.constant dense<0.000000e+00> : vector<8x8xf32>
    %217 = tpu.matmul %215, %216, %cst_90 {dimension_numbers = #tpu.dot_dimension_numbers<[1], [1], [0], [0], [0, 0, 1, 0], [], []>} : vector<8x8xbf16>, vector<8x8xbf16>, vector<8x8xf32> -> vector<8x8xf32>
    %cst_91 = arith.constant 0.353553385 : f32
    %218 = vector.broadcast %cst_91 : f32 to vector<8x8xf32>
    %219 = arith.mulf %217, %218 : vector<8x8xf32>
    %cst_92 = arith.constant dense<0xFF800000> : vector<8xf32>
    %220 = vector.multi_reduction <maximumf>, %219, %cst_92 [1] : vector<8x8xf32> to vector<8xf32>
    %221 = vector.shape_cast %220 : vector<8xf32> to vector<8x1xf32>
    %222 = vector.broadcast %221 : vector<8x1xf32> to vector<8x8xf32>
    %223 = arith.subf %219, %222 : vector<8x8xf32>
    %224 = math.exp %223 : vector<8x8xf32>
    %cst_93 = arith.constant dense<0.000000e+00> : vector<8xf32>
    %225 = vector.multi_reduction <add>, %224, %cst_93 [1] : vector<8x8xf32> to vector<8xf32>
    %226 = vector.shape_cast %225 : vector<8xf32> to vector<8x1xf32>
    %227 = tpu.reciprocal %226 {approx = true} : vector<8x1xf32> -> vector<8x1xf32>
    %228 = vector.broadcast %227 : vector<8x1xf32> to vector<8x8xf32>
    %229 = arith.mulf %224, %228 : vector<8x8xf32>
    %230 = arith.truncf %229 : vector<8x8xf32> to vector<8x8xbf16>
    %231 = arith.truncf %214 : vector<8x8xf32> to vector<8x8xbf16>
    %cst_94 = arith.constant dense<0.000000e+00> : vector<8x8xf32>
    %232 = tpu.matmul %230, %231, %cst_94 {dimension_numbers = #tpu.dot_dimension_numbers<[1], [0], [0], [1], [0, 0, 1, 1], [], []>} : vector<8x8xbf16>, vector<8x8xbf16>, vector<8x8xf32> -> vector<8x8xf32>
    %233 = vector.extract_strided_slice %169 {offsets = [0, 24], sizes = [8, 8], strides = [1, 1]} : vector<8x96xf32> to vector<8x8xf32>
    %234 = vector.extract_strided_slice %169 {offsets = [0, 56], sizes = [8, 8], strides = [1, 1]} : vector<8x96xf32> to vector<8x8xf32>
    %235 = vector.extract_strided_slice %169 {offsets = [0, 88], sizes = [8, 8], strides = [1, 1]} : vector<8x96xf32> to vector<8x8xf32>
    %236 = arith.truncf %233 : vector<8x8xf32> to vector<8x8xbf16>
    %237 = arith.truncf %234 : vector<8x8xf32> to vector<8x8xbf16>
    %cst_95 = arith.constant dense<0.000000e+00> : vector<8x8xf32>
    %238 = tpu.matmul %236, %237, %cst_95 {dimension_numbers = #tpu.dot_dimension_numbers<[1], [1], [0], [0], [0, 0, 1, 0], [], []>} : vector<8x8xbf16>, vector<8x8xbf16>, vector<8x8xf32> -> vector<8x8xf32>
    %cst_96 = arith.constant 0.353553385 : f32
    %239 = vector.broadcast %cst_96 : f32 to vector<8x8xf32>
    %240 = arith.mulf %238, %239 : vector<8x8xf32>
    %cst_97 = arith.constant dense<0xFF800000> : vector<8xf32>
    %241 = vector.multi_reduction <maximumf>, %240, %cst_97 [1] : vector<8x8xf32> to vector<8xf32>
    %242 = vector.shape_cast %241 : vector<8xf32> to vector<8x1xf32>
    %243 = vector.broadcast %242 : vector<8x1xf32> to vector<8x8xf32>
    %244 = arith.subf %240, %243 : vector<8x8xf32>
    %245 = math.exp %244 : vector<8x8xf32>
    %cst_98 = arith.constant dense<0.000000e+00> : vector<8xf32>
    %246 = vector.multi_reduction <add>, %245, %cst_98 [1] : vector<8x8xf32> to vector<8xf32>
    %247 = vector.shape_cast %246 : vector<8xf32> to vector<8x1xf32>
    %248 = tpu.reciprocal %247 {approx = true} : vector<8x1xf32> -> vector<8x1xf32>
    %249 = vector.broadcast %248 : vector<8x1xf32> to vector<8x8xf32>
    %250 = arith.mulf %245, %249 : vector<8x8xf32>
    %251 = arith.truncf %250 : vector<8x8xf32> to vector<8x8xbf16>
    %252 = arith.truncf %235 : vector<8x8xf32> to vector<8x8xbf16>
    %cst_99 = arith.constant dense<0.000000e+00> : vector<8x8xf32>
    %253 = tpu.matmul %251, %252, %cst_99 {dimension_numbers = #tpu.dot_dimension_numbers<[1], [0], [0], [1], [0, 0, 1, 1], [], []>} : vector<8x8xbf16>, vector<8x8xbf16>, vector<8x8xf32> -> vector<8x8xf32>
    %254 = tpu.concatenate %190, %211, %232, %253 in 1 : vector<8x8xf32>, vector<8x8xf32>, vector<8x8xf32>, vector<8x8xf32> -> vector<8x32xf32>
    %c0_100 = arith.constant 0 : index
    %c0_101 = arith.constant 0 : index
    %c0_102 = arith.constant 0 : index
    %255 = vector.load %arg13[%c0_100, %c0_101, %c0_102] : memref<2x32x32xbf16, #tpu.memory_space<vmem>>, vector<1x32x32xbf16>
    %256 = vector.shape_cast %255 : vector<1x32x32xbf16> to vector<32x32xbf16>
    %257 = arith.truncf %254 : vector<8x32xf32> to vector<8x32xbf16>
    %cst_103 = arith.constant dense<0.000000e+00> : vector<8x32xf32>
    %258 = tpu.matmul %257, %256, %cst_103 {dimension_numbers = #tpu.dot_dimension_numbers<[1], [0], [0], [1], [0, 0, 1, 1], [], []>} : vector<8x32xbf16>, vector<32x32xbf16>, vector<8x32xf32> -> vector<8x32xf32>
    %c0_104 = arith.constant 0 : index
    %c0_105 = arith.constant 0 : index
    %c0_106 = arith.constant 0 : index
    %259 = vector.load %arg14[%c0_104, %c0_105, %c0_106] : memref<2x1x32xf32, #tpu.memory_space<vmem>>, vector<1x1x32xf32>
    %260 = vector.shape_cast %259 : vector<1x1x32xf32> to vector<1x32xf32>
    %261 = vector.broadcast %260 : vector<1x32xf32> to vector<8x32xf32>
    %262 = arith.addf %258, %261 : vector<8x32xf32>
    %c0_107 = arith.constant 0 : index
    %c0_108 = arith.constant 0 : index
    %c0_109 = arith.constant 0 : index
    %263 = vector.load %arg19[%c0_107, %c0_108, %c0_109] : memref<2x4x32xf32, #tpu.memory_space<vmem>>, vector<1x4x32xf32>
    %264 = vector.shape_cast %263 : vector<1x4x32xf32> to vector<4x32xf32>
    %265 = arith.addf %161, %262 : vector<8x32xf32>
    %266 = vector.extract_strided_slice %264 {offsets = [0, 0], sizes = [1, 32], strides = [1, 1]} : vector<4x32xf32> to vector<1x32xf32>
    %267 = vector.extract_strided_slice %264 {offsets = [1, 0], sizes = [1, 32], strides = [1, 1]} : vector<4x32xf32> to vector<1x32xf32>
    %cst_110 = arith.constant dense<0.000000e+00> : vector<8xf32>
    %268 = vector.multi_reduction <add>, %265, %cst_110 [1] : vector<8x32xf32> to vector<8xf32>
    %269 = vector.shape_cast %268 : vector<8xf32> to vector<8x1xf32>
    %cst_111 = arith.constant 3.200000e+01 : f32
    %270 = vector.broadcast %cst_111 : f32 to vector<8x1xf32>
    %271 = arith.divf %269, %270 : vector<8x1xf32>
    %272 = vector.broadcast %271 : vector<8x1xf32> to vector<8x32xf32>
    %273 = arith.subf %265, %272 : vector<8x32xf32>
    %274 = arith.mulf %273, %273 : vector<8x32xf32>
    %cst_112 = arith.constant dense<0.000000e+00> : vector<8xf32>
    %275 = vector.multi_reduction <add>, %274, %cst_112 [1] : vector<8x32xf32> to vector<8xf32>
    %276 = vector.shape_cast %275 : vector<8xf32> to vector<8x1xf32>
    %cst_113 = arith.constant 3.200000e+01 : f32
    %277 = vector.broadcast %cst_113 : f32 to vector<8x1xf32>
    %278 = arith.divf %276, %277 : vector<8x1xf32>
    %279 = vector.broadcast %271 : vector<8x1xf32> to vector<8x32xf32>
    %280 = arith.subf %265, %279 : vector<8x32xf32>
    %cst_114 = arith.constant 9.99999974E-6 : f32
    %281 = vector.broadcast %cst_114 : f32 to vector<8x1xf32>
    %282 = arith.addf %278, %281 : vector<8x1xf32>
    %283 = math.rsqrt %282 : vector<8x1xf32>
    %284 = vector.broadcast %283 : vector<8x1xf32> to vector<8x32xf32>
    %285 = arith.mulf %280, %284 : vector<8x32xf32>
    %286 = vector.broadcast %266 : vector<1x32xf32> to vector<8x32xf32>
    %287 = arith.mulf %285, %286 : vector<8x32xf32>
    %288 = vector.broadcast %267 : vector<1x32xf32> to vector<8x32xf32>
    %289 = arith.addf %287, %288 : vector<8x32xf32>
    %c0_115 = arith.constant 0 : index
    %c0_116 = arith.constant 0 : index
    %c0_117 = arith.constant 0 : index
    %290 = vector.load %arg15[%c0_115, %c0_116, %c0_117] : memref<2x32x64xbf16, #tpu.memory_space<vmem>>, vector<1x32x64xbf16>
    %291 = vector.shape_cast %290 : vector<1x32x64xbf16> to vector<32x64xbf16>
    %292 = arith.truncf %289 : vector<8x32xf32> to vector<8x32xbf16>
    %cst_118 = arith.constant dense<0.000000e+00> : vector<8x64xf32>
    %293 = tpu.matmul %292, %291, %cst_118 {dimension_numbers = #tpu.dot_dimension_numbers<[1], [0], [0], [1], [0, 0, 1, 1], [], []>} : vector<8x32xbf16>, vector<32x64xbf16>, vector<8x64xf32> -> vector<8x64xf32>
    %c0_119 = arith.constant 0 : index
    %c0_120 = arith.constant 0 : index
    %c0_121 = arith.constant 0 : index
    %294 = vector.load %arg16[%c0_119, %c0_120, %c0_121] : memref<2x1x64xf32, #tpu.memory_space<vmem>>, vector<1x1x64xf32>
    %295 = vector.shape_cast %294 : vector<1x1x64xf32> to vector<1x64xf32>
    %296 = vector.broadcast %295 : vector<1x64xf32> to vector<8x64xf32>
    %297 = arith.addf %293, %296 : vector<8x64xf32>
    %cst_122 = arith.constant 0.000000e+00 : f32
    %298 = vector.broadcast %cst_122 : f32 to vector<8x64xf32>
    %299 = arith.maximumf %297, %298 : vector<8x64xf32>
    %c0_123 = arith.constant 0 : index
    %c0_124 = arith.constant 0 : index
    %c0_125 = arith.constant 0 : index
    %300 = vector.load %arg17[%c0_123, %c0_124, %c0_125] : memref<2x64x32xbf16, #tpu.memory_space<vmem>>, vector<1x64x32xbf16>
    %301 = vector.shape_cast %300 : vector<1x64x32xbf16> to vector<64x32xbf16>
    %302 = arith.truncf %299 : vector<8x64xf32> to vector<8x64xbf16>
    %cst_126 = arith.constant dense<0.000000e+00> : vector<8x32xf32>
    %303 = tpu.matmul %302, %301, %cst_126 {dimension_numbers = #tpu.dot_dimension_numbers<[1], [0], [0], [1], [0, 0, 1, 1], [], []>} : vector<8x64xbf16>, vector<64x32xbf16>, vector<8x32xf32> -> vector<8x32xf32>
    %c0_127 = arith.constant 0 : index
    %c0_128 = arith.constant 0 : index
    %c0_129 = arith.constant 0 : index
    %304 = vector.load %arg18[%c0_127, %c0_128, %c0_129] : memref<2x1x32xf32, #tpu.memory_space<vmem>>, vector<1x1x32xf32>
    %305 = vector.shape_cast %304 : vector<1x1x32xf32> to vector<1x32xf32>
    %306 = vector.broadcast %305 : vector<1x32xf32> to vector<8x32xf32>
    %307 = arith.addf %303, %306 : vector<8x32xf32>
    %308 = arith.addf %289, %307 : vector<8x32xf32>
    %309 = vector.extract_strided_slice %264 {offsets = [2, 0], sizes = [1, 32], strides = [1, 1]} : vector<4x32xf32> to vector<1x32xf32>
    %310 = vector.extract_strided_slice %264 {offsets = [3, 0], sizes = [1, 32], strides = [1, 1]} : vector<4x32xf32> to vector<1x32xf32>
    %cst_130 = arith.constant dense<0.000000e+00> : vector<8xf32>
    %311 = vector.multi_reduction <add>, %308, %cst_130 [1] : vector<8x32xf32> to vector<8xf32>
    %312 = vector.shape_cast %311 : vector<8xf32> to vector<8x1xf32>
    %cst_131 = arith.constant 3.200000e+01 : f32
    %313 = vector.broadcast %cst_131 : f32 to vector<8x1xf32>
    %314 = arith.divf %312, %313 : vector<8x1xf32>
    %315 = vector.broadcast %314 : vector<8x1xf32> to vector<8x32xf32>
    %316 = arith.subf %308, %315 : vector<8x32xf32>
    %317 = arith.mulf %316, %316 : vector<8x32xf32>
    %cst_132 = arith.constant dense<0.000000e+00> : vector<8xf32>
    %318 = vector.multi_reduction <add>, %317, %cst_132 [1] : vector<8x32xf32> to vector<8xf32>
    %319 = vector.shape_cast %318 : vector<8xf32> to vector<8x1xf32>
    %cst_133 = arith.constant 3.200000e+01 : f32
    %320 = vector.broadcast %cst_133 : f32 to vector<8x1xf32>
    %321 = arith.divf %319, %320 : vector<8x1xf32>
    %322 = vector.broadcast %314 : vector<8x1xf32> to vector<8x32xf32>
    %323 = arith.subf %308, %322 : vector<8x32xf32>
    %cst_134 = arith.constant 9.99999974E-6 : f32
    %324 = vector.broadcast %cst_134 : f32 to vector<8x1xf32>
    %325 = arith.addf %321, %324 : vector<8x1xf32>
    %326 = math.rsqrt %325 : vector<8x1xf32>
    %327 = vector.broadcast %326 : vector<8x1xf32> to vector<8x32xf32>
    %328 = arith.mulf %323, %327 : vector<8x32xf32>
    %329 = vector.broadcast %309 : vector<1x32xf32> to vector<8x32xf32>
    %330 = arith.mulf %328, %329 : vector<8x32xf32>
    %331 = vector.broadcast %310 : vector<1x32xf32> to vector<8x32xf32>
    %332 = arith.addf %330, %331 : vector<8x32xf32>
    %c1_135 = arith.constant 1 : index
    %c0_136 = arith.constant 0 : index
    %c0_137 = arith.constant 0 : index
    %333 = vector.load %arg11[%c1_135, %c0_136, %c0_137] : memref<2x32x96xbf16, #tpu.memory_space<vmem>>, vector<1x32x96xbf16>
    %334 = vector.shape_cast %333 : vector<1x32x96xbf16> to vector<32x96xbf16>
    %335 = arith.truncf %332 : vector<8x32xf32> to vector<8x32xbf16>
    %cst_138 = arith.constant dense<0.000000e+00> : vector<8x96xf32>
    %336 = tpu.matmul %335, %334, %cst_138 {dimension_numbers = #tpu.dot_dimension_numbers<[1], [0], [0], [1], [0, 0, 1, 1], [], []>} : vector<8x32xbf16>, vector<32x96xbf16>, vector<8x96xf32> -> vector<8x96xf32>
    %c1_139 = arith.constant 1 : index
    %c0_140 = arith.constant 0 : index
    %c0_141 = arith.constant 0 : index
    %337 = vector.load %arg12[%c1_139, %c0_140, %c0_141] : memref<2x1x96xf32, #tpu.memory_space<vmem>>, vector<1x1x96xf32>
    %338 = vector.shape_cast %337 : vector<1x1x96xf32> to vector<1x96xf32>
    %339 = vector.broadcast %338 : vector<1x96xf32> to vector<8x96xf32>
    %340 = arith.addf %336, %339 : vector<8x96xf32>
    %341 = vector.extract_strided_slice %340 {offsets = [0, 0], sizes = [8, 8], strides = [1, 1]} : vector<8x96xf32> to vector<8x8xf32>
    %342 = vector.extract_strided_slice %340 {offsets = [0, 32], sizes = [8, 8], strides = [1, 1]} : vector<8x96xf32> to vector<8x8xf32>
    %343 = vector.extract_strided_slice %340 {offsets = [0, 64], sizes = [8, 8], strides = [1, 1]} : vector<8x96xf32> to vector<8x8xf32>
    %344 = arith.truncf %341 : vector<8x8xf32> to vector<8x8xbf16>
    %345 = arith.truncf %342 : vector<8x8xf32> to vector<8x8xbf16>
    %cst_142 = arith.constant dense<0.000000e+00> : vector<8x8xf32>
    %346 = tpu.matmul %344, %345, %cst_142 {dimension_numbers = #tpu.dot_dimension_numbers<[1], [1], [0], [0], [0, 0, 1, 0], [], []>} : vector<8x8xbf16>, vector<8x8xbf16>, vector<8x8xf32> -> vector<8x8xf32>
    %cst_143 = arith.constant 0.353553385 : f32
    %347 = vector.broadcast %cst_143 : f32 to vector<8x8xf32>
    %348 = arith.mulf %346, %347 : vector<8x8xf32>
    %cst_144 = arith.constant dense<0xFF800000> : vector<8xf32>
    %349 = vector.multi_reduction <maximumf>, %348, %cst_144 [1] : vector<8x8xf32> to vector<8xf32>
    %350 = vector.shape_cast %349 : vector<8xf32> to vector<8x1xf32>
    %351 = vector.broadcast %350 : vector<8x1xf32> to vector<8x8xf32>
    %352 = arith.subf %348, %351 : vector<8x8xf32>
    %353 = math.exp %352 : vector<8x8xf32>
    %cst_145 = arith.constant dense<0.000000e+00> : vector<8xf32>
    %354 = vector.multi_reduction <add>, %353, %cst_145 [1] : vector<8x8xf32> to vector<8xf32>
    %355 = vector.shape_cast %354 : vector<8xf32> to vector<8x1xf32>
    %356 = tpu.reciprocal %355 {approx = true} : vector<8x1xf32> -> vector<8x1xf32>
    %357 = vector.broadcast %356 : vector<8x1xf32> to vector<8x8xf32>
    %358 = arith.mulf %353, %357 : vector<8x8xf32>
    %359 = arith.truncf %358 : vector<8x8xf32> to vector<8x8xbf16>
    %360 = arith.truncf %343 : vector<8x8xf32> to vector<8x8xbf16>
    %cst_146 = arith.constant dense<0.000000e+00> : vector<8x8xf32>
    %361 = tpu.matmul %359, %360, %cst_146 {dimension_numbers = #tpu.dot_dimension_numbers<[1], [0], [0], [1], [0, 0, 1, 1], [], []>} : vector<8x8xbf16>, vector<8x8xbf16>, vector<8x8xf32> -> vector<8x8xf32>
    %362 = vector.extract_strided_slice %340 {offsets = [0, 8], sizes = [8, 8], strides = [1, 1]} : vector<8x96xf32> to vector<8x8xf32>
    %363 = vector.extract_strided_slice %340 {offsets = [0, 40], sizes = [8, 8], strides = [1, 1]} : vector<8x96xf32> to vector<8x8xf32>
    %364 = vector.extract_strided_slice %340 {offsets = [0, 72], sizes = [8, 8], strides = [1, 1]} : vector<8x96xf32> to vector<8x8xf32>
    %365 = arith.truncf %362 : vector<8x8xf32> to vector<8x8xbf16>
    %366 = arith.truncf %363 : vector<8x8xf32> to vector<8x8xbf16>
    %cst_147 = arith.constant dense<0.000000e+00> : vector<8x8xf32>
    %367 = tpu.matmul %365, %366, %cst_147 {dimension_numbers = #tpu.dot_dimension_numbers<[1], [1], [0], [0], [0, 0, 1, 0], [], []>} : vector<8x8xbf16>, vector<8x8xbf16>, vector<8x8xf32> -> vector<8x8xf32>
    %cst_148 = arith.constant 0.353553385 : f32
    %368 = vector.broadcast %cst_148 : f32 to vector<8x8xf32>
    %369 = arith.mulf %367, %368 : vector<8x8xf32>
    %cst_149 = arith.constant dense<0xFF800000> : vector<8xf32>
    %370 = vector.multi_reduction <maximumf>, %369, %cst_149 [1] : vector<8x8xf32> to vector<8xf32>
    %371 = vector.shape_cast %370 : vector<8xf32> to vector<8x1xf32>
    %372 = vector.broadcast %371 : vector<8x1xf32> to vector<8x8xf32>
    %373 = arith.subf %369, %372 : vector<8x8xf32>
    %374 = math.exp %373 : vector<8x8xf32>
    %cst_150 = arith.constant dense<0.000000e+00> : vector<8xf32>
    %375 = vector.multi_reduction <add>, %374, %cst_150 [1] : vector<8x8xf32> to vector<8xf32>
    %376 = vector.shape_cast %375 : vector<8xf32> to vector<8x1xf32>
    %377 = tpu.reciprocal %376 {approx = true} : vector<8x1xf32> -> vector<8x1xf32>
    %378 = vector.broadcast %377 : vector<8x1xf32> to vector<8x8xf32>
    %379 = arith.mulf %374, %378 : vector<8x8xf32>
    %380 = arith.truncf %379 : vector<8x8xf32> to vector<8x8xbf16>
    %381 = arith.truncf %364 : vector<8x8xf32> to vector<8x8xbf16>
    %cst_151 = arith.constant dense<0.000000e+00> : vector<8x8xf32>
    %382 = tpu.matmul %380, %381, %cst_151 {dimension_numbers = #tpu.dot_dimension_numbers<[1], [0], [0], [1], [0, 0, 1, 1], [], []>} : vector<8x8xbf16>, vector<8x8xbf16>, vector<8x8xf32> -> vector<8x8xf32>
    %383 = vector.extract_strided_slice %340 {offsets = [0, 16], sizes = [8, 8], strides = [1, 1]} : vector<8x96xf32> to vector<8x8xf32>
    %384 = vector.extract_strided_slice %340 {offsets = [0, 48], sizes = [8, 8], strides = [1, 1]} : vector<8x96xf32> to vector<8x8xf32>
    %385 = vector.extract_strided_slice %340 {offsets = [0, 80], sizes = [8, 8], strides = [1, 1]} : vector<8x96xf32> to vector<8x8xf32>
    %386 = arith.truncf %383 : vector<8x8xf32> to vector<8x8xbf16>
    %387 = arith.truncf %384 : vector<8x8xf32> to vector<8x8xbf16>
    %cst_152 = arith.constant dense<0.000000e+00> : vector<8x8xf32>
    %388 = tpu.matmul %386, %387, %cst_152 {dimension_numbers = #tpu.dot_dimension_numbers<[1], [1], [0], [0], [0, 0, 1, 0], [], []>} : vector<8x8xbf16>, vector<8x8xbf16>, vector<8x8xf32> -> vector<8x8xf32>
    %cst_153 = arith.constant 0.353553385 : f32
    %389 = vector.broadcast %cst_153 : f32 to vector<8x8xf32>
    %390 = arith.mulf %388, %389 : vector<8x8xf32>
    %cst_154 = arith.constant dense<0xFF800000> : vector<8xf32>
    %391 = vector.multi_reduction <maximumf>, %390, %cst_154 [1] : vector<8x8xf32> to vector<8xf32>
    %392 = vector.shape_cast %391 : vector<8xf32> to vector<8x1xf32>
    %393 = vector.broadcast %392 : vector<8x1xf32> to vector<8x8xf32>
    %394 = arith.subf %390, %393 : vector<8x8xf32>
    %395 = math.exp %394 : vector<8x8xf32>
    %cst_155 = arith.constant dense<0.000000e+00> : vector<8xf32>
    %396 = vector.multi_reduction <add>, %395, %cst_155 [1] : vector<8x8xf32> to vector<8xf32>
    %397 = vector.shape_cast %396 : vector<8xf32> to vector<8x1xf32>
    %398 = tpu.reciprocal %397 {approx = true} : vector<8x1xf32> -> vector<8x1xf32>
    %399 = vector.broadcast %398 : vector<8x1xf32> to vector<8x8xf32>
    %400 = arith.mulf %395, %399 : vector<8x8xf32>
    %401 = arith.truncf %400 : vector<8x8xf32> to vector<8x8xbf16>
    %402 = arith.truncf %385 : vector<8x8xf32> to vector<8x8xbf16>
    %cst_156 = arith.constant dense<0.000000e+00> : vector<8x8xf32>
    %403 = tpu.matmul %401, %402, %cst_156 {dimension_numbers = #tpu.dot_dimension_numbers<[1], [0], [0], [1], [0, 0, 1, 1], [], []>} : vector<8x8xbf16>, vector<8x8xbf16>, vector<8x8xf32> -> vector<8x8xf32>
    %404 = vector.extract_strided_slice %340 {offsets = [0, 24], sizes = [8, 8], strides = [1, 1]} : vector<8x96xf32> to vector<8x8xf32>
    %405 = vector.extract_strided_slice %340 {offsets = [0, 56], sizes = [8, 8], strides = [1, 1]} : vector<8x96xf32> to vector<8x8xf32>
    %406 = vector.extract_strided_slice %340 {offsets = [0, 88], sizes = [8, 8], strides = [1, 1]} : vector<8x96xf32> to vector<8x8xf32>
    %407 = arith.truncf %404 : vector<8x8xf32> to vector<8x8xbf16>
    %408 = arith.truncf %405 : vector<8x8xf32> to vector<8x8xbf16>
    %cst_157 = arith.constant dense<0.000000e+00> : vector<8x8xf32>
    %409 = tpu.matmul %407, %408, %cst_157 {dimension_numbers = #tpu.dot_dimension_numbers<[1], [1], [0], [0], [0, 0, 1, 0], [], []>} : vector<8x8xbf16>, vector<8x8xbf16>, vector<8x8xf32> -> vector<8x8xf32>
    %cst_158 = arith.constant 0.353553385 : f32
    %410 = vector.broadcast %cst_158 : f32 to vector<8x8xf32>
    %411 = arith.mulf %409, %410 : vector<8x8xf32>
    %cst_159 = arith.constant dense<0xFF800000> : vector<8xf32>
    %412 = vector.multi_reduction <maximumf>, %411, %cst_159 [1] : vector<8x8xf32> to vector<8xf32>
    %413 = vector.shape_cast %412 : vector<8xf32> to vector<8x1xf32>
    %414 = vector.broadcast %413 : vector<8x1xf32> to vector<8x8xf32>
    %415 = arith.subf %411, %414 : vector<8x8xf32>
    %416 = math.exp %415 : vector<8x8xf32>
    %cst_160 = arith.constant dense<0.000000e+00> : vector<8xf32>
    %417 = vector.multi_reduction <add>, %416, %cst_160 [1] : vector<8x8xf32> to vector<8xf32>
    %418 = vector.shape_cast %417 : vector<8xf32> to vector<8x1xf32>
    %419 = tpu.reciprocal %418 {approx = true} : vector<8x1xf32> -> vector<8x1xf32>
    %420 = vector.broadcast %419 : vector<8x1xf32> to vector<8x8xf32>
    %421 = arith.mulf %416, %420 : vector<8x8xf32>
    %422 = arith.truncf %421 : vector<8x8xf32> to vector<8x8xbf16>
    %423 = arith.truncf %406 : vector<8x8xf32> to vector<8x8xbf16>
    %cst_161 = arith.constant dense<0.000000e+00> : vector<8x8xf32>
    %424 = tpu.matmul %422, %423, %cst_161 {dimension_numbers = #tpu.dot_dimension_numbers<[1], [0], [0], [1], [0, 0, 1, 1], [], []>} : vector<8x8xbf16>, vector<8x8xbf16>, vector<8x8xf32> -> vector<8x8xf32>
    %425 = tpu.concatenate %361, %382, %403, %424 in 1 : vector<8x8xf32>, vector<8x8xf32>, vector<8x8xf32>, vector<8x8xf32> -> vector<8x32xf32>
    %c1_162 = arith.constant 1 : index
    %c0_163 = arith.constant 0 : index
    %c0_164 = arith.constant 0 : index
    %426 = vector.load %arg13[%c1_162, %c0_163, %c0_164] : memref<2x32x32xbf16, #tpu.memory_space<vmem>>, vector<1x32x32xbf16>
    %427 = vector.shape_cast %426 : vector<1x32x32xbf16> to vector<32x32xbf16>
    %428 = arith.truncf %425 : vector<8x32xf32> to vector<8x32xbf16>
    %cst_165 = arith.constant dense<0.000000e+00> : vector<8x32xf32>
    %429 = tpu.matmul %428, %427, %cst_165 {dimension_numbers = #tpu.dot_dimension_numbers<[1], [0], [0], [1], [0, 0, 1, 1], [], []>} : vector<8x32xbf16>, vector<32x32xbf16>, vector<8x32xf32> -> vector<8x32xf32>
    %c1_166 = arith.constant 1 : index
    %c0_167 = arith.constant 0 : index
    %c0_168 = arith.constant 0 : index
    %430 = vector.load %arg14[%c1_166, %c0_167, %c0_168] : memref<2x1x32xf32, #tpu.memory_space<vmem>>, vector<1x1x32xf32>
    %431 = vector.shape_cast %430 : vector<1x1x32xf32> to vector<1x32xf32>
    %432 = vector.broadcast %431 : vector<1x32xf32> to vector<8x32xf32>
    %433 = arith.addf %429, %432 : vector<8x32xf32>
    %c1_169 = arith.constant 1 : index
    %c0_170 = arith.constant 0 : index
    %c0_171 = arith.constant 0 : index
    %434 = vector.load %arg19[%c1_169, %c0_170, %c0_171] : memref<2x4x32xf32, #tpu.memory_space<vmem>>, vector<1x4x32xf32>
    %435 = vector.shape_cast %434 : vector<1x4x32xf32> to vector<4x32xf32>
    %436 = arith.addf %332, %433 : vector<8x32xf32>
    %437 = vector.extract_strided_slice %435 {offsets = [0, 0], sizes = [1, 32], strides = [1, 1]} : vector<4x32xf32> to vector<1x32xf32>
    %438 = vector.extract_strided_slice %435 {offsets = [1, 0], sizes = [1, 32], strides = [1, 1]} : vector<4x32xf32> to vector<1x32xf32>
    %cst_172 = arith.constant dense<0.000000e+00> : vector<8xf32>
    %439 = vector.multi_reduction <add>, %436, %cst_172 [1] : vector<8x32xf32> to vector<8xf32>
    %440 = vector.shape_cast %439 : vector<8xf32> to vector<8x1xf32>
    %cst_173 = arith.constant 3.200000e+01 : f32
    %441 = vector.broadcast %cst_173 : f32 to vector<8x1xf32>
    %442 = arith.divf %440, %441 : vector<8x1xf32>
    %443 = vector.broadcast %442 : vector<8x1xf32> to vector<8x32xf32>
    %444 = arith.subf %436, %443 : vector<8x32xf32>
    %445 = arith.mulf %444, %444 : vector<8x32xf32>
    %cst_174 = arith.constant dense<0.000000e+00> : vector<8xf32>
    %446 = vector.multi_reduction <add>, %445, %cst_174 [1] : vector<8x32xf32> to vector<8xf32>
    %447 = vector.shape_cast %446 : vector<8xf32> to vector<8x1xf32>
    %cst_175 = arith.constant 3.200000e+01 : f32
    %448 = vector.broadcast %cst_175 : f32 to vector<8x1xf32>
    %449 = arith.divf %447, %448 : vector<8x1xf32>
    %450 = vector.broadcast %442 : vector<8x1xf32> to vector<8x32xf32>
    %451 = arith.subf %436, %450 : vector<8x32xf32>
    %cst_176 = arith.constant 9.99999974E-6 : f32
    %452 = vector.broadcast %cst_176 : f32 to vector<8x1xf32>
    %453 = arith.addf %449, %452 : vector<8x1xf32>
    %454 = math.rsqrt %453 : vector<8x1xf32>
    %455 = vector.broadcast %454 : vector<8x1xf32> to vector<8x32xf32>
    %456 = arith.mulf %451, %455 : vector<8x32xf32>
    %457 = vector.broadcast %437 : vector<1x32xf32> to vector<8x32xf32>
    %458 = arith.mulf %456, %457 : vector<8x32xf32>
    %459 = vector.broadcast %438 : vector<1x32xf32> to vector<8x32xf32>
    %460 = arith.addf %458, %459 : vector<8x32xf32>
    %c1_177 = arith.constant 1 : index
    %c0_178 = arith.constant 0 : index
    %c0_179 = arith.constant 0 : index
    %461 = vector.load %arg15[%c1_177, %c0_178, %c0_179] : memref<2x32x64xbf16, #tpu.memory_space<vmem>>, vector<1x32x64xbf16>
    %462 = vector.shape_cast %461 : vector<1x32x64xbf16> to vector<32x64xbf16>
    %463 = arith.truncf %460 : vector<8x32xf32> to vector<8x32xbf16>
    %cst_180 = arith.constant dense<0.000000e+00> : vector<8x64xf32>
    %464 = tpu.matmul %463, %462, %cst_180 {dimension_numbers = #tpu.dot_dimension_numbers<[1], [0], [0], [1], [0, 0, 1, 1], [], []>} : vector<8x32xbf16>, vector<32x64xbf16>, vector<8x64xf32> -> vector<8x64xf32>
    %c1_181 = arith.constant 1 : index
    %c0_182 = arith.constant 0 : index
    %c0_183 = arith.constant 0 : index
    %465 = vector.load %arg16[%c1_181, %c0_182, %c0_183] : memref<2x1x64xf32, #tpu.memory_space<vmem>>, vector<1x1x64xf32>
    %466 = vector.shape_cast %465 : vector<1x1x64xf32> to vector<1x64xf32>
    %467 = vector.broadcast %466 : vector<1x64xf32> to vector<8x64xf32>
    %468 = arith.addf %464, %467 : vector<8x64xf32>
    %cst_184 = arith.constant 0.000000e+00 : f32
    %469 = vector.broadcast %cst_184 : f32 to vector<8x64xf32>
    %470 = arith.maximumf %468, %469 : vector<8x64xf32>
    %c1_185 = arith.constant 1 : index
    %c0_186 = arith.constant 0 : index
    %c0_187 = arith.constant 0 : index
    %471 = vector.load %arg17[%c1_185, %c0_186, %c0_187] : memref<2x64x32xbf16, #tpu.memory_space<vmem>>, vector<1x64x32xbf16>
    %472 = vector.shape_cast %471 : vector<1x64x32xbf16> to vector<64x32xbf16>
    %473 = arith.truncf %470 : vector<8x64xf32> to vector<8x64xbf16>
    %cst_188 = arith.constant dense<0.000000e+00> : vector<8x32xf32>
    %474 = tpu.matmul %473, %472, %cst_188 {dimension_numbers = #tpu.dot_dimension_numbers<[1], [0], [0], [1], [0, 0, 1, 1], [], []>} : vector<8x64xbf16>, vector<64x32xbf16>, vector<8x32xf32> -> vector<8x32xf32>
    %c1_189 = arith.constant 1 : index
    %c0_190 = arith.constant 0 : index
    %c0_191 = arith.constant 0 : index
    %475 = vector.load %arg18[%c1_189, %c0_190, %c0_191] : memref<2x1x32xf32, #tpu.memory_space<vmem>>, vector<1x1x32xf32>
    %476 = vector.shape_cast %475 : vector<1x1x32xf32> to vector<1x32xf32>
    %477 = vector.broadcast %476 : vector<1x32xf32> to vector<8x32xf32>
    %478 = arith.addf %474, %477 : vector<8x32xf32>
    %479 = arith.addf %460, %478 : vector<8x32xf32>
    %480 = vector.extract_strided_slice %435 {offsets = [2, 0], sizes = [1, 32], strides = [1, 1]} : vector<4x32xf32> to vector<1x32xf32>
    %481 = vector.extract_strided_slice %435 {offsets = [3, 0], sizes = [1, 32], strides = [1, 1]} : vector<4x32xf32> to vector<1x32xf32>
    %cst_192 = arith.constant dense<0.000000e+00> : vector<8xf32>
    %482 = vector.multi_reduction <add>, %479, %cst_192 [1] : vector<8x32xf32> to vector<8xf32>
    %483 = vector.shape_cast %482 : vector<8xf32> to vector<8x1xf32>
    %cst_193 = arith.constant 3.200000e+01 : f32
    %484 = vector.broadcast %cst_193 : f32 to vector<8x1xf32>
    %485 = arith.divf %483, %484 : vector<8x1xf32>
    %486 = vector.broadcast %485 : vector<8x1xf32> to vector<8x32xf32>
    %487 = arith.subf %479, %486 : vector<8x32xf32>
    %488 = arith.mulf %487, %487 : vector<8x32xf32>
    %cst_194 = arith.constant dense<0.000000e+00> : vector<8xf32>
    %489 = vector.multi_reduction <add>, %488, %cst_194 [1] : vector<8x32xf32> to vector<8xf32>
    %490 = vector.shape_cast %489 : vector<8xf32> to vector<8x1xf32>
    %cst_195 = arith.constant 3.200000e+01 : f32
    %491 = vector.broadcast %cst_195 : f32 to vector<8x1xf32>
    %492 = arith.divf %490, %491 : vector<8x1xf32>
    %493 = vector.broadcast %485 : vector<8x1xf32> to vector<8x32xf32>
    %494 = arith.subf %479, %493 : vector<8x32xf32>
    %cst_196 = arith.constant 9.99999974E-6 : f32
    %495 = vector.broadcast %cst_196 : f32 to vector<8x1xf32>
    %496 = arith.addf %492, %495 : vector<8x1xf32>
    %497 = math.rsqrt %496 : vector<8x1xf32>
    %498 = vector.broadcast %497 : vector<8x1xf32> to vector<8x32xf32>
    %499 = arith.mulf %494, %498 : vector<8x32xf32>
    %500 = vector.broadcast %480 : vector<1x32xf32> to vector<8x32xf32>
    %501 = arith.mulf %499, %500 : vector<8x32xf32>
    %502 = vector.broadcast %481 : vector<1x32xf32> to vector<8x32xf32>
    %503 = arith.addf %501, %502 : vector<8x32xf32>
    %cst_197 = arith.constant dense<0.000000e+00> : vector<32xf32>
    %504 = vector.multi_reduction <add>, %503, %cst_197 [0] : vector<8x32xf32> to vector<32xf32>
    %505 = vector.shape_cast %504 : vector<32xf32> to vector<1x32xf32>
    %cst_198 = arith.constant 8.000000e+00 : f32
    %506 = vector.broadcast %cst_198 : f32 to vector<1x32xf32>
    %507 = arith.divf %505, %506 : vector<1x32xf32>
    %c0_199 = arith.constant 0 : index
    %c0_200 = arith.constant 0 : index
    %508 = vector.load %arg20[%c0_199, %c0_200] : memref<32x8xbf16, #tpu.memory_space<vmem>>, vector<32x8xbf16>
    %509 = arith.truncf %507 : vector<1x32xf32> to vector<1x32xbf16>
    %cst_201 = arith.constant dense<0.000000e+00> : vector<1x8xf32>
    %510 = tpu.matmul %509, %508, %cst_201 {dimension_numbers = #tpu.dot_dimension_numbers<[1], [0], [0], [1], [0, 0, 1, 1], [], []>} : vector<1x32xbf16>, vector<32x8xbf16>, vector<1x8xf32> -> vector<1x8xf32>
    %c0_202 = arith.constant 0 : index
    %c0_203 = arith.constant 0 : index
    %511 = vector.load %arg21[%c0_202, %c0_203] : memref<1x8xf32, #tpu.memory_space<vmem>>, vector<1x8xf32>
    %512 = arith.addf %510, %511 : vector<1x8xf32>
    %c0_204 = arith.constant 0 : index
    %c0_205 = arith.constant 0 : index
    %c0_206 = arith.constant 0 : index
    %513 = vector.load %arg22[%c0_204, %c0_205, %c0_206] : memref<1x1x8xf32, #tpu.memory_space<vmem>>, vector<1x1x8xf32>
    %514 = vector.shape_cast %513 : vector<1x1x8xf32> to vector<1x8xf32>
    %515 = vector.shape_cast %512 : vector<1x8xf32> to vector<1x1x8xf32>
    tpu.vector_store %arg22[%c0_204, %c0_205, %c0_206], %515 {strides = array<i32>} : memref<1x1x8xf32, #tpu.memory_space<vmem>>, vector<1x1x8xf32>,
    return
  }
  func.func @transform_0(%arg0: i32) -> (i32, i32, i32) {
    %c0_i32 = arith.constant 0 : i32
    %c0_i32_0 = arith.constant 0 : i32
    %c0_i32_1 = arith.constant 0 : i32
    return %arg0, %c0_i32, %c0_i32_0 : i32, i32, i32
  }
  func.func @transform_1(%arg0: i32) -> (i32, i32, i32) {
    %c0_i32 = arith.constant 0 : i32
    %c0_i32_0 = arith.constant 0 : i32
    %c0_i32_1 = arith.constant 0 : i32
    return %arg0, %c0_i32, %c0_i32_0 : i32, i32, i32
  }
  func.func @transform_2(%arg0: i32) -> (i32, i32) {
    %c0_i32 = arith.constant 0 : i32
    %c0_i32_0 = arith.constant 0 : i32
    %c0_i32_1 = arith.constant 0 : i32
    return %c0_i32, %c0_i32_0 : i32, i32
  }
  func.func @transform_3(%arg0: i32) -> (i32, i32) {
    %c0_i32 = arith.constant 0 : i32
    %c0_i32_0 = arith.constant 0 : i32
    %c0_i32_1 = arith.constant 0 : i32
    return %c0_i32, %c0_i32_0 : i32, i32
  }
  func.func @transform_4(%arg0: i32) -> (i32, i32, i32) {
    %c0_i32 = arith.constant 0 : i32
    %c0_i32_0 = arith.constant 0 : i32
    %c0_i32_1 = arith.constant 0 : i32
    %c0_i32_2 = arith.constant 0 : i32
    return %c0_i32, %c0_i32_0, %c0_i32_1 : i32, i32, i32
  }
  func.func @transform_5(%arg0: i32) -> (i32, i32, i32) {
    %c0_i32 = arith.constant 0 : i32
    %c0_i32_0 = arith.constant 0 : i32
    %c0_i32_1 = arith.constant 0 : i32
    %c0_i32_2 = arith.constant 0 : i32
    return %c0_i32, %c0_i32_0, %c0_i32_1 : i32, i32, i32
  }
  func.func @transform_6(%arg0: i32) -> (i32, i32) {
    %c0_i32 = arith.constant 0 : i32
    %c0_i32_0 = arith.constant 0 : i32
    %c0_i32_1 = arith.constant 0 : i32
    return %c0_i32, %c0_i32_0 : i32, i32
  }
  func.func @transform_7(%arg0: i32) -> (i32, i32, i32) {
    %c0_i32 = arith.constant 0 : i32
    %c0_i32_0 = arith.constant 0 : i32
    %c0_i32_1 = arith.constant 0 : i32
    %c0_i32_2 = arith.constant 0 : i32
    return %c0_i32, %c0_i32_0, %c0_i32_1 : i32, i32, i32
  }
  func.func @transform_8(%arg0: i32) -> (i32, i32, i32) {
    %c0_i32 = arith.constant 0 : i32
    %c0_i32_0 = arith.constant 0 : i32
    %c0_i32_1 = arith.constant 0 : i32
    %c0_i32_2 = arith.constant 0 : i32
    return %c0_i32, %c0_i32_0, %c0_i32_1 : i32, i32, i32
  }
  func.func @transform_9(%arg0: i32) -> (i32, i32, i32) {
    %c0_i32 = arith.constant 0 : i32
    %c0_i32_0 = arith.constant 0 : i32
    %c0_i32_1 = arith.constant 0 : i32
    %c0_i32_2 = arith.constant 0 : i32
    return %c0_i32, %c0_i32_0, %c0_i32_1 : i32, i32, i32
  }
  func.func @transform_10(%arg0: i32) -> (i32, i32, i32) {
    %c0_i32 = arith.constant 0 : i32
    %c0_i32_0 = arith.constant 0 : i32
    %c0_i32_1 = arith.constant 0 : i32
    %c0_i32_2 = arith.constant 0 : i32
    return %c0_i32, %c0_i32_0, %c0_i32_1 : i32, i32, i32
  }
  func.func @transform_11(%arg0: i32) -> (i32, i32, i32) {
    %c0_i32 = arith.constant 0 : i32
    %c0_i32_0 = arith.constant 0 : i32
    %c0_i32_1 = arith.constant 0 : i32
    %c0_i32_2 = arith.constant 0 : i32
    return %c0_i32, %c0_i32_0, %c0_i32_1 : i32, i32, i32
  }
  func.func @transform_12(%arg0: i32) -> (i32, i32, i32) {
    %c0_i32 = arith.constant 0 : i32
    %c0_i32_0 = arith.constant 0 : i32
    %c0_i32_1 = arith.constant 0 : i32
    %c0_i32_2 = arith.constant 0 : i32
    return %c0_i32, %c0_i32_0, %c0_i32_1 : i32, i32, i32
  }
  func.func @transform_13(%arg0: i32) -> (i32, i32, i32) {
    %c0_i32 = arith.constant 0 : i32
    %c0_i32_0 = arith.constant 0 : i32
    %c0_i32_1 = arith.constant 0 : i32
    %c0_i32_2 = arith.constant 0 : i32
    return %c0_i32, %c0_i32_0, %c0_i32_1 : i32, i32, i32
  }
  func.func @transform_14(%arg0: i32) -> (i32, i32, i32) {
    %c0_i32 = arith.constant 0 : i32
    %c0_i32_0 = arith.constant 0 : i32
    %c0_i32_1 = arith.constant 0 : i32
    %c0_i32_2 = arith.constant 0 : i32
    return %c0_i32, %c0_i32_0, %c0_i32_1 : i32, i32, i32
  }
  func.func @transform_15(%arg0: i32) -> (i32, i32, i32) {
    %c0_i32 = arith.constant 0 : i32
    %c0_i32_0 = arith.constant 0 : i32
    %c0_i32_1 = arith.constant 0 : i32
    %c0_i32_2 = arith.constant 0 : i32
    return %c0_i32, %c0_i32_0, %c0_i32_1 : i32, i32, i32
  }
  func.func @transform_16(%arg0: i32) -> (i32, i32, i32) {
    %c0_i32 = arith.constant 0 : i32
    %c0_i32_0 = arith.constant 0 : i32
    %c0_i32_1 = arith.constant 0 : i32
    %c0_i32_2 = arith.constant 0 : i32
    return %c0_i32, %c0_i32_0, %c0_i32_1 : i32, i32, i32
  }
  func.func @transform_17(%arg0: i32) -> (i32, i32, i32) {
    %c0_i32 = arith.constant 0 : i32
    %c0_i32_0 = arith.constant 0 : i32
    %c0_i32_1 = arith.constant 0 : i32
    %c0_i32_2 = arith.constant 0 : i32
    return %c0_i32, %c0_i32_0, %c0_i32_1 : i32, i32, i32
  }
  func.func @transform_18(%arg0: i32) -> (i32, i32, i32) {
    %c0_i32 = arith.constant 0 : i32
    %c0_i32_0 = arith.constant 0 : i32
    %c0_i32_1 = arith.constant 0 : i32
    %c0_i32_2 = arith.constant 0 : i32
    return %c0_i32, %c0_i32_0, %c0_i32_1 : i32, i32, i32
  }
  func.func @transform_19(%arg0: i32) -> (i32, i32) {
    %c0_i32 = arith.constant 0 : i32
    %c0_i32_0 = arith.constant 0 : i32
    %c0_i32_1 = arith.constant 0 : i32
    return %c0_i32, %c0_i32_0 : i32, i32
  }
  func.func @transform_20(%arg0: i32) -> (i32, i32) {
    %c0_i32 = arith.constant 0 : i32
    %c0_i32_0 = arith.constant 0 : i32
    %c0_i32_1 = arith.constant 0 : i32
    return %c0_i32, %c0_i32_0 : i32, i32
  }
  func.func @transform_21(%arg0: i32) -> (i32, i32, i32) {
    %c0_i32 = arith.constant 0 : i32
    %c0_i32_0 = arith.constant 0 : i32
    %c0_i32_1 = arith.constant 0 : i32
    return %arg0, %c0_i32, %c0_i32_0 : i32, i32, i32
  }
}

</mosaic_0001>

<llo_original>
// kernel: forward.1
$region0: #{forward.1}
  #allocation0 [shape = 'u32[]', space=smem, size = 0x4, offset = 0x4, fixed_abs, tag = 'smem constant byte address 0x4 - core index']
  #allocation1 [shape = 'u32[144,128]{1,0:T(1,128)}', space=vmem, size = 0x12000, scoped, tag = 'internal scratch']
  %s0 = inlined_call_operand.vmem [shape: f32[2,8,32], index: 0, kind: input, shape index: {}]
  %s1 = inlined_call_operand.vmem [shape: bf16[2,64,40], index: 1, kind: input, shape index: {}]
  %s2 = inlined_call_operand.vmem [shape: bf16[64,16], index: 2, kind: input, shape index: {}]
  %s3 = inlined_call_operand.vmem [shape: bf16[8,64], index: 3, kind: input, shape index: {}]
  %s4 = inlined_call_operand.vmem [shape: bf16[2,32,48], index: 4, kind: input, shape index: {}]
  %s5 = inlined_call_operand.vmem [shape: bf16[2,40,8], index: 5, kind: input, shape index: {}]
  %s6 = inlined_call_operand.vmem [shape: bf16[8,32], index: 6, kind: input, shape index: {}]
  %s7 = inlined_call_operand.vmem [shape: f32[2,1,32], index: 7, kind: input, shape index: {}]
  %s8 = inlined_call_operand.vmem [shape: bf16[2,32,32], index: 8, kind: input, shape index: {}]
  %s9 = inlined_call_operand.vmem [shape: f32[2,3,32], index: 9, kind: input, shape index: {}]
  %s10 = inlined_call_operand.vmem [shape: bf16[2,32,96], index: 10, kind: input, shape index: {}]
  %s11 = inlined_call_operand.vmem [shape: f32[2,1,96], index: 11, kind: input, shape index: {}]
  %s12 = inlined_call_operand.vmem [shape: bf16[2,32,32], index: 12, kind: input, shape index: {}]
  %s13 = inlined_call_operand.vmem [shape: f32[2,1,32], index: 13, kind: input, shape index: {}]
  %s14 = inlined_call_operand.vmem [shape: bf16[2,32,64], index: 14, kind: input, shape index: {}]
  %s15 = inlined_call_operand.vmem [shape: f32[2,1,64], index: 15, kind: input, shape index: {}]
  %s16 = inlined_call_operand.vmem [shape: bf16[2,64,32], index: 16, kind: input, shape index: {}]
  %s17 = inlined_call_operand.vmem [shape: f32[2,1,32], index: 17, kind: input, shape index: {}]
  %s18 = inlined_call_operand.vmem [shape: f32[2,4,32], index: 18, kind: input, shape index: {}]
  %s19 = inlined_call_operand.vmem [shape: bf16[32,8], index: 19, kind: input, shape index: {}]
  %s20 = inlined_call_operand.vmem [shape: f32[1,8], index: 20, kind: input, shape index: {}]
  %s21 = inlined_call_operand.hbm [shape: f32[2,1,8], index: 21, kind: output, shape index: {}]
  %s22 = sld [smem:[#allocation0]]
  $region117: #{forward.1} parent=0
    _
  %s24 = ssub.s32 1, %s22
  %s25 = scalar_select 0, %s24, %s22
  $region1: #{forward.1} parent=0
    #allocation2 [shape = 'u8[1024]{0}', space=vmem, size = 0x400, scoped, tag = 'output window, operand 0']
    #allocation3 [shape = 's32[2]{0}', space=sflag, size = 0x8, scoped, tag = 'scoped memory for forward.1']
    %26 = vsyncpa [#allocation3], 0
    %s27 = scalar_lea.sflag [#allocation3], 1
    %28 = vsyncpa %s27, 0
    loop: start=0, step=1, limit=4
    $region2: #{forward.1} parent=1 // loop_pre_header
      _
    $region3: #{forward.1} parent=1 // loop_header
      %s30 = sphi 0, %s34
      %p31 = scmp.ge.s32.totalorder %s30, 4
      %s40 = sphi 0, %s42
      %s43 = sphi 0, %s40
      %s44 = sphi 0, %s43
      %s60 = sphi 0, %s44
      %s66 = sphi 0, %s68
      %s69 = sphi 0, %s66
      %s70 = sphi 0, %s69
      %s86 = sphi 0, %s70
      %s90 = sphi 0, %s90
      %s92 = sphi 0, %s90
      %s93 = sphi 0, %s92
      %s107 = sphi 0, %s93
      %s111 = sphi 0, %s111
      %s113 = sphi 0, %s111
      %s114 = sphi 0, %s113
      %s128 = sphi 0, %s114
      %s132 = sphi 0, %s132
      %s134 = sphi 0, %s132
      %s135 = sphi 0, %s134
      %s149 = sphi 0, %s135
      %s153 = sphi 0, %s153
      %s155 = sphi 0, %s153
      %s156 = sphi 0, %s155
      %s170 = sphi 0, %s156
      %s174 = sphi 0, %s174
      %s176 = sphi 0, %s174
      %s177 = sphi 0, %s176
      %s191 = sphi 0, %s177
      %s195 = sphi 0, %s195
      %s197 = sphi 0, %s195
      %s198 = sphi 0, %s197
      %s212 = sphi 0, %s198
      %s216 = sphi 0, %s216
      %s218 = sphi 0, %s216
      %s219 = sphi 0, %s218
      %s233 = sphi 0, %s219
      %s237 = sphi 0, %s237
      %s239 = sphi 0, %s237
      %s240 = sphi 0, %s239
      %s254 = sphi 0, %s240
      %s258 = sphi 0, %s258
      %s260 = sphi 0, %s258
      %s261 = sphi 0, %s260
      %s275 = sphi 0, %s261
      %s279 = sphi 0, %s279
      %s281 = sphi 0, %s279
      %s282 = sphi 0, %s281
      %s296 = sphi 0, %s282
      %s300 = sphi 0, %s300
      %s302 = sphi 0, %s300
      %s303 = sphi 0, %s302
      %s317 = sphi 0, %s303
      %s321 = sphi 0, %s321
      %s323 = sphi 0, %s321
      %s324 = sphi 0, %s323
      %s338 = sphi 0, %s324
      %s342 = sphi 0, %s342
      %s344 = sphi 0, %s342
      %s345 = sphi 0, %s344
      %s359 = sphi 0, %s345
      %s363 = sphi 0, %s363
      %s365 = sphi 0, %s363
      %s366 = sphi 0, %s365
      %s380 = sphi 0, %s366
      %s384 = sphi 0, %s384
      %s386 = sphi 0, %s384
      %s387 = sphi 0, %s386
      %s401 = sphi 0, %s387
      %s405 = sphi 0, %s405
      %s407 = sphi 0, %s405
      %s408 = sphi 0, %s407
      %s422 = sphi 0, %s408
      %s426 = sphi 0, %s426
      %s428 = sphi 0, %s426
      %s429 = sphi 0, %s428
      %s443 = sphi 0, %s429
      %s447 = sphi 0, %s447
      %s449 = sphi 0, %s447
      %s450 = sphi 0, %s449
      %s464 = sphi 0, %s450
      %s468 = sphi 0, %s468
      %s470 = sphi 0, %s468
      %s471 = sphi 0, %s470
      %s485 = sphi 0, %s471
      %s491 = sphi 0, %s493
      %s494 = sphi 0, %s491
      %s495 = sphi 0, %s494
      %s511 = sphi 0, %s495
    $region4: #{forward.1} parent=1 // loop_header_branch
      %33 = sbr.rel (%p31) target = $region8
    $region5: #{forward.1} parent=1 // loop_body
      %s35 = ssub.s32 %s30, 1
      %s36 = ssub.s32 %s30, 2
      %s37 = sadd.s32 %s30, 1
      %s38 = ssub.s32 %s30, %s37
      %p39 = scmp.eq.s32.totalorder %s38, 0
      %s41 = sadd.s32 %s40, 1
      %s42 = scalar_select %p39, %s40, %s41
      %p45 = pneg %p39
      %p46 = scmp.eq.s32.totalorder %s30, 1
      %p47 = por %p45, %p46
      %p48 = scmp.ne.s32.totalorder %s40, %s43
      %p49 = scmp.eq.s32.totalorder %s30, 0
      %p50 = por %p48, %p49
      %p51 = scmp.ne.s32.totalorder %s40, %s43
      %p52 = scmp.eq.s32.totalorder %s35, 1
      %p53 = por %p51, %p52
      %p54 = scmp.ne.s32.totalorder %s43, %s44
      %p55 = scmp.eq.s32.totalorder %s35, 0
      %p56 = por %p54, %p55
      %p57 = scmp.ne.s32.totalorder %s43, %s44
      %p58 = scmp.eq.s32.totalorder %s36, 1
      %p59 = por %p57, %p58
      %p61 = scmp.ne.s32.totalorder %s44, %s60
      %p62 = scmp.eq.s32.totalorder %s36, 0
      %p63 = por %p61, %p62
      %s64 = ssub.s32 %s30, %s37
      %p65 = scmp.eq.s32.totalorder %s64, 0
      %s67 = sadd.s32 %s66, 1
      %s68 = scalar_select %p65, %s66, %s67
      %p71 = pneg %p65
      %p72 = scmp.eq.s32.totalorder %s30, 1
      %p73 = por %p71, %p72
      %p74 = scmp.ne.s32.totalorder %s66, %s69
      %p75 = scmp.eq.s32.totalorder %s30, 0
      %p76 = por %p74, %p75
      %p77 = scmp.ne.s32.totalorder %s66, %s69
      %p78 = scmp.eq.s32.totalorder %s35, 1
      %p79 = por %p77, %p78
      %p80 = scmp.ne.s32.totalorder %s69, %s70
      %p81 = scmp.eq.s32.totalorder %s35, 0
      %p82 = por %p80, %p81
      %p83 = scmp.ne.s32.totalorder %s69, %s70
      %p84 = scmp.eq.s32.totalorder %s36, 1
      %p85 = por %p83, %p84
      %p87 = scmp.ne.s32.totalorder %s70, %s86
      %p88 = scmp.eq.s32.totalorder %s36, 0
      %p89 = por %p87, %p88
      %s91 = sadd.s32 %s90, 1
      %p94 = scmp.eq.s32.totalorder %s30, 1
      %p95 = scmp.ne.s32.totalorder %s90, %s92
      %p96 = scmp.eq.s32.totalorder %s30, 0
      %p97 = por %p95, %p96
      %p98 = scmp.ne.s32.totalorder %s90, %s92
      %p99 = scmp.eq.s32.totalorder %s35, 1
      %p100 = por %p98, %p99
      %p101 = scmp.ne.s32.totalorder %s92, %s93
      %p102 = scmp.eq.s32.totalorder %s35, 0
      %p103 = por %p101, %p102
      %p104 = scmp.ne.s32.totalorder %s92, %s93
      %p105 = scmp.eq.s32.totalorder %s36, 1
      %p106 = por %p104, %p105
      %p108 = scmp.ne.s32.totalorder %s93, %s107
      %p109 = scmp.eq.s32.totalorder %s36, 0
      %p110 = por %p108, %p109
      %s112 = sadd.s32 %s111, 1
      %p115 = scmp.eq.s32.totalorder %s30, 1
      %p116 = scmp.ne.s32.totalorder %s111, %s113
      %p117 = scmp.eq.s32.totalorder %s30, 0
      %p118 = por %p116, %p117
      %p119 = scmp.ne.s32.totalorder %s111, %s113
      %p120 = scmp.eq.s32.totalorder %s35, 1
      %p121 = por %p119, %p120
      %p122 = scmp.ne.s32.totalorder %s113, %s114
      %p123 = scmp.eq.s32.totalorder %s35, 0
      %p124 = por %p122, %p123
      %p125 = scmp.ne.s32.totalorder %s113, %s114
      %p126 = scmp.eq.s32.totalorder %s36, 1
      %p127 = por %p125, %p126
      %p129 = scmp.ne.s32.totalorder %s114, %s128
      %p130 = scmp.eq.s32.totalorder %s36, 0
      %p131 = por %p129, %p130
      %s133 = sadd.s32 %s132, 1
      %p136 = scmp.eq.s32.totalorder %s30, 1
      %p137 = scmp.ne.s32.totalorder %s132, %s134
      %p138 = scmp.eq.s32.totalorder %s30, 0
      %p139 = por %p137, %p138
      %p140 = scmp.ne.s32.totalorder %s132, %s134
      %p141 = scmp.eq.s32.totalorder %s35, 1
      %p142 = por %p140, %p141
      %p143 = scmp.ne.s32.totalorder %s134, %s135
      %p144 = scmp.eq.s32.totalorder %s35, 0
      %p145 = por %p143, %p144
      %p146 = scmp.ne.s32.totalorder %s134, %s135
      %p147 = scmp.eq.s32.totalorder %s36, 1
      %p148 = por %p146, %p147
      %p150 = scmp.ne.s32.totalorder %s135, %s149
      %p151 = scmp.eq.s32.totalorder %s36, 0
      %p152 = por %p150, %p151
      %s154 = sadd.s32 %s153, 1
      %p157 = scmp.eq.s32.totalorder %s30, 1
      %p158 = scmp.ne.s32.totalorder %s153, %s155
      %p159 = scmp.eq.s32.totalorder %s30, 0
      %p160 = por %p158, %p159
      %p161 = scmp.ne.s32.totalorder %s153, %s155
      %p162 = scmp.eq.s32.totalorder %s35, 1
      %p163 = por %p161, %p162
      %p164 = scmp.ne.s32.totalorder %s155, %s156
      %p165 = scmp.eq.s32.totalorder %s35, 0
      %p166 = por %p164, %p165
      %p167 = scmp.ne.s32.totalorder %s155, %s156
      %p168 = scmp.eq.s32.totalorder %s36, 1
      %p169 = por %p167, %p168
      %p171 = scmp.ne.s32.totalorder %s156, %s170
      %p172 = scmp.eq.s32.totalorder %s36, 0
      %p173 = por %p171, %p172
      %s175 = sadd.s32 %s174, 1
      %p178 = scmp.eq.s32.totalorder %s30, 1
      %p179 = scmp.ne.s32.totalorder %s174, %s176
      %p180 = scmp.eq.s32.totalorder %s30, 0
      %p181 = por %p179, %p180
      %p182 = scmp.ne.s32.totalorder %s174, %s176
      %p183 = scmp.eq.s32.totalorder %s35, 1
      %p184 = por %p182, %p183
      %p185 = scmp.ne.s32.totalorder %s176, %s177
      %p186 = scmp.eq.s32.totalorder %s35, 0
      %p187 = por %p185, %p186
      %p188 = scmp.ne.s32.totalorder %s176, %s177
      %p189 = scmp.eq.s32.totalorder %s36, 1
      %p190 = por %p188, %p189
      %p192 = scmp.ne.s32.totalorder %s177, %s191
      %p193 = scmp.eq.s32.totalorder %s36, 0
      %p194 = por %p192, %p193
      %s196 = sadd.s32 %s195, 1
      %p199 = scmp.eq.s32.totalorder %s30, 1
      %p200 = scmp.ne.s32.totalorder %s195, %s197
      %p201 = scmp.eq.s32.totalorder %s30, 0
      %p202 = por %p200, %p201
      %p203 = scmp.ne.s32.totalorder %s195, %s197
      %p204 = scmp.eq.s32.totalorder %s35, 1
      %p205 = por %p203, %p204
      %p206 = scmp.ne.s32.totalorder %s197, %s198
      %p207 = scmp.eq.s32.totalorder %s35, 0
      %p208 = por %p206, %p207
      %p209 = scmp.ne.s32.totalorder %s197, %s198
      %p210 = scmp.eq.s32.totalorder %s36, 1
      %p211 = por %p209, %p210
      %p213 = scmp.ne.s32.totalorder %s198, %s212
      %p214 = scmp.eq.s32.totalorder %s36, 0
      %p215 = por %p213, %p214
      %s217 = sadd.s32 %s216, 1
      %p220 = scmp.eq.s32.totalorder %s30, 1
      %p221 = scmp.ne.s32.totalorder %s216, %s218
      %p222 = scmp.eq.s32.totalorder %s30, 0
      %p223 = por %p221, %p222
      %p224 = scmp.ne.s32.totalorder %s216, %s218
      %p225 = scmp.eq.s32.totalorder %s35, 1
      %p226 = por %p224, %p225
      %p227 = scmp.ne.s32.totalorder %s218, %s219
      %p228 = scmp.eq.s32.totalorder %s35, 0
      %p229 = por %p227, %p228
      %p230 = scmp.ne.s32.totalorder %s218, %s219
      %p231 = scmp.eq.s32.totalorder %s36, 1
      %p232 = por %p230, %p231
      %p234 = scmp.ne.s32.totalorder %s219, %s233
      %p235 = scmp.eq.s32.totalorder %s36, 0
      %p236 = por %p234, %p235
      %s238 = sadd.s32 %s237, 1
      %p241 = scmp.eq.s32.totalorder %s30, 1
      %p242 = scmp.ne.s32.totalorder %s237, %s239
      %p243 = scmp.eq.s32.totalorder %s30, 0
      %p244 = por %p242, %p243
      %p245 = scmp.ne.s32.totalorder %s237, %s239
      %p246 = scmp.eq.s32.totalorder %s35, 1
      %p247 = por %p245, %p246
      %p248 = scmp.ne.s32.totalorder %s239, %s240
      %p249 = scmp.eq.s32.totalorder %s35, 0
      %p250 = por %p248, %p249
      %p251 = scmp.ne.s32.totalorder %s239, %s240
      %p252 = scmp.eq.s32.totalorder %s36, 1
      %p253 = por %p251, %p252
      %p255 = scmp.ne.s32.totalorder %s240, %s254
      %p256 = scmp.eq.s32.totalorder %s36, 0
      %p257 = por %p255, %p256
      %s259 = sadd.s32 %s258, 1
      %p262 = scmp.eq.s32.totalorder %s30, 1
      %p263 = scmp.ne.s32.totalorder %s258, %s260
      %p264 = scmp.eq.s32.totalorder %s30, 0
      %p265 = por %p263, %p264
      %p266 = scmp.ne.s32.totalorder %s258, %s260
      %p267 = scmp.eq.s32.totalorder %s35, 1
      %p268 = por %p266, %p267
      %p269 = scmp.ne.s32.totalorder %s260, %s261
      %p270 = scmp.eq.s32.totalorder %s35, 0
      %p271 = por %p269, %p270
      %p272 = scmp.ne.s32.totalorder %s260, %s261
      %p273 = scmp.eq.s32.totalorder %s36, 1
      %p274 = por %p272, %p273
      %p276 = scmp.ne.s32.totalorder %s261, %s275
      %p277 = scmp.eq.s32.totalorder %s36, 0
      %p278 = por %p276, %p277
      %s280 = sadd.s32 %s279, 1
      %p283 = scmp.eq.s32.totalorder %s30, 1
      %p284 = scmp.ne.s32.totalorder %s279, %s281
      %p285 = scmp.eq.s32.totalorder %s30, 0
      %p286 = por %p284, %p285
      %p287 = scmp.ne.s32.totalorder %s279, %s281
      %p288 = scmp.eq.s32.totalorder %s35, 1
      %p289 = por %p287, %p288
      %p290 = scmp.ne.s32.totalorder %s281, %s282
      %p291 = scmp.eq.s32.totalorder %s35, 0
      %p292 = por %p290, %p291
      %p293 = scmp.ne.s32.totalorder %s281, %s282
      %p294 = scmp.eq.s32.totalorder %s36, 1
      %p295 = por %p293, %p294
      %p297 = scmp.ne.s32.totalorder %s282, %s296
      %p298 = scmp.eq.s32.totalorder %s36, 0
      %p299 = por %p297, %p298
      %s301 = sadd.s32 %s300, 1
      %p304 = scmp.eq.s32.totalorder %s30, 1
      %p305 = scmp.ne.s32.totalorder %s300, %s302
      %p306 = scmp.eq.s32.totalorder %s30, 0
      %p307 = por %p305, %p306
      %p308 = scmp.ne.s32.totalorder %s300, %s302
      %p309 = scmp.eq.s32.totalorder %s35, 1
      %p310 = por %p308, %p309
      %p311 = scmp.ne.s32.totalorder %s302, %s303
      %p312 = scmp.eq.s32.totalorder %s35, 0
      %p313 = por %p311, %p312
      %p314 = scmp.ne.s32.totalorder %s302, %s303
      %p315 = scmp.eq.s32.totalorder %s36, 1
      %p316 = por %p314, %p315
      %p318 = scmp.ne.s32.totalorder %s303, %s317
      %p319 = scmp.eq.s32.totalorder %s36, 0
      %p320 = por %p318, %p319
      %s322 = sadd.s32 %s321, 1
      %p325 = scmp.eq.s32.totalorder %s30, 1
      %p326 = scmp.ne.s32.totalorder %s321, %s323
      %p327 = scmp.eq.s32.totalorder %s30, 0
      %p328 = por %p326, %p327
      %p329 = scmp.ne.s32.totalorder %s321, %s323
      %p330 = scmp.eq.s32.totalorder %s35, 1
      %p331 = por %p329, %p330
      %p332 = scmp.ne.s32.totalorder %s323, %s324
      %p333 = scmp.eq.s32.totalorder %s35, 0
      %p334 = por %p332, %p333
      %p335 = scmp.ne.s32.totalorder %s323, %s324
      %p336 = scmp.eq.s32.totalorder %s36, 1
      %p337 = por %p335, %p336
      %p339 = scmp.ne.s32.totalorder %s324, %s338
      %p340 = scmp.eq.s32.totalorder %s36, 0
      %p341 = por %p339, %p340
      %s343 = sadd.s32 %s342, 1
      %p346 = scmp.eq.s32.totalorder %s30, 1
      %p347 = scmp.ne.s32.totalorder %s342, %s344
      %p348 = scmp.eq.s32.totalorder %s30, 0
      %p349 = por %p347, %p348
      %p350 = scmp.ne.s32.totalorder %s342, %s344
      %p351 = scmp.eq.s32.totalorder %s35, 1
      %p352 = por %p350, %p351
      %p353 = scmp.ne.s32.totalorder %s344, %s345
      %p354 = scmp.eq.s32.totalorder %s35, 0
      %p355 = por %p353, %p354
      %p356 = scmp.ne.s32.totalorder %s344, %s345
      %p357 = scmp.eq.s32.totalorder %s36, 1
      %p358 = por %p356, %p357
      %p360 = scmp.ne.s32.totalorder %s345, %s359
      %p361 = scmp.eq.s32.totalorder %s36, 0
      %p362 = por %p360, %p361
      %s364 = sadd.s32 %s363, 1
      %p367 = scmp.eq.s32.totalorder %s30, 1
      %p368 = scmp.ne.s32.totalorder %s363, %s365
      %p369 = scmp.eq.s32.totalorder %s30, 0
      %p370 = por %p368, %p369
      %p371 = scmp.ne.s32.totalorder %s363, %s365
      %p372 = scmp.eq.s32.totalorder %s35, 1
      %p373 = por %p371, %p372
      %p374 = scmp.ne.s32.totalorder %s365, %s366
      %p375 = scmp.eq.s32.totalorder %s35, 0
      %p376 = por %p374, %p375
      %p377 = scmp.ne.s32.totalorder %s365, %s366
      %p378 = scmp.eq.s32.totalorder %s36, 1
      %p379 = por %p377, %p378
      %p381 = scmp.ne.s32.totalorder %s366, %s380
      %p382 = scmp.eq.s32.totalorder %s36, 0
      %p383 = por %p381, %p382
      %s385 = sadd.s32 %s384, 1
      %p388 = scmp.eq.s32.totalorder %s30, 1
      %p389 = scmp.ne.s32.totalorder %s384, %s386
      %p390 = scmp.eq.s32.totalorder %s30, 0
      %p391 = por %p389, %p390
      %p392 = scmp.ne.s32.totalorder %s384, %s386
      %p393 = scmp.eq.s32.totalorder %s35, 1
      %p394 = por %p392, %p393
      %p395 = scmp.ne.s32.totalorder %s386, %s387
      %p396 = scmp.eq.s32.totalorder %s35, 0
      %p397 = por %p395, %p396
      %p398 = scmp.ne.s32.totalorder %s386, %s387
      %p399 = scmp.eq.s32.totalorder %s36, 1
      %p400 = por %p398, %p399
      %p402 = scmp.ne.s32.totalorder %s387, %s401
      %p403 = scmp.eq.s32.totalorder %s36, 0
      %p404 = por %p402, %p403
      %s406 = sadd.s32 %s405, 1
      %p409 = scmp.eq.s32.totalorder %s30, 1
      %p410 = scmp.ne.s32.totalorder %s405, %s407
      %p411 = scmp.eq.s32.totalorder %s30, 0
      %p412 = por %p410, %p411
      %p413 = scmp.ne.s32.totalorder %s405, %s407
      %p414 = scmp.eq.s32.totalorder %s35, 1
      %p415 = por %p413, %p414
      %p416 = scmp.ne.s32.totalorder %s407, %s408
      %p417 = scmp.eq.s32.totalorder %s35, 0
      %p418 = por %p416, %p417
      %p419 = scmp.ne.s32.totalorder %s407, %s408
      %p420 = scmp.eq.s32.totalorder %s36, 1
      %p421 = por %p419, %p420
      %p423 = scmp.ne.s32.totalorder %s408, %s422
      %p424 = scmp.eq.s32.totalorder %s36, 0
      %p425 = por %p423, %p424
      %s427 = sadd.s32 %s426, 1
      %p430 = scmp.eq.s32.totalorder %s30, 1
      %p431 = scmp.ne.s32.totalorder %s426, %s428
      %p432 = scmp.eq.s32.totalorder %s30, 0
      %p433 = por %p431, %p432
      %p434 = scmp.ne.s32.totalorder %s426, %s428
      %p435 = scmp.eq.s32.totalorder %s35, 1
      %p436 = por %p434, %p435
      %p437 = scmp.ne.s32.totalorder %s428, %s429
      %p438 = scmp.eq.s32.totalorder %s35, 0
      %p439 = por %p437, %p438
      %p440 = scmp.ne.s32.totalorder %s428, %s429
      %p441 = scmp.eq.s32.totalorder %s36, 1
      %p442 = por %p440, %p441
      %p444 = scmp.ne.s32.totalorder %s429, %s443
      %p445 = scmp.eq.s32.totalorder %s36, 0
      %p446 = por %p444, %p445
      %s448 = sadd.s32 %s447, 1
      %p451 = scmp.eq.s32.totalorder %s30, 1
      %p452 = scmp.ne.s32.totalorder %s447, %s449
      %p453 = scmp.eq.s32.totalorder %s30, 0
      %p454 = por %p452, %p453
      %p455 = scmp.ne.s32.totalorder %s447, %s449
      %p456 = scmp.eq.s32.totalorder %s35, 1
      %p457 = por %p455, %p456
      %p458 = scmp.ne.s32.totalorder %s449, %s450
      %p459 = scmp.eq.s32.totalorder %s35, 0
      %p460 = por %p458, %p459
      %p461 = scmp.ne.s32.totalorder %s449, %s450
      %p462 = scmp.eq.s32.totalorder %s36, 1
      %p463 = por %p461, %p462
      %p465 = scmp.ne.s32.totalorder %s450, %s464
      %p466 = scmp.eq.s32.totalorder %s36, 0
      %p467 = por %p465, %p466
      %s469 = sadd.s32 %s468, 1
      %p472 = scmp.eq.s32.totalorder %s30, 1
      %p473 = scmp.ne.s32.totalorder %s468, %s470
      %p474 = scmp.eq.s32.totalorder %s30, 0
      %p475 = por %p473, %p474
      %p476 = scmp.ne.s32.totalorder %s468, %s470
      %p477 = scmp.eq.s32.totalorder %s35, 1
      %p478 = por %p476, %p477
      %p479 = scmp.ne.s32.totalorder %s470, %s471
      %p480 = scmp.eq.s32.totalorder %s35, 0
      %p481 = por %p479, %p480
      %p482 = scmp.ne.s32.totalorder %s470, %s471
      %p483 = scmp.eq.s32.totalorder %s36, 1
      %p484 = por %p482, %p483
      %p486 = scmp.ne.s32.totalorder %s471, %s485
      %p487 = scmp.eq.s32.totalorder %s36, 0
      %p488 = por %p486, %p487
      %s489 = ssub.s32 %s30, %s37
      %p490 = scmp.eq.s32.totalorder %s489, 0
      %s492 = sadd.s32 %s491, 1
      %s493 = scalar_select %p490, %s491, %s492
      %p496 = pneg %p490
      %p497 = scmp.eq.s32.totalorder %s30, 1
      %p498 = por %p496, %p497
      %p499 = scmp.ne.s32.totalorder %s491, %s494
      %p500 = scmp.eq.s32.totalorder %s30, 0
      %p501 = por %p499, %p500
      %p502 = scmp.ne.s32.totalorder %s491, %s494
      %p503 = scmp.eq.s32.totalorder %s35, 1
      %p504 = por %p502, %p503
      %p505 = scmp.ne.s32.totalorder %s494, %s495
      %p506 = scmp.eq.s32.totalorder %s35, 0
      %p507 = por %p505, %p506
      %p508 = scmp.ne.s32.totalorder %s494, %s495
      %p509 = scmp.eq.s32.totalorder %s36, 1
      %p510 = por %p508, %p509
      %p512 = scmp.ne.s32.totalorder %s495, %s511
      %p513 = scmp.eq.s32.totalorder %s36, 0
      %p514 = por %p512, %p513
      %p515 = scmp.le.s32.totalorder 1, %s30
      %p516 = scmp.lt.s32.totalorder %s30, 3
      %p517 = pnand %p515, %p516
      %p518 = pneg %p517
      // Predicated region
      $region9: #{forward.1} parent=5 // pred_check
        _
      $region10: #{forward.1} parent=5 // pred_check_branch
        %520 = sbr.rel (%p517) target = $region12
      $region11: #{forward.1} parent=5 // pred_region
        %s521 = ssub.s32 %s30, 1
        // Predicated region
        $region13: #{forward.1} parent=11 // pred_check
          %p522 = pneg %p103
        $region14: #{forward.1} parent=11 // pred_check_branch
          %524 = sbr.rel (%p522) target = $region16
        $region15: #{forward.1} parent=11 // pred_region
          _
        $region16: #{forward.1} parent=11 // pred_fallthru
          _
        // Predicated region
        $region17: #{forward.1} parent=11 // pred_check
          %p525 = pneg %p124
        $region18: #{forward.1} parent=11 // pred_check_branch
          %527 = sbr.rel (%p525) target = $region20
        $region19: #{forward.1} parent=11 // pred_region
          _
        $region20: #{forward.1} parent=11 // pred_fallthru
          _
        // Predicated region
        $region21: #{forward.1} parent=11 // pred_check
          %p528 = pneg %p145
        $region22: #{forward.1} parent=11 // pred_check_branch
          %530 = sbr.rel (%p528) target = $region24
        $region23: #{forward.1} parent=11 // pred_region
          _
        $region24: #{forward.1} parent=11 // pred_fallthru
          _
        // Predicated region
        $region25: #{forward.1} parent=11 // pred_check
          %p531 = pneg %p166
        $region26: #{forward.1} parent=11 // pred_check_branch
          %533 = sbr.rel (%p531) target = $region28
        $region27: #{forward.1} parent=11 // pred_region
          _
        $region28: #{forward.1} parent=11 // pred_fallthru
          _
        // Predicated region
        $region29: #{forward.1} parent=11 // pred_check
          %p534 = pneg %p187
        $region30: #{forward.1} parent=11 // pred_check_branch
          %536 = sbr.rel (%p534) target = $region32
        $region31: #{forward.1} parent=11 // pred_region
          _
        $region32: #{forward.1} parent=11 // pred_fallthru
          _
        // Predicated region
        $region33: #{forward.1} parent=11 // pred_check
          %p537 = pneg %p208
        $region34: #{forward.1} parent=11 // pred_check_branch
          %539 = sbr.rel (%p537) target = $region36
        $region35: #{forward.1} parent=11 // pred_region
          _
        $region36: #{forward.1} parent=11 // pred_fallthru
          _
        // Predicated region
        $region37: #{forward.1} parent=11 // pred_check
          %p540 = pneg %p229
        $region38: #{forward.1} parent=11 // pred_check_branch
          %542 = sbr.rel (%p540) target = $region40
        $region39: #{forward.1} parent=11 // pred_region
          _
        $region40: #{forward.1} parent=11 // pred_fallthru
          _
        // Predicated region
        $region41: #{forward.1} parent=11 // pred_check
          %p543 = pneg %p250
        $region42: #{forward.1} parent=11 // pred_check_branch
          %545 = sbr.rel (%p543) target = $region44
        $region43: #{forward.1} parent=11 // pred_region
          _
        $region44: #{forward.1} parent=11 // pred_fallthru
          _
        // Predicated region
        $region45: #{forward.1} parent=11 // pred_check
          %p546 = pneg %p271
        $region46: #{forward.1} parent=11 // pred_check_branch
          %548 = sbr.rel (%p546) target = $region48
        $region47: #{forward.1} parent=11 // pred_region
          _
        $region48: #{forward.1} parent=11 // pred_fallthru
          _
        // Predicated region
        $region49: #{forward.1} parent=11 // pred_check
          %p549 = pneg %p292
        $region50: #{forward.1} parent=11 // pred_check_branch
          %551 = sbr.rel (%p549) target = $region52
        $region51: #{forward.1} parent=11 // pred_region
          _
        $region52: #{forward.1} parent=11 // pred_fallthru
          _
        // Predicated region
        $region53: #{forward.1} parent=11 // pred_check
          %p552 = pneg %p313
        $region54: #{forward.1} parent=11 // pred_check_branch
          %554 = sbr.rel (%p552) target = $region56
        $region55: #{forward.1} parent=11 // pred_region
          _
        $region56: #{forward.1} parent=11 // pred_fallthru
          _
        // Predicated region
        $region57: #{forward.1} parent=11 // pred_check
          %p555 = pneg %p334
        $region58: #{forward.1} parent=11 // pred_check_branch
          %557 = sbr.rel (%p555) target = $region60
        $region59: #{forward.1} parent=11 // pred_region
          _
        $region60: #{forward.1} parent=11 // pred_fallthru
          _
        // Predicated region
        $region61: #{forward.1} parent=11 // pred_check
          %p558 = pneg %p355
        $region62: #{forward.1} parent=11 // pred_check_branch
          %560 = sbr.rel (%p558) target = $region64
        $region63: #{forward.1} parent=11 // pred_region
          _
        $region64: #{forward.1} parent=11 // pred_fallthru
          _
        // Predicated region
        $region65: #{forward.1} parent=11 // pred_check
          %p561 = pneg %p376
        $region66: #{forward.1} parent=11 // pred_check_branch
          %563 = sbr.rel (%p561) target = $region68
        $region67: #{forward.1} parent=11 // pred_region
          _
        $region68: #{forward.1} parent=11 // pred_fallthru
          _
        // Predicated region
        $region69: #{forward.1} parent=11 // pred_check
          %p564 = pneg %p397
        $region70: #{forward.1} parent=11 // pred_check_branch
          %566 = sbr.rel (%p564) target = $region72
        $region71: #{forward.1} parent=11 // pred_region
          _
        $region72: #{forward.1} parent=11 // pred_fallthru
          _
        // Predicated region
        $region73: #{forward.1} parent=11 // pred_check
          %p567 = pneg %p418
        $region74: #{forward.1} parent=11 // pred_check_branch
          %569 = sbr.rel (%p567) target = $region76
        $region75: #{forward.1} parent=11 // pred_region
          _
        $region76: #{forward.1} parent=11 // pred_fallthru
          _
        // Predicated region
        $region77: #{forward.1} parent=11 // pred_check
          %p570 = pneg %p439
        $region78: #{forward.1} parent=11 // pred_check_branch
          %572 = sbr.rel (%p570) target = $region80
        $region79: #{forward.1} parent=11 // pred_region
          _
        $region80: #{forward.1} parent=11 // pred_fallthru
          _
        // Predicated region
        $region81: #{forward.1} parent=11 // pred_check
          %p573 = pneg %p460
        $region82: #{forward.1} parent=11 // pred_check_branch
          %575 = sbr.rel (%p573) target = $region84
        $region83: #{forward.1} parent=11 // pred_region
          _
        $region84: #{forward.1} parent=11 // pred_fallthru
          _
        // Predicated region
        $region85: #{forward.1} parent=11 // pred_check
          %p576 = pneg %p481
        $region86: #{forward.1} parent=11 // pred_check_branch
          %578 = sbr.rel (%p576) target = $region88
        $region87: #{forward.1} parent=11 // pred_region
          _
        $region88: #{forward.1} parent=11 // pred_fallthru
          _
      $region12: #{forward.1} parent=5 // pred_fallthru
        _
      %p579 = scmp.lt.s32.totalorder %s30, 2
      // Predicated region
      $region89: #{forward.1} parent=5 // pred_check
        %p580 = pneg %p579
      $region90: #{forward.1} parent=5 // pred_check_branch
        %582 = sbr.rel (%p580) target = $region92
      $region91: #{forward.1} parent=5 // pred_region
        // Predicated region
        $region93: #{forward.1} parent=91 // pred_check
          %p583 = pneg %p50
        $region94: #{forward.1} parent=91 // pred_check_branch
          %585 = sbr.rel (%p583) target = $region96
        $region95: #{forward.1} parent=91 // pred_region
          %p586 = scmp.lt.s32.totalorder %s30, 1
          %s587 = scalar_select %p586, %s30, 1
          %s588 = smul.addr %s587, 8
          %s589 = scalar_lea.vmem %s0, %s588
        $region96: #{forward.1} parent=91 // pred_fallthru
          _
        // Predicated region
        $region97: #{forward.1} parent=91 // pred_check
          %p590 = pneg %p76
        $region98: #{forward.1} parent=91 // pred_check_branch
          %592 = sbr.rel (%p590) target = $region100
        $region99: #{forward.1} parent=91 // pred_region
          %p593 = scmp.lt.s32.totalorder %s30, 1
          %s594 = scalar_select %p593, %s30, 1
          %s595 = smul.addr %s594, 8
          %s596 = smul.addr %s595, 4
          %s597 = scalar_lea.vmem %s1, %s596
        $region100: #{forward.1} parent=91 // pred_fallthru
          _
      $region92: #{forward.1} parent=5 // pred_fallthru
        _
      %p598 = scmp.le.s32.totalorder 1, %s30
      %p599 = scmp.lt.s32.totalorder %s30, 3
      %p600 = pnand %p598, %p599
      %p601 = pneg %p600
      // Predicated region
      $region101: #{forward.1} parent=5 // pred_check
        _
      $region102: #{forward.1} parent=5 // pred_check_branch
        %603 = sbr.rel (%p600) target = $region104
      $region103: #{forward.1} parent=5 // pred_region
        %s604 = ssub.s32 %s30, 1
        %p605 = scmp.lt.s32.totalorder %s35, 1
        %s606 = scalar_select %p605, %s35, 1
        %s607 = smul.addr %s606, 8
        %s608 = scalar_lea.vmem %s0, %s607
        %p609 = pneg %p56
        %p610 = pneg %p53
        %p611 = scmp.lt.s32.totalorder %s35, 1
        %s612 = scalar_select %p611, %s35, 1
        %s613 = smul.addr %s612, 8
        %s614 = smul.addr %s613, 4
        %s615 = scalar_lea.vmem %s1, %s614
        %p616 = pneg %p82
        %p617 = pneg %p79
        %p618 = pneg %p103
        %p619 = pneg %p100
        %p620 = pneg %p124
        %p621 = pneg %p121
        %p622 = pneg %p145
        %p623 = pneg %p142
        %p624 = pneg %p166
        %p625 = pneg %p163
        %p626 = pneg %p187
        %p627 = pneg %p184
        %p628 = pneg %p208
        %p629 = pneg %p205
        %p630 = pneg %p229
        %p631 = pneg %p226
        %p632 = pneg %p250
        %p633 = pneg %p247
        %p634 = pneg %p271
        %p635 = pneg %p268
        %p636 = pneg %p292
        %p637 = pneg %p289
        %p638 = pneg %p313
        %p639 = pneg %p310
        %p640 = pneg %p334
        %p641 = pneg %p331
        %p642 = pneg %p355
        %p643 = pneg %p352
        %p644 = pneg %p376
        %p645 = pneg %p373
        %p646 = pneg %p397
        %p647 = pneg %p394
        %p648 = pneg %p418
        %p649 = pneg %p415
        %p650 = pneg %p439
        %p651 = pneg %p436
        %p652 = pneg %p460
        %p653 = pneg %p457
        %p654 = pneg %p481
        %p655 = pneg %p478
        %p656 = pneg %p507
        %p657 = pneg %p504
        %s658 = sand.u32 %s494, 1
        %s659 = scalar_lea.sflag [#allocation3], %s658
        %s660 = sand.u32 %s494, 1
        %s661 = scalar_lea.vmem [#allocation2], %s660
        %p662 = scmp.lt.s32.totalorder %s35, 1
        %s663 = scalar_select %p662, %s35, 1
        %s664 = smul.addr %s663, 8
        %s665 = scalar_lea.vmem %s0, %s664
        %p666 = scmp.lt.s32.totalorder %s35, 1
        %s667 = scalar_select %p666, %s35, 1
        %s668 = smul.addr %s667, 8
        %s669 = smul.addr %s668, 4
        %s670 = scalar_lea.vmem %s1, %s669
        %v672 = vld [vmem:[%s665] sm:$0xff]
        %v673 = vld [vmem:[%s670] sm:$0xf]
        %v674 = vld [vmem:[%s670 + $0x4] sm:$0xf]
        %v675 = vld [vmem:[%s670 + $0x8] sm:$0xf]
        %v676 = vld [vmem:[%s670 + $0xc] sm:$0xf]
        %v677 = vld [vmem:[%s670 + $0x10] sm:$0xf]
        %v678 = vld [vmem:[%s670 + $0x14] sm:$0xf]
        %v679 = vld [vmem:[%s670 + $0x18] sm:$0xf]
        %v680 = vld [vmem:[%s670 + $0x1c] sm:$0xf]
        %v681 = vld [vmem:[%s2] sm:$0xf]
        %v682 = vld [vmem:[%s2 + $0x4] sm:$0xf]
        %v683 = vld [vmem:[%s2 + $0x8] sm:$0xf]
        %v684 = vld [vmem:[%s2 + $0xc] sm:$0xf]
        %v685 = vld [vmem:[%s2 + $0x10] sm:$0xf]
        %v686 = vld [vmem:[%s2 + $0x14] sm:$0xf]
        %v687 = vld [vmem:[%s2 + $0x18] sm:$0xf]
        %v688 = vld [vmem:[%s2 + $0x1c] sm:$0xf]
        %v689 = vld [vmem:[%s3] sm:$0xf]
        %v690 = vld [vmem:[%s6] sm:$0xf]
        %v691 = vld [vmem:[%s4] sm:$0xf]
        %v692 = vld [vmem:[%s4 + $0x4] sm:$0xf]
        %v693 = vld [vmem:[%s4 + $0x8] sm:$0xf]
        %v694 = vld [vmem:[%s4 + $0xc] sm:$0xf]
        %v695 = vpack.c.bf16 %v672, %v672
        %v700 = vunpack.c.l.b16 %v691
        %v701 = vunpack.c.l.b16 %v692
        %v702 = vunpack.c.l.b16 %v693
        %v703 = vunpack.c.l.b16 %v694
        %v704 = vpack.c.b16 %v701, %v700
        %v705 = vpack.c.b16 %v703, %v702
        %vm708 = vcmask 261120
        %v710 = vsel %vm708, %v695, 0
        %712 = vmatprep.subr.bf16.mxu0 0
        %713 = vmatpush1.bf16.msra.mxu0 %v704
        %714 = vmatprep.subr.bf16.mxu0 0
        %715 = vmatpush1.bf16.msra.mxu0 %v705
        %716 = vmatprep.subr.bf16.mxu0 0
        %717 = vmatpush1.bf16.msra.mxu0 0
        %718 = vmatprep.subr.bf16.mxu0 0
        %719 = vmatpush1.bf16.msra.mxu0 0
        %720 = vmatprep.subr.bf16.mxu0 0
        %721 = vmatpush1.bf16.msra.mxu0 0
        %722 = vmatprep.subr.bf16.mxu0 0
        %723 = vmatpush1.bf16.msra.mxu0 0
        %724 = vmatprep.subr.bf16.mxu0 0
        %725 = vmatpush1.bf16.msra.mxu0 0
        %726 = vmatprep.subr.bf16.mxu0 0
        %727 = vmatpush1.bf16.msra.mxu0 0
        %728 = vmatprep.subr.bf16.mxu0 0
        %729 = vmatpush1.bf16.msra.mxu0 0
        %730 = vmatprep.subr.bf16.mxu0 0
        %731 = vmatpush1.bf16.msra.mxu0 0
        %732 = vmatprep.subr.bf16.mxu0 0
        %733 = vmatpush1.bf16.msra.mxu0 0
        %734 = vmatprep.subr.bf16.mxu0 0
        %735 = vmatpush1.bf16.msra.mxu0 0
        %736 = vmatprep.subr.bf16.mxu0 0
        %737 = vmatpush1.bf16.msra.mxu0 0
        %738 = vmatprep.subr.bf16.mxu0 0
        %739 = vmatpush1.bf16.msra.mxu0 0
        %740 = vmatprep.subr.bf16.mxu0 0
        %741 = vmatpush1.bf16.msra.mxu0 0
        %742 = vmatprep.subr.bf16.mxu0 0
        %743 = vmatpush1.bf16.msra.mxu0 0
        %744 = vmatprep.mubr.bf16.mxu0 0
        %745 = vmatmul.mubr.bf16.gmra.mrb[0].mxu0 %v710
        %v746 = vpop.f32.mrb[0].mxu0
        %v747 = vadd.f32 0.0, %v746
        %v748 = vpop.f32.mrb[0].mxu0
        %v749 = vpop.f32.mrb[0].mxu0
        %v750 = vpop.f32.mrb[0].mxu0
        %751 = vdwg.mxu0
        %753 = vrot.lane.b32.xlu0 %v747, 8
        %v754 = vpop.permute.xlu0 %753
        %v756 = vld [vmem:[%s5] sm:$0xf]
        %v757 = vld [vmem:[%s5 + $0x4] sm:$0xf]
        %v758 = vld [vmem:[%s5 + $0x8] sm:$0xf]
        %v759 = vld [vmem:[%s5 + $0xc] sm:$0xf]
        %v760 = vld [vmem:[%s5 + $0x10] sm:$0xf]
        %v761 = vpack.c.bf16 %v754, %v747
        %v770 = vunpack.c.l.b16 %v681
        %v771 = vunpack.c.l.b16 %v682
        %v772 = vunpack.c.l.b16 %v683
        %v773 = vunpack.c.l.b16 %v684
        %v774 = vunpack.c.l.b16 %v685
        %v775 = vunpack.c.l.b16 %v686
        %v776 = vunpack.c.l.b16 %v687
        %v777 = vunpack.c.l.b16 %v688
        %v778 = vpack.c.b16 %v771, %v770
        %v779 = vpack.c.b16 %v773, %v772
        %v780 = vpack.c.b16 %v775, %v774
        %v781 = vpack.c.b16 %v777, %v776
        %783 = vrot.lane.b32.xlu0 %v761, 88
        %v784 = vpop.permute.xlu0 %783
        %vm786 = vcmask 130048
        %v788 = vsel %vm786, %v778, 0
        %v791 = vsel %vm786, %v779, 0
        %v794 = vsel %vm786, %v780, 0
        %v797 = vsel %vm786, %v781, 0
        %799 = vmatprep.subr.bf16.mxu0 0
        %800 = vmatpush1.bf16.msra.mxu0 %v784
        %801 = vmatprep.subr.bf16.mxu0 0
        %802 = vmatpush1.bf16.msra.mxu0 0
        %803 = vmatprep.subr.bf16.mxu0 0
        %804 = vmatpush1.bf16.msra.mxu0 0
        %805 = vmatprep.subr.bf16.mxu0 0
        %806 = vmatpush1.bf16.msra.mxu0 0
        %807 = vmatprep.subr.bf16.mxu0 0
        %808 = vmatpush1.bf16.msra.mxu0 0
        %809 = vmatprep.subr.bf16.mxu0 0
        %810 = vmatpush1.bf16.msra.mxu0 0
        %811 = vmatprep.subr.bf16.mxu0 0
        %812 = vmatpush1.bf16.msra.mxu0 0
        %813 = vmatprep.subr.bf16.mxu0 0
        %814 = vmatpush1.bf16.msra.mxu0 0
        %815 = vmatprep.subr.bf16.mxu0 0
        %816 = vmatpush1.bf16.msra.mxu0 0
        %817 = vmatprep.subr.bf16.mxu0 0
        %818 = vmatpush1.bf16.msra.mxu0 0
        %819 = vmatprep.subr.bf16.mxu0 0
        %820 = vmatpush1.bf16.msra.mxu0 0
        %821 = vmatprep.subr.bf16.mxu0 0
        %822 = vmatpush1.bf16.msra.mxu0 0
        %823 = vmatprep.subr.bf16.mxu0 0
        %824 = vmatpush1.bf16.msra.mxu0 0
        %825 = vmatprep.subr.bf16.mxu0 0
        %826 = vmatpush1.bf16.msra.mxu0 0
        %827 = vmatprep.subr.bf16.mxu0 0
        %828 = vmatpush1.bf16.msra.mxu0 0
        %829 = vmatprep.subr.bf16.mxu0 0
        %830 = vmatpush1.bf16.msra.mxu0 0
        %831 = vmatprep.mubr.bf16.mxu0 0
        %832 = vmatmul.mubr.bf16.gmra.mrb[0].mxu0 %v788
        %v833 = vpop.f32.mrb[0].mxu0
        %v834 = vadd.f32 0.0, %v833
        %v835 = vpop.f32.mrb[0].mxu0
        %v836 = vpop.f32.mrb[0].mxu0
        %v837 = vadd.f32 0.0, %v836
        %v838 = vpop.f32.mrb[0].mxu0
        %839 = vmatprep.mubr.bf16.mxu0 0
        %840 = vmatmul.mubr.bf16.gmra.mrb[0].mxu0 %v791
        %v841 = vpop.f32.mrb[0].mxu0
        %v842 = vadd.f32 0.0, %v841
        %v843 = vpop.f32.mrb[0].mxu0
        %v844 = vpop.f32.mrb[0].mxu0
        %v845 = vadd.f32 0.0, %v844
        %v846 = vpop.f32.mrb[0].mxu0
        %847 = vmatprep.mubr.bf16.mxu0 0
        %848 = vmatmul.mubr.bf16.gmra.mrb[0].mxu0 %v794
        %v849 = vpop.f32.mrb[0].mxu0
        %v850 = vadd.f32 0.0, %v849
        %v851 = vpop.f32.mrb[0].mxu0
        %v852 = vpop.f32.mrb[0].mxu0
        %v853 = vadd.f32 0.0, %v852
        %v854 = vpop.f32.mrb[0].mxu0
        %855 = vmatprep.mubr.bf16.mxu0 0
        %856 = vmatmul.mubr.bf16.gmra.mrb[0].mxu0 %v797
        %v857 = vpop.f32.mrb[0].mxu0
        %v858 = vadd.f32 0.0, %v857
        %v859 = vpop.f32.mrb[0].mxu0
        %v860 = vpop.f32.mrb[0].mxu0
        %v861 = vadd.f32 0.0, %v860
        %v862 = vpop.f32.mrb[0].mxu0
        %863 = vdwg.mxu0
        %v872 = vunpack.c.l.b16 %v673
        %v873 = vunpack.c.l.b16 %v674
        %v874 = vunpack.c.l.b16 %v675
        %v875 = vunpack.c.l.b16 %v676
        %v876 = vunpack.c.l.b16 %v677
        %v877 = vunpack.c.l.b16 %v678
        %v878 = vunpack.c.l.b16 %v679
        %v879 = vunpack.c.l.b16 %v680
        %v880 = vpack.c.b16 %v873, %v872
        %v881 = vpack.c.b16 %v875, %v874
        %v882 = vpack.c.b16 %v877, %v876
        %v883 = vpack.c.b16 %v879, %v878
        %v889 = vunpack.c.l.b16 %v756
        %v890 = vunpack.c.l.b16 %v757
        %v891 = vunpack.c.l.b16 %v758
        %v892 = vunpack.c.l.b16 %v759
        %v893 = vunpack.c.l.b16 %v760
        %v894 = vpack.c.b16 %v890, %v889
        %v895 = vpack.c.b16 %v892, %v891
        %v896 = vpack.c.b16 %v893, %v893
        %vm899 = vcmask 326656
        %v901 = vsel %vm899, %v880, 0
        %v904 = vsel %vm899, %v881, 0
        %v907 = vsel %vm899, %v882, 0
        %v910 = vsel %vm899, %v883, 0
        %vm912 = vcmask 1043456
        %v914 = vsel %vm912, %v896, 0
        %916 = vmatprep.subr.bf16.mxu0 0
        %917 = vmatpush1.bf16.msra.mxu0 %v894
        %918 = vmatprep.subr.bf16.mxu0 0
        %919 = vmatpush1.bf16.msra.mxu0 %v895
        %920 = vmatprep.subr.bf16.mxu0 0
        %921 = vmatpush1.bf16.msra.mxu0 %v914
        %922 = vmatprep.subr.bf16.mxu0 0
        %923 = vmatpush1.bf16.msra.mxu0 0
        %924 = vmatprep.subr.bf16.mxu0 0
        %925 = vmatpush1.bf16.msra.mxu0 0
        %926 = vmatprep.subr.bf16.mxu0 0
        %927 = vmatpush1.bf16.msra.mxu0 0
        %928 = vmatprep.subr.bf16.mxu0 0
        %929 = vmatpush1.bf16.msra.mxu0 0
        %930 = vmatprep.subr.bf16.mxu0 0
        %931 = vmatpush1.bf16.msra.mxu0 0
        %932 = vmatprep.subr.bf16.mxu0 0
        %933 = vmatpush1.bf16.msra.mxu0 0
        %934 = vmatprep.subr.bf16.mxu0 0
        %935 = vmatpush1.bf16.msra.mxu0 0
        %936 = vmatprep.subr.bf16.mxu0 0
        %937 = vmatpush1.bf16.msra.mxu0 0
        %938 = vmatprep.subr.bf16.mxu0 0
        %939 = vmatpush1.bf16.msra.mxu0 0
        %940 = vmatprep.subr.bf16.mxu0 0
        %941 = vmatpush1.bf16.msra.mxu0 0
        %942 = vmatprep.subr.bf16.mxu0 0
        %943 = vmatpush1.bf16.msra.mxu0 0
        %944 = vmatprep.subr.bf16.mxu0 0
        %945 = vmatpush1.bf16.msra.mxu0 0
        %946 = vmatprep.subr.bf16.mxu0 0
        %947 = vmatpush1.bf16.msra.mxu0 0
        %948 = vmatprep.mubr.bf16.mxu0 0
        %949 = vmatmul.mubr.bf16.gmra.mrb[0].mxu0 %v901
        %v950 = vpop.f32.mrb[0].mxu0
        %v951 = vadd.f32 %v834, %v950
        %v952 = vpop.f32.mrb[0].mxu0
        %v953 = vpop.f32.mrb[0].mxu0
        %v954 = vadd.f32 %v837, %v953
        %v955 = vpop.f32.mrb[0].mxu0
        %956 = vmatprep.mubr.bf16.mxu0 0
        %957 = vmatmul.mubr.bf16.gmra.mrb[0].mxu0 %v904
        %v958 = vpop.f32.mrb[0].mxu0
        %v959 = vadd.f32 %v842, %v958
        %v960 = vpop.f32.mrb[0].mxu0
        %v961 = vpop.f32.mrb[0].mxu0
        %v962 = vadd.f32 %v845, %v961
        %v963 = vpop.f32.mrb[0].mxu0
        %964 = vmatprep.mubr.bf16.mxu0 0
        %965 = vmatmul.mubr.bf16.gmra.mrb[0].mxu0 %v907
        %v966 = vpop.f32.mrb[0].mxu0
        %v967 = vadd.f32 %v850, %v966
        %v968 = vpop.f32.mrb[0].mxu0
        %v969 = vpop.f32.mrb[0].mxu0
        %v970 = vadd.f32 %v853, %v969
        %v971 = vpop.f32.mrb[0].mxu0
        %972 = vmatprep.mubr.bf16.mxu0 0
        %973 = vmatmul.mubr.bf16.gmra.mrb[0].mxu0 %v910
        %v974 = vpop.f32.mrb[0].mxu0
        %v975 = vadd.f32 %v858, %v974
        %v976 = vpop.f32.mrb[0].mxu0
        %v977 = vpop.f32.mrb[0].mxu0
        %v978 = vadd.f32 %v861, %v977
        %v979 = vpop.f32.mrb[0].mxu0
        %980 = vdwg.mxu0
        %vm981 = vcmp.gt.f32.partialorder %v951, 0.0
        %vm982 = vcmp.gt.f32.partialorder %v954, 0.0
        %vm983 = vcmp.gt.f32.partialorder %v959, 0.0
        %vm984 = vcmp.gt.f32.partialorder %v962, 0.0
        %vm985 = vcmp.gt.f32.partialorder %v967, 0.0
        %vm986 = vcmp.gt.f32.partialorder %v970, 0.0
        %vm987 = vcmp.gt.f32.partialorder %v975, 0.0
        %vm988 = vcmp.gt.f32.partialorder %v978, 0.0
        %v989 = vmul.f32 %v951, 0.2
        %v990 = vmul.f32 %v954, 0.2
        %v991 = vmul.f32 %v959, 0.2
        %v992 = vmul.f32 %v962, 0.2
        %v993 = vmul.f32 %v967, 0.2
        %v994 = vmul.f32 %v970, 0.2
        %v995 = vmul.f32 %v975, 0.2
        %v996 = vmul.f32 %v978, 0.2
        %v997 = vsel %vm981, %v951, %v989
        %v998 = vsel %vm982, %v954, %v990
        %v999 = vsel %vm983, %v959, %v991
        %v1000 = vsel %vm984, %v962, %v992
        %v1001 = vsel %vm985, %v967, %v993
        %v1002 = vsel %vm986, %v970, %v994
        %v1003 = vsel %vm987, %v975, %v995
        %v1004 = vsel %vm988, %v978, %v996
        %vm1005 = vcmask 64512
        %v1006 = vsel %vm1005, %v997, -inf
        %v1007 = vrot.slane %v1006, 4
        %v1008 = vmax.f32 %v1006, %v1007
        %v1009 = vrot.slane %v1008, 2
        %v1010 = vmax.f32 %v1008, %v1009
        %v1011 = vrot.slane %v1010, 1
        %v1012 = vmax.f32 %v1010, %v1011
        %v1013 = vsel %vm1005, %v998, -inf
        %v1014 = vrot.slane %v1013, 4
        %v1015 = vmax.f32 %v1013, %v1014
        %v1016 = vrot.slane %v1015, 2
        %v1017 = vmax.f32 %v1015, %v1016
        %v1018 = vrot.slane %v1017, 1
        %v1019 = vmax.f32 %v1017, %v1018
        %v1020 = vsel %vm1005, %v999, -inf
        %v1021 = vrot.slane %v1020, 4
        %v1022 = vmax.f32 %v1020, %v1021
        %v1023 = vrot.slane %v1022, 2
        %v1024 = vmax.f32 %v1022, %v1023
        %v1025 = vrot.slane %v1024, 1
        %v1026 = vmax.f32 %v1024, %v1025
        %v1027 = vsel %vm1005, %v1000, -inf
        %v1028 = vrot.slane %v1027, 4
        %v1029 = vmax.f32 %v1027, %v1028
        %v1030 = vrot.slane %v1029, 2
        %v1031 = vmax.f32 %v1029, %v1030
        %v1032 = vrot.slane %v1031, 1
        %v1033 = vmax.f32 %v1031, %v1032
        %v1034 = vsel %vm1005, %v1001, -inf
        %v1035 = vrot.slane %v1034, 4
        %v1036 = vmax.f32 %v1034, %v1035
        %v1037 = vrot.slane %v1036, 2
        %v1038 = vmax.f32 %v1036, %v1037
        %v1039 = vrot.slane %v1038, 1
        %v1040 = vmax.f32 %v1038, %v1039
        %v1041 = vsel %vm1005, %v1002, -inf
        %v1042 = vrot.slane %v1041, 4
        %v1043 = vmax.f32 %v1041, %v1042
        %v1044 = vrot.slane %v1043, 2
        %v1045 = vmax.f32 %v1043, %v1044
        %v1046 = vrot.slane %v1045, 1
        %v1047 = vmax.f32 %v1045, %v1046
        %v1048 = vsel %vm1005, %v1003, -inf
        %v1049 = vrot.slane %v1048, 4
        %v1050 = vmax.f32 %v1048, %v1049
        %v1051 = vrot.slane %v1050, 2
        %v1052 = vmax.f32 %v1050, %v1051
        %v1053 = vrot.slane %v1052, 1
        %v1054 = vmax.f32 %v1052, %v1053
        %v1055 = vsel %vm1005, %v1004, -inf
        %v1056 = vrot.slane %v1055, 4
        %v1057 = vmax.f32 %v1055, %v1056
        %v1058 = vrot.slane %v1057, 2
        %v1059 = vmax.f32 %v1057, %v1058
        %v1060 = vrot.slane %v1059, 1
        %v1061 = vmax.f32 %v1059, %v1060
        %v1062 = vsub.f32 %v997, %v1012
        %v1063 = vsub.f32 %v998, %v1019
        %v1064 = vsub.f32 %v999, %v1026
        %v1065 = vsub.f32 %v1000, %v1033
        %v1066 = vsub.f32 %v1001, %v1040
        %v1067 = vsub.f32 %v1002, %v1047
        %v1068 = vsub.f32 %v1003, %v1054
        %v1069 = vsub.f32 %v1004, %v1061
        %v1070 = vmul.f32 %v1062, 1.442695
        %v1071 = vpow.pop %v1070
        %v1072 = vmul.f32 %v1063, 1.442695
        %v1073 = vpow.pop %v1072
        %v1074 = vmul.f32 %v1064, 1.442695
        %v1075 = vpow.pop %v1074
        %v1076 = vmul.f32 %v1065, 1.442695
        %v1077 = vpow.pop %v1076
        %v1078 = vmul.f32 %v1066, 1.442695
        %v1079 = vpow.pop %v1078
        %v1080 = vmul.f32 %v1067, 1.442695
        %v1081 = vpow.pop %v1080
        %v1082 = vmul.f32 %v1068, 1.442695
        %v1083 = vpow.pop %v1082
        %v1084 = vmul.f32 %v1069, 1.442695
        %v1085 = vpow.pop %v1084
        %v1086 = vsel %vm1005, %v1071, 0.0
        %v1087 = vrot.slane %v1086, 4
        %v1088 = vadd.f32 %v1086, %v1087
        %v1089 = vrot.slane %v1088, 2
        %v1090 = vadd.f32 %v1088, %v1089
        %v1091 = vrot.slane %v1090, 1
        %v1092 = vadd.f32 %v1090, %v1091
        %v1093 = vsel %vm1005, %v1073, 0.0
        %v1094 = vrot.slane %v1093, 4
        %v1095 = vadd.f32 %v1093, %v1094
        %v1096 = vrot.slane %v1095, 2
        %v1097 = vadd.f32 %v1095, %v1096
        %v1098 = vrot.slane %v1097, 1
        %v1099 = vadd.f32 %v1097, %v1098
        %v1100 = vsel %vm1005, %v1075, 0.0
        %v1101 = vrot.slane %v1100, 4
        %v1102 = vadd.f32 %v1100, %v1101
        %v1103 = vrot.slane %v1102, 2
        %v1104 = vadd.f32 %v1102, %v1103
        %v1105 = vrot.slane %v1104, 1
        %v1106 = vadd.f32 %v1104, %v1105
        %v1107 = vsel %vm1005, %v1077, 0.0
        %v1108 = vrot.slane %v1107, 4
        %v1109 = vadd.f32 %v1107, %v1108
        %v1110 = vrot.slane %v1109, 2
        %v1111 = vadd.f32 %v1109, %v1110
        %v1112 = vrot.slane %v1111, 1
        %v1113 = vadd.f32 %v1111, %v1112
        %v1114 = vsel %vm1005, %v1079, 0.0
        %v1115 = vrot.slane %v1114, 4
        %v1116 = vadd.f32 %v1114, %v1115
        %v1117 = vrot.slane %v1116, 2
        %v1118 = vadd.f32 %v1116, %v1117
        %v1119 = vrot.slane %v1118, 1
        %v1120 = vadd.f32 %v1118, %v1119
        %v1121 = vsel %vm1005, %v1081, 0.0
        %v1122 = vrot.slane %v1121, 4
        %v1123 = vadd.f32 %v1121, %v1122
        %v1124 = vrot.slane %v1123, 2
        %v1125 = vadd.f32 %v1123, %v1124
        %v1126 = vrot.slane %v1125, 1
        %v1127 = vadd.f32 %v1125, %v1126
        %v1128 = vsel %vm1005, %v1083, 0.0
        %v1129 = vrot.slane %v1128, 4
        %v1130 = vadd.f32 %v1128, %v1129
        %v1131 = vrot.slane %v1130, 2
        %v1132 = vadd.f32 %v1130, %v1131
        %v1133 = vrot.slane %v1132, 1
        %v1134 = vadd.f32 %v1132, %v1133
        %v1135 = vsel %vm1005, %v1085, 0.0
        %v1136 = vrot.slane %v1135, 4
        %v1137 = vadd.f32 %v1135, %v1136
        %v1138 = vrot.slane %v1137, 2
        %v1139 = vadd.f32 %v1137, %v1138
        %v1140 = vrot.slane %v1139, 1
        %v1141 = vadd.f32 %v1139, %v1140
        %v1142 = vrcp.pop %v1092
        %v1143 = vrcp.pop %v1099
        %v1144 = vrcp.pop %v1106
        %v1145 = vrcp.pop %v1113
        %v1146 = vrcp.pop %v1120
        %v1147 = vrcp.pop %v1127
        %v1148 = vrcp.pop %v1134
        %v1149 = vrcp.pop %v1141
        %v1150 = vmul.f32 %v1071, %v1142
        %v1151 = vmul.f32 %v1073, %v1143
        %v1152 = vmul.f32 %v1075, %v1144
        %v1153 = vmul.f32 %v1077, %v1145
        %v1154 = vmul.f32 %v1079, %v1146
        %v1155 = vmul.f32 %v1081, %v1147
        %v1156 = vmul.f32 %v1083, %v1148
        %v1157 = vmul.f32 %v1085, %v1149
        %v1158 = vpack.c.bf16 %v1151, %v1150
        %v1159 = vpack.c.bf16 %v1153, %v1152
        %v1160 = vpack.c.bf16 %v1155, %v1154
        %v1161 = vpack.c.bf16 %v1157, %v1156
        %v1163 = vsel %vm1005, %v1158, 0
        %v1166 = vsel %vm1005, %v1159, 0
        %v1169 = vsel %vm1005, %v1160, 0
        %v1172 = vsel %vm1005, %v1161, 0
        %v1175 = vsel %vm912, %v690, 0
        %1177 = vmatprep.subr.bf16.mxu0 0
        %1178 = vmatpush1.bf16.msra.mxu0 %v1175
        %1179 = vmatprep.subr.bf16.mxu0 0
        %1180 = vmatpush1.bf16.msra.mxu0 0
        %1181 = vmatprep.subr.bf16.mxu0 0
        %1182 = vmatpush1.bf16.msra.mxu0 0
        %1183 = vmatprep.subr.bf16.mxu0 0
        %1184 = vmatpush1.bf16.msra.mxu0 0
        %1185 = vmatprep.subr.bf16.mxu0 0
        %1186 = vmatpush1.bf16.msra.mxu0 0
        %1187 = vmatprep.subr.bf16.mxu0 0
        %1188 = vmatpush1.bf16.msra.mxu0 0
        %1189 = vmatprep.subr.bf16.mxu0 0
        %1190 = vmatpush1.bf16.msra.mxu0 0
        %1191 = vmatprep.subr.bf16.mxu0 0
        %1192 = vmatpush1.bf16.msra.mxu0 0
        %1193 = vmatprep.subr.bf16.mxu0 0
        %1194 = vmatpush1.bf16.msra.mxu0 0
        %1195 = vmatprep.subr.bf16.mxu0 0
        %1196 = vmatpush1.bf16.msra.mxu0 0
        %1197 = vmatprep.subr.bf16.mxu0 0
        %1198 = vmatpush1.bf16.msra.mxu0 0
        %1199 = vmatprep.subr.bf16.mxu0 0
        %1200 = vmatpush1.bf16.msra.mxu0 0
        %1201 = vmatprep.subr.bf16.mxu0 0
        %1202 = vmatpush1.bf16.msra.mxu0 0
        %1203 = vmatprep.subr.bf16.mxu0 0
        %1204 = vmatpush1.bf16.msra.mxu0 0
        %1205 = vmatprep.subr.bf16.mxu0 0
        %1206 = vmatpush1.bf16.msra.mxu0 0
        %1207 = vmatprep.subr.bf16.mxu0 0
        %1208 = vmatpush1.bf16.msra.mxu0 0
        %1209 = vmatprep.mubr.bf16.mxu0 0
        %1210 = vmatmul.mubr.bf16.gmra.mrb[0].mxu0 %v1163
        %v1211 = vpop.f32.mrb[0].mxu0
        %v1212 = vadd.f32 0.0, %v1211
        %v1213 = vpop.f32.mrb[0].mxu0
        %v1214 = vpop.f32.mrb[0].mxu0
        %v1215 = vadd.f32 0.0, %v1214
        %v1216 = vpop.f32.mrb[0].mxu0
        %1217 = vmatprep.mubr.bf16.mxu0 0
        %1218 = vmatmul.mubr.bf16.gmra.mrb[0].mxu0 %v1166
        %v1219 = vpop.f32.mrb[0].mxu0
        %v1220 = vadd.f32 0.0, %v1219
        %v1221 = vpop.f32.mrb[0].mxu0
        %v1222 = vpop.f32.mrb[0].mxu0
        %v1223 = vadd.f32 0.0, %v1222
        %v1224 = vpop.f32.mrb[0].mxu0
        %1225 = vmatprep.mubr.bf16.mxu0 0
        %1226 = vmatmul.mubr.bf16.gmra.mrb[0].mxu0 %v1169
        %v1227 = vpop.f32.mrb[0].mxu0
        %v1228 = vadd.f32 0.0, %v1227
        %v1229 = vpop.f32.mrb[0].mxu0
        %v1230 = vpop.f32.mrb[0].mxu0
        %v1231 = vadd.f32 0.0, %v1230
        %v1232 = vpop.f32.mrb[0].mxu0
        %1233 = vmatprep.mubr.bf16.mxu0 0
        %1234 = vmatmul.mubr.bf16.gmra.mrb[0].mxu0 %v1172
        %v1235 = vpop.f32.mrb[0].mxu0
        %v1236 = vadd.f32 0.0, %v1235
        %v1237 = vpop.f32.mrb[0].mxu0
        %v1238 = vpop.f32.mrb[0].mxu0
        %v1239 = vadd.f32 0.0, %v1238
        %v1240 = vpop.f32.mrb[0].mxu0
        %1241 = vdwg.mxu0
        %v1242 = vpack.c.bf16 %v747, %v747
        %1243 = vrot.lane.b32.xlu0 %v778, 120
        %v1244 = vpop.permute.xlu0 %1243
        %1245 = vrot.lane.b32.xlu0 %v779, 120
        %v1246 = vpop.permute.xlu0 %1245
        %1247 = vrot.lane.b32.xlu0 %v780, 120
        %v1248 = vpop.permute.xlu0 %1247
        %1249 = vrot.lane.b32.xlu0 %v781, 120
        %v1250 = vpop.permute.xlu0 %1249
        %v1252 = vsel %vm1005, %v1244, 0
        %v1255 = vsel %vm1005, %v1246, 0
        %v1258 = vsel %vm1005, %v1248, 0
        %v1261 = vsel %vm1005, %v1250, 0
        %v1264 = vsel %vm912, %v1242, 0
        %1266 = vmatprep.subr.bf16.mxu0 0
        %1267 = vmatpush1.bf16.msra.mxu0 %v1264
        %1268 = vmatprep.subr.bf16.mxu0 0
        %1269 = vmatpush1.bf16.msra.mxu0 0
        %1270 = vmatprep.subr.bf16.mxu0 0
        %1271 = vmatpush1.bf16.msra.mxu0 0
        %1272 = vmatprep.subr.bf16.mxu0 0
        %1273 = vmatpush1.bf16.msra.mxu0 0
        %1274 = vmatprep.subr.bf16.mxu0 0
        %1275 = vmatpush1.bf16.msra.mxu0 0
        %1276 = vmatprep.subr.bf16.mxu0 0
        %1277 = vmatpush1.bf16.msra.mxu0 0
        %1278 = vmatprep.subr.bf16.mxu0 0
        %1279 = vmatpush1.bf16.msra.mxu0 0
        %1280 = vmatprep.subr.bf16.mxu0 0
        %1281 = vmatpush1.bf16.msra.mxu0 0
        %1282 = vmatprep.subr.bf16.mxu0 0
        %1283 = vmatpush1.bf16.msra.mxu0 0
        %1284 = vmatprep.subr.bf16.mxu0 0
        %1285 = vmatpush1.bf16.msra.mxu0 0
        %1286 = vmatprep.subr.bf16.mxu0 0
        %1287 = vmatpush1.bf16.msra.mxu0 0
        %1288 = vmatprep.subr.bf16.mxu0 0
        %1289 = vmatpush1.bf16.msra.mxu0 0
        %1290 = vmatprep.subr.bf16.mxu0 0
        %1291 = vmatpush1.bf16.msra.mxu0 0
        %1292 = vmatprep.subr.bf16.mxu0 0
        %1293 = vmatpush1.bf16.msra.mxu0 0
        %1294 = vmatprep.subr.bf16.mxu0 0
        %1295 = vmatpush1.bf16.msra.mxu0 0
        %1296 = vmatprep.subr.bf16.mxu0 0
        %1297 = vmatpush1.bf16.msra.mxu0 0
        %1298 = vmatprep.mubr.bf16.mxu0 0
        %1299 = vmatmul.mubr.bf16.gmra.mrb[0].mxu0 %v1252
        %v1300 = vpop.f32.mrb[0].mxu0
        %v1301 = vadd.f32 0.0, %v1300
        %v1302 = vpop.f32.mrb[0].mxu0
        %v1303 = vpop.f32.mrb[0].mxu0
        %v1304 = vadd.f32 0.0, %v1303
        %v1305 = vpop.f32.mrb[0].mxu0
        %1306 = vmatprep.mubr.bf16.mxu0 0
        %1307 = vmatmul.mubr.bf16.gmra.mrb[0].mxu0 %v1255
        %v1308 = vpop.f32.mrb[0].mxu0
        %v1309 = vadd.f32 0.0, %v1308
        %v1310 = vpop.f32.mrb[0].mxu0
        %v1311 = vpop.f32.mrb[0].mxu0
        %v1312 = vadd.f32 0.0, %v1311
        %v1313 = vpop.f32.mrb[0].mxu0
        %1314 = vmatprep.mubr.bf16.mxu0 0
        %1315 = vmatmul.mubr.bf16.gmra.mrb[0].mxu0 %v1258
        %v1316 = vpop.f32.mrb[0].mxu0
        %v1317 = vadd.f32 0.0, %v1316
        %v1318 = vpop.f32.mrb[0].mxu0
        %v1319 = vpop.f32.mrb[0].mxu0
        %v1320 = vadd.f32 0.0, %v1319
        %v1321 = vpop.f32.mrb[0].mxu0
        %1322 = vmatprep.mubr.bf16.mxu0 0
        %1323 = vmatmul.mubr.bf16.gmra.mrb[0].mxu0 %v1261
        %v1324 = vpop.f32.mrb[0].mxu0
        %v1325 = vadd.f32 0.0, %v1324
        %v1326 = vpop.f32.mrb[0].mxu0
        %v1327 = vpop.f32.mrb[0].mxu0
        %v1328 = vadd.f32 0.0, %v1327
        %v1329 = vpop.f32.mrb[0].mxu0
        %1330 = vdwg.mxu0
        %v1331 = vmul.f32 %v1212, %v1301
        %v1332 = vmul.f32 %v1215, %v1304
        %v1333 = vmul.f32 %v1220, %v1309
        %v1334 = vmul.f32 %v1223, %v1312
        %v1335 = vmul.f32 %v1228, %v1317
        %v1336 = vmul.f32 %v1231, %v1320
        %v1337 = vmul.f32 %v1236, %v1325
        %v1338 = vmul.f32 %v1239, %v1328
        %v1339 = vpack.c.bf16 %v1332, %v1331
        %v1340 = vpack.c.bf16 %v1334, %v1333
        %v1341 = vpack.c.bf16 %v1336, %v1335
        %v1342 = vpack.c.bf16 %v1338, %v1337
        %v1343 = vld [vmem:[%s7] sm:$0x1]
        %v1345 = vlaneseq
        %v1346 = vshrl.u32 %v1345, 7
        %v1347 = vsub.s32 0, %v1346
        %v1348 = vrot.slane %v1343, %v1347
        %vm1350 = vcmask 523264
        %v1352 = vsel %vm1350, %v689, 0
        %1354 = vmatprep.subr.bf16.mxu0 0
        %1355 = vmatpush1.bf16.msra.mxu0 %v1339
        %1356 = vmatprep.subr.bf16.mxu0 0
        %1357 = vmatpush1.bf16.msra.mxu0 %v1340
        %1358 = vmatprep.subr.bf16.mxu0 0
        %1359 = vmatpush1.bf16.msra.mxu0 %v1341
        %1360 = vmatprep.subr.bf16.mxu0 0
        %1361 = vmatpush1.bf16.msra.mxu0 %v1342
        %1362 = vmatprep.subr.bf16.mxu0 0
        %1363 = vmatpush1.bf16.msra.mxu0 0
        %1364 = vmatprep.subr.bf16.mxu0 0
        %1365 = vmatpush1.bf16.msra.mxu0 0
        %1366 = vmatprep.subr.bf16.mxu0 0
        %1367 = vmatpush1.bf16.msra.mxu0 0
        %1368 = vmatprep.subr.bf16.mxu0 0
        %1369 = vmatpush1.bf16.msra.mxu0 0
        %1370 = vmatprep.subr.bf16.mxu0 0
        %1371 = vmatpush1.bf16.msra.mxu0 0
        %1372 = vmatprep.subr.bf16.mxu0 0
        %1373 = vmatpush1.bf16.msra.mxu0 0
        %1374 = vmatprep.subr.bf16.mxu0 0
        %1375 = vmatpush1.bf16.msra.mxu0 0
        %1376 = vmatprep.subr.bf16.mxu0 0
        %1377 = vmatpush1.bf16.msra.mxu0 0
        %1378 = vmatprep.subr.bf16.mxu0 0
        %1379 = vmatpush1.bf16.msra.mxu0 0
        %1380 = vmatprep.subr.bf16.mxu0 0
        %1381 = vmatpush1.bf16.msra.mxu0 0
        %1382 = vmatprep.subr.bf16.mxu0 0
        %1383 = vmatpush1.bf16.msra.mxu0 0
        %1384 = vmatprep.subr.bf16.mxu0 0
        %1385 = vmatpush1.bf16.msra.mxu0 0
        %1386 = vmatprep.mubr.bf16.mxu0 0
        %1387 = vmatmul.mubr.bf16.gmra.mrb[0].mxu0 %v1352
        %v1388 = vpop.f32.mrb[0].mxu0
        %v1389 = vadd.f32 %v1348, %v1388
        %v1390 = vpop.f32.mrb[0].mxu0
        %v1391 = vpop.f32.mrb[0].mxu0
        %v1392 = vpop.f32.mrb[0].mxu0
        %1393 = vdwg.mxu0
        %v1394 = vld [vmem:[%s9] sm:$0x7]
        %v1395 = vld [vmem:[%s8] sm:$0xf]
        %v1396 = vld [vmem:[%s8 + $0x4] sm:$0xf]
        %v1397 = vld [vmem:[%s8 + $0x8] sm:$0xf]
        %v1398 = vld [vmem:[%s8 + $0xc] sm:$0xf]
        %v1399 = vpack.c.bf16 %v1389, %v1389
        %v1400 = vlaneseq
        %v1401 = vshrl.u32 %v1400, 7
        %v1402 = vsub.s32 0, %v1401
        %v1403 = vrot.slane %v1394, %v1402
        %v1408 = vunpack.c.l.b16 %v1395
        %v1409 = vunpack.c.l.b16 %v1396
        %v1410 = vunpack.c.l.b16 %v1397
        %v1411 = vunpack.c.l.b16 %v1398
        %v1412 = vpack.c.b16 %v1409, %v1408
        %v1413 = vpack.c.b16 %v1411, %v1410
        %v1417 = vsel %vm708, %v1399, 0
        %1419 = vmatprep.subr.bf16.mxu0 0
        %1420 = vmatpush1.bf16.msra.mxu0 %v1412
        %1421 = vmatprep.subr.bf16.mxu0 0
        %1422 = vmatpush1.bf16.msra.mxu0 %v1413
        %1423 = vmatprep.subr.bf16.mxu0 0
        %1424 = vmatpush1.bf16.msra.mxu0 0
        %1425 = vmatprep.subr.bf16.mxu0 0
        %1426 = vmatpush1.bf16.msra.mxu0 0
        %1427 = vmatprep.subr.bf16.mxu0 0
        %1428 = vmatpush1.bf16.msra.mxu0 0
        %1429 = vmatprep.subr.bf16.mxu0 0
        %1430 = vmatpush1.bf16.msra.mxu0 0
        %1431 = vmatprep.subr.bf16.mxu0 0
        %1432 = vmatpush1.bf16.msra.mxu0 0
        %1433 = vmatprep.subr.bf16.mxu0 0
        %1434 = vmatpush1.bf16.msra.mxu0 0
        %1435 = vmatprep.subr.bf16.mxu0 0
        %1436 = vmatpush1.bf16.msra.mxu0 0
        %1437 = vmatprep.subr.bf16.mxu0 0
        %1438 = vmatpush1.bf16.msra.mxu0 0
        %1439 = vmatprep.subr.bf16.mxu0 0
        %1440 = vmatpush1.bf16.msra.mxu0 0
        %1441 = vmatprep.subr.bf16.mxu0 0
        %1442 = vmatpush1.bf16.msra.mxu0 0
        %1443 = vmatprep.subr.bf16.mxu0 0
        %1444 = vmatpush1.bf16.msra.mxu0 0
        %1445 = vmatprep.subr.bf16.mxu0 0
        %1446 = vmatpush1.bf16.msra.mxu0 0
        %1447 = vmatprep.subr.bf16.mxu0 0
        %1448 = vmatpush1.bf16.msra.mxu0 0
        %1449 = vmatprep.subr.bf16.mxu0 0
        %1450 = vmatpush1.bf16.msra.mxu0 0
        %1451 = vmatprep.mubr.bf16.mxu0 0
        %1452 = vmatmul.mubr.bf16.gmra.mrb[0].mxu0 %v1417
        %v1453 = vpop.f32.mrb[0].mxu0
        %v1454 = vadd.f32 %v1403, %v1453
        %v1455 = vpop.f32.mrb[0].mxu0
        %v1456 = vpop.f32.mrb[0].mxu0
        %v1457 = vpop.f32.mrb[0].mxu0
        %1458 = vdwg.mxu0
        %v1459 = vsel %vm708, %v1454, 0.0
        %1460 = vadd.xlane.f32.xlu0 %v1459
        %v1461 = vpop.xlane.xlu0 %1460
        %v1462 = vrcp.pop 32.0
        %v1463 = vmul.f32 %v1461, %v1462
        %v1464 = vsub.f32 %v1454, %v1463
        %v1465 = vmul.f32 %v1464, %v1464
        %v1466 = vsel %vm708, %v1465, 0.0
        %1467 = vadd.xlane.f32.xlu0 %v1466
        %v1468 = vpop.xlane.xlu0 %1467
        %v1469 = vmul.f32 %v1468, %v1462
        %v1470 = vadd.f32 %v1469, 1e-05
        %v1471 = vrsqrt.pop %v1470
        %v1472 = vmul.f32 %v1464, %v1471
        %v1473 = vlaneseq
        %v1474 = vshrl.u32 %v1473, 7
        %v1475 = vsub.s32 1, %v1474
        %v1476 = vrot.slane %v1394, %v1475
        %v1477 = vmul.f32 %v1472, %v1476
        %v1478 = vlaneseq
        %v1479 = vshrl.u32 %v1478, 7
        %v1480 = vsub.s32 2, %v1479
        %v1481 = vrot.slane %v1394, %v1480
        %v1482 = vadd.f32 %v1477, %v1481
        %v1483 = vmax.f32 %v1482, 0.0
        %s1484 = scalar_lea.vmem %s4, 16
        %v1485 = vld [vmem:[%s1484] sm:$0xf]
        %v1486 = vld [vmem:[%s1484 + $0x4] sm:$0xf]
        %v1487 = vld [vmem:[%s1484 + $0x8] sm:$0xf]
        %v1488 = vld [vmem:[%s1484 + $0xc] sm:$0xf]
        %v1489 = vpack.c.bf16 %v1483, %v1483
        %v1494 = vunpack.c.l.b16 %v1485
        %v1495 = vunpack.c.l.b16 %v1486
        %v1496 = vunpack.c.l.b16 %v1487
        %v1497 = vunpack.c.l.b16 %v1488
        %v1498 = vpack.c.b16 %v1495, %v1494
        %v1499 = vpack.c.b16 %v1497, %v1496
        %v1503 = vsel %vm708, %v1489, 0
        %1505 = vmatprep.subr.bf16.mxu0 0
        %1506 = vmatpush1.bf16.msra.mxu0 %v1498
        %1507 = vmatprep.subr.bf16.mxu0 0
        %1508 = vmatpush1.bf16.msra.mxu0 %v1499
        %1509 = vmatprep.subr.bf16.mxu0 0
        %1510 = vmatpush1.bf16.msra.mxu0 0
        %1511 = vmatprep.subr.bf16.mxu0 0
        %1512 = vmatpush1.bf16.msra.mxu0 0
        %1513 = vmatprep.subr.bf16.mxu0 0
        %1514 = vmatpush1.bf16.msra.mxu0 0
        %1515 = vmatprep.subr.bf16.mxu0 0
        %1516 = vmatpush1.bf16.msra.mxu0 0
        %1517 = vmatprep.subr.bf16.mxu0 0
        %1518 = vmatpush1.bf16.msra.mxu0 0
        %1519 = vmatprep.subr.bf16.mxu0 0
        %1520 = vmatpush1.bf16.msra.mxu0 0
        %1521 = vmatprep.subr.bf16.mxu0 0
        %1522 = vmatpush1.bf16.msra.mxu0 0
        %1523 = vmatprep.subr.bf16.mxu0 0
        %1524 = vmatpush1.bf16.msra.mxu0 0
        %1525 = vmatprep.subr.bf16.mxu0 0
        %1526 = vmatpush1.bf16.msra.mxu0 0
        %1527 = vmatprep.subr.bf16.mxu0 0
        %1528 = vmatpush1.bf16.msra.mxu0 0
        %1529 = vmatprep.subr.bf16.mxu0 0
        %1530 = vmatpush1.bf16.msra.mxu0 0
        %1531 = vmatprep.subr.bf16.mxu0 0
        %1532 = vmatpush1.bf16.msra.mxu0 0
        %1533 = vmatprep.subr.bf16.mxu0 0
        %1534 = vmatpush1.bf16.msra.mxu0 0
        %1535 = vmatprep.subr.bf16.mxu0 0
        %1536 = vmatpush1.bf16.msra.mxu0 0
        %1537 = vmatprep.mubr.bf16.mxu0 0
        %1538 = vmatmul.mubr.bf16.gmra.mrb[0].mxu0 %v1503
        %v1539 = vpop.f32.mrb[0].mxu0
        %v1540 = vadd.f32 0.0, %v1539
        %v1541 = vpop.f32.mrb[0].mxu0
        %v1542 = vpop.f32.mrb[0].mxu0
        %v1543 = vpop.f32.mrb[0].mxu0
        %1544 = vdwg.mxu0
        %1546 = vrot.lane.b32.xlu0 %v1540, 8
        %v1547 = vpop.permute.xlu0 %1546
        %s1549 = scalar_lea.vmem %s5, 20
        %v1550 = vld [vmem:[%s1549] sm:$0xf]
        %v1551 = vld [vmem:[%s1549 + $0x4] sm:$0xf]
        %v1552 = vld [vmem:[%s1549 + $0x8] sm:$0xf]
        %v1553 = vld [vmem:[%s1549 + $0xc] sm:$0xf]
        %v1554 = vld [vmem:[%s1549 + $0x10] sm:$0xf]
        %v1555 = vpack.c.bf16 %v1547, %v1540
        %1557 = vrot.lane.b32.xlu0 %v1555, 88
        %v1558 = vpop.permute.xlu0 %1557
        %1560 = vmatprep.subr.bf16.mxu0 0
        %1561 = vmatpush1.bf16.msra.mxu0 %v1558
        %1562 = vmatprep.subr.bf16.mxu0 0
        %1563 = vmatpush1.bf16.msra.mxu0 0
        %1564 = vmatprep.subr.bf16.mxu0 0
        %1565 = vmatpush1.bf16.msra.mxu0 0
        %1566 = vmatprep.subr.bf16.mxu0 0
        %1567 = vmatpush1.bf16.msra.mxu0 0
        %1568 = vmatprep.subr.bf16.mxu0 0
        %1569 = vmatpush1.bf16.msra.mxu0 0
        %1570 = vmatprep.subr.bf16.mxu0 0
        %1571 = vmatpush1.bf16.msra.mxu0 0
        %1572 = vmatprep.subr.bf16.mxu0 0
        %1573 = vmatpush1.bf16.msra.mxu0 0
        %1574 = vmatprep.subr.bf16.mxu0 0
        %1575 = vmatpush1.bf16.msra.mxu0 0
        %1576 = vmatprep.subr.bf16.mxu0 0
        %1577 = vmatpush1.bf16.msra.mxu0 0
        %1578 = vmatprep.subr.bf16.mxu0 0
        %1579 = vmatpush1.bf16.msra.mxu0 0
        %1580 = vmatprep.subr.bf16.mxu0 0
        %1581 = vmatpush1.bf16.msra.mxu0 0
        %1582 = vmatprep.subr.bf16.mxu0 0
        %1583 = vmatpush1.bf16.msra.mxu0 0
        %1584 = vmatprep.subr.bf16.mxu0 0
        %1585 = vmatpush1.bf16.msra.mxu0 0
        %1586 = vmatprep.subr.bf16.mxu0 0
        %1587 = vmatpush1.bf16.msra.mxu0 0
        %1588 = vmatprep.subr.bf16.mxu0 0
        %1589 = vmatpush1.bf16.msra.mxu0 0
        %1590 = vmatprep.subr.bf16.mxu0 0
        %1591 = vmatpush1.bf16.msra.mxu0 0
        %1592 = vmatprep.mubr.bf16.mxu0 0
        %1593 = vmatmul.mubr.bf16.gmra.mrb[0].mxu0 %v788
        %v1594 = vpop.f32.mrb[0].mxu0
        %v1595 = vadd.f32 0.0, %v1594
        %v1596 = vpop.f32.mrb[0].mxu0
        %v1597 = vpop.f32.mrb[0].mxu0
        %v1598 = vadd.f32 0.0, %v1597
        %v1599 = vpop.f32.mrb[0].mxu0
        %1600 = vmatprep.mubr.bf16.mxu0 0
        %1601 = vmatmul.mubr.bf16.gmra.mrb[0].mxu0 %v791
        %v1602 = vpop.f32.mrb[0].mxu0
        %v1603 = vadd.f32 0.0, %v1602
        %v1604 = vpop.f32.mrb[0].mxu0
        %v1605 = vpop.f32.mrb[0].mxu0
        %v1606 = vadd.f32 0.0, %v1605
        %v1607 = vpop.f32.mrb[0].mxu0
        %1608 = vmatprep.mubr.bf16.mxu0 0
        %1609 = vmatmul.mubr.bf16.gmra.mrb[0].mxu0 %v794
        %v1610 = vpop.f32.mrb[0].mxu0
        %v1611 = vadd.f32 0.0, %v1610
        %v1612 = vpop.f32.mrb[0].mxu0
        %v1613 = vpop.f32.mrb[0].mxu0
        %v1614 = vadd.f32 0.0, %v1613
        %v1615 = vpop.f32.mrb[0].mxu0
        %1616 = vmatprep.mubr.bf16.mxu0 0
        %1617 = vmatmul.mubr.bf16.gmra.mrb[0].mxu0 %v797
        %v1618 = vpop.f32.mrb[0].mxu0
        %v1619 = vadd.f32 0.0, %v1618
        %v1620 = vpop.f32.mrb[0].mxu0
        %v1621 = vpop.f32.mrb[0].mxu0
        %v1622 = vadd.f32 0.0, %v1621
        %v1623 = vpop.f32.mrb[0].mxu0
        %1624 = vdwg.mxu0
        %v1630 = vunpack.c.l.b16 %v1550
        %v1631 = vunpack.c.l.b16 %v1551
        %v1632 = vunpack.c.l.b16 %v1552
        %v1633 = vunpack.c.l.b16 %v1553
        %v1634 = vunpack.c.l.b16 %v1554
        %v1635 = vpack.c.b16 %v1631, %v1630
        %v1636 = vpack.c.b16 %v1633, %v1632
        %v1637 = vpack.c.b16 %v1634, %v1634
        %v1641 = vsel %vm912, %v1637, 0
        %1643 = vmatprep.subr.bf16.mxu0 0
        %1644 = vmatpush1.bf16.msra.mxu0 %v1635
        %1645 = vmatprep.subr.bf16.mxu0 0
        %1646 = vmatpush1.bf16.msra.mxu0 %v1636
        %1647 = vmatprep.subr.bf16.mxu0 0
        %1648 = vmatpush1.bf16.msra.mxu0 %v1641
        %1649 = vmatprep.subr.bf16.mxu0 0
        %1650 = vmatpush1.bf16.msra.mxu0 0
        %1651 = vmatprep.subr.bf16.mxu0 0
        %1652 = vmatpush1.bf16.msra.mxu0 0
        %1653 = vmatprep.subr.bf16.mxu0 0
        %1654 = vmatpush1.bf16.msra.mxu0 0
        %1655 = vmatprep.subr.bf16.mxu0 0
        %1656 = vmatpush1.bf16.msra.mxu0 0
        %1657 = vmatprep.subr.bf16.mxu0 0
        %1658 = vmatpush1.bf16.msra.mxu0 0
        %1659 = vmatprep.subr.bf16.mxu0 0
        %1660 = vmatpush1.bf16.msra.mxu0 0
        %1661 = vmatprep.subr.bf16.mxu0 0
        %1662 = vmatpush1.bf16.msra.mxu0 0
        %1663 = vmatprep.subr.bf16.mxu0 0
        %1664 = vmatpush1.bf16.msra.mxu0 0
        %1665 = vmatprep.subr.bf16.mxu0 0
        %1666 = vmatpush1.bf16.msra.mxu0 0
        %1667 = vmatprep.subr.bf16.mxu0 0
        %1668 = vmatpush1.bf16.msra.mxu0 0
        %1669 = vmatprep.subr.bf16.mxu0 0
        %1670 = vmatpush1.bf16.msra.mxu0 0
        %1671 = vmatprep.subr.bf16.mxu0 0
        %1672 = vmatpush1.bf16.msra.mxu0 0
        %1673 = vmatprep.subr.bf16.mxu0 0
        %1674 = vmatpush1.bf16.msra.mxu0 0
        %1675 = vmatprep.mubr.bf16.mxu0 0
        %1676 = vmatmul.mubr.bf16.gmra.mrb[0].mxu0 %v901
        %v1677 = vpop.f32.mrb[0].mxu0
        %v1678 = vadd.f32 %v1595, %v1677
        %v1679 = vpop.f32.mrb[0].mxu0
        %v1680 = vpop.f32.mrb[0].mxu0
        %v1681 = vadd.f32 %v1598, %v1680
        %v1682 = vpop.f32.mrb[0].mxu0
        %1683 = vmatprep.mubr.bf16.mxu0 0
        %1684 = vmatmul.mubr.bf16.gmra.mrb[0].mxu0 %v904
        %v1685 = vpop.f32.mrb[0].mxu0
        %v1686 = vadd.f32 %v1603, %v1685
        %v1687 = vpop.f32.mrb[0].mxu0
        %v1688 = vpop.f32.mrb[0].mxu0
        %v1689 = vadd.f32 %v1606, %v1688
        %v1690 = vpop.f32.mrb[0].mxu0
        %1691 = vmatprep.mubr.bf16.mxu0 0
        %1692 = vmatmul.mubr.bf16.gmra.mrb[0].mxu0 %v907
        %v1693 = vpop.f32.mrb[0].mxu0
        %v1694 = vadd.f32 %v1611, %v1693
        %v1695 = vpop.f32.mrb[0].mxu0
        %v1696 = vpop.f32.mrb[0].mxu0
        %v1697 = vadd.f32 %v1614, %v1696
        %v1698 = vpop.f32.mrb[0].mxu0
        %1699 = vmatprep.mubr.bf16.mxu0 0
        %1700 = vmatmul.mubr.bf16.gmra.mrb[0].mxu0 %v910
        %v1701 = vpop.f32.mrb[0].mxu0
        %v1702 = vadd.f32 %v1619, %v1701
        %v1703 = vpop.f32.mrb[0].mxu0
        %v1704 = vpop.f32.mrb[0].mxu0
        %v1705 = vadd.f32 %v1622, %v1704
        %v1706 = vpop.f32.mrb[0].mxu0
        %1707 = vdwg.mxu0
        %vm1708 = vcmp.gt.f32.partialorder %v1678, 0.0
        %vm1709 = vcmp.gt.f32.partialorder %v1681, 0.0
        %vm1710 = vcmp.gt.f32.partialorder %v1686, 0.0
        %vm1711 = vcmp.gt.f32.partialorder %v1689, 0.0
        %vm1712 = vcmp.gt.f32.partialorder %v1694, 0.0
        %vm1713 = vcmp.gt.f32.partialorder %v1697, 0.0
        %vm1714 = vcmp.gt.f32.partialorder %v1702, 0.0
        %vm1715 = vcmp.gt.f32.partialorder %v1705, 0.0
        %v1716 = vmul.f32 %v1678, 0.2
        %v1717 = vmul.f32 %v1681, 0.2
        %v1718 = vmul.f32 %v1686, 0.2
        %v1719 = vmul.f32 %v1689, 0.2
        %v1720 = vmul.f32 %v1694, 0.2
        %v1721 = vmul.f32 %v1697, 0.2
        %v1722 = vmul.f32 %v1702, 0.2
        %v1723 = vmul.f32 %v1705, 0.2
        %v1724 = vsel %vm1708, %v1678, %v1716
        %v1725 = vsel %vm1709, %v1681, %v1717
        %v1726 = vsel %vm1710, %v1686, %v1718
        %v1727 = vsel %vm1711, %v1689, %v1719
        %v1728 = vsel %vm1712, %v1694, %v1720
        %v1729 = vsel %vm1713, %v1697, %v1721
        %v1730 = vsel %vm1714, %v1702, %v1722
        %v1731 = vsel %vm1715, %v1705, %v1723
        %v1732 = vsel %vm1005, %v1724, -inf
        %v1733 = vrot.slane %v1732, 4
        %v1734 = vmax.f32 %v1732, %v1733
        %v1735 = vrot.slane %v1734, 2
        %v1736 = vmax.f32 %v1734, %v1735
        %v1737 = vrot.slane %v1736, 1
        %v1738 = vmax.f32 %v1736, %v1737
        %v1739 = vsel %vm1005, %v1725, -inf
        %v1740 = vrot.slane %v1739, 4
        %v1741 = vmax.f32 %v1739, %v1740
        %v1742 = vrot.slane %v1741, 2
        %v1743 = vmax.f32 %v1741, %v1742
        %v1744 = vrot.slane %v1743, 1
        %v1745 = vmax.f32 %v1743, %v1744
        %v1746 = vsel %vm1005, %v1726, -inf
        %v1747 = vrot.slane %v1746, 4
        %v1748 = vmax.f32 %v1746, %v1747
        %v1749 = vrot.slane %v1748, 2
        %v1750 = vmax.f32 %v1748, %v1749
        %v1751 = vrot.slane %v1750, 1
        %v1752 = vmax.f32 %v1750, %v1751
        %v1753 = vsel %vm1005, %v1727, -inf
        %v1754 = vrot.slane %v1753, 4
        %v1755 = vmax.f32 %v1753, %v1754
        %v1756 = vrot.slane %v1755, 2
        %v1757 = vmax.f32 %v1755, %v1756
        %v1758 = vrot.slane %v1757, 1
        %v1759 = vmax.f32 %v1757, %v1758
        %v1760 = vsel %vm1005, %v1728, -inf
        %v1761 = vrot.slane %v1760, 4
        %v1762 = vmax.f32 %v1760, %v1761
        %v1763 = vrot.slane %v1762, 2
        %v1764 = vmax.f32 %v1762, %v1763
        %v1765 = vrot.slane %v1764, 1
        %v1766 = vmax.f32 %v1764, %v1765
        %v1767 = vsel %vm1005, %v1729, -inf
        %v1768 = vrot.slane %v1767, 4
        %v1769 = vmax.f32 %v1767, %v1768
        %v1770 = vrot.slane %v1769, 2
        %v1771 = vmax.f32 %v1769, %v1770
        %v1772 = vrot.slane %v1771, 1
        %v1773 = vmax.f32 %v1771, %v1772
        %v1774 = vsel %vm1005, %v1730, -inf
        %v1775 = vrot.slane %v1774, 4
        %v1776 = vmax.f32 %v1774, %v1775
        %v1777 = vrot.slane %v1776, 2
        %v1778 = vmax.f32 %v1776, %v1777
        %v1779 = vrot.slane %v1778, 1
        %v1780 = vmax.f32 %v1778, %v1779
        %v1781 = vsel %vm1005, %v1731, -inf
        %v1782 = vrot.slane %v1781, 4
        %v1783 = vmax.f32 %v1781, %v1782
        %v1784 = vrot.slane %v1783, 2
        %v1785 = vmax.f32 %v1783, %v1784
        %v1786 = vrot.slane %v1785, 1
        %v1787 = vmax.f32 %v1785, %v1786
        %v1788 = vsub.f32 %v1724, %v1738
        %v1789 = vsub.f32 %v1725, %v1745
        %v1790 = vsub.f32 %v1726, %v1752
        %v1791 = vsub.f32 %v1727, %v1759
        %v1792 = vsub.f32 %v1728, %v1766
        %v1793 = vsub.f32 %v1729, %v1773
        %v1794 = vsub.f32 %v1730, %v1780
        %v1795 = vsub.f32 %v1731, %v1787
        %v1796 = vmul.f32 %v1788, 1.442695
        %v1797 = vpow.pop %v1796
        %v1798 = vmul.f32 %v1789, 1.442695
        %v1799 = vpow.pop %v1798
        %v1800 = vmul.f32 %v1790, 1.442695
        %v1801 = vpow.pop %v1800
        %v1802 = vmul.f32 %v1791, 1.442695
        %v1803 = vpow.pop %v1802
        %v1804 = vmul.f32 %v1792, 1.442695
        %v1805 = vpow.pop %v1804
        %v1806 = vmul.f32 %v1793, 1.442695
        %v1807 = vpow.pop %v1806
        %v1808 = vmul.f32 %v1794, 1.442695
        %v1809 = vpow.pop %v1808
        %v1810 = vmul.f32 %v1795, 1.442695
        %v1811 = vpow.pop %v1810
        %v1812 = vsel %vm1005, %v1797, 0.0
        %v1813 = vrot.slane %v1812, 4
        %v1814 = vadd.f32 %v1812, %v1813
        %v1815 = vrot.slane %v1814, 2
        %v1816 = vadd.f32 %v1814, %v1815
        %v1817 = vrot.slane %v1816, 1
        %v1818 = vadd.f32 %v1816, %v1817
        %v1819 = vsel %vm1005, %v1799, 0.0
        %v1820 = vrot.slane %v1819, 4
        %v1821 = vadd.f32 %v1819, %v1820
        %v1822 = vrot.slane %v1821, 2
        %v1823 = vadd.f32 %v1821, %v1822
        %v1824 = vrot.slane %v1823, 1
        %v1825 = vadd.f32 %v1823, %v1824
        %v1826 = vsel %vm1005, %v1801, 0.0
        %v1827 = vrot.slane %v1826, 4
        %v1828 = vadd.f32 %v1826, %v1827
        %v1829 = vrot.slane %v1828, 2
        %v1830 = vadd.f32 %v1828, %v1829
        %v1831 = vrot.slane %v1830, 1
        %v1832 = vadd.f32 %v1830, %v1831
        %v1833 = vsel %vm1005, %v1803, 0.0
        %v1834 = vrot.slane %v1833, 4
        %v1835 = vadd.f32 %v1833, %v1834
        %v1836 = vrot.slane %v1835, 2
        %v1837 = vadd.f32 %v1835, %v1836
        %v1838 = vrot.slane %v1837, 1
        %v1839 = vadd.f32 %v1837, %v1838
        %v1840 = vsel %vm1005, %v1805, 0.0
        %v1841 = vrot.slane %v1840, 4
        %v1842 = vadd.f32 %v1840, %v1841
        %v1843 = vrot.slane %v1842, 2
        %v1844 = vadd.f32 %v1842, %v1843
        %v1845 = vrot.slane %v1844, 1
        %v1846 = vadd.f32 %v1844, %v1845
        %v1847 = vsel %vm1005, %v1807, 0.0
        %v1848 = vrot.slane %v1847, 4
        %v1849 = vadd.f32 %v1847, %v1848
        %v1850 = vrot.slane %v1849, 2
        %v1851 = vadd.f32 %v1849, %v1850
        %v1852 = vrot.slane %v1851, 1
        %v1853 = vadd.f32 %v1851, %v1852
        %v1854 = vsel %vm1005, %v1809, 0.0
        %v1855 = vrot.slane %v1854, 4
        %v1856 = vadd.f32 %v1854, %v1855
        %v1857 = vrot.slane %v1856, 2
        %v1858 = vadd.f32 %v1856, %v1857
        %v1859 = vrot.slane %v1858, 1
        %v1860 = vadd.f32 %v1858, %v1859
        %v1861 = vsel %vm1005, %v1811, 0.0
        %v1862 = vrot.slane %v1861, 4
        %v1863 = vadd.f32 %v1861, %v1862
        %v1864 = vrot.slane %v1863, 2
        %v1865 = vadd.f32 %v1863, %v1864
        %v1866 = vrot.slane %v1865, 1
        %v1867 = vadd.f32 %v1865, %v1866
        %v1868 = vrcp.pop %v1818
        %v1869 = vrcp.pop %v1825
        %v1870 = vrcp.pop %v1832
        %v1871 = vrcp.pop %v1839
        %v1872 = vrcp.pop %v1846
        %v1873 = vrcp.pop %v1853
        %v1874 = vrcp.pop %v1860
        %v1875 = vrcp.pop %v1867
        %v1876 = vmul.f32 %v1797, %v1868
        %v1877 = vmul.f32 %v1799, %v1869
        %v1878 = vmul.f32 %v1801, %v1870
        %v1879 = vmul.f32 %v1803, %v1871
        %v1880 = vmul.f32 %v1805, %v1872
        %v1881 = vmul.f32 %v1807, %v1873
        %v1882 = vmul.f32 %v1809, %v1874
        %v1883 = vmul.f32 %v1811, %v1875
        %v1884 = vpack.c.bf16 %v1877, %v1876
        %v1885 = vpack.c.bf16 %v1879, %v1878
        %v1886 = vpack.c.bf16 %v1881, %v1880
        %v1887 = vpack.c.bf16 %v1883, %v1882
        %v1889 = vsel %vm1005, %v1884, 0
        %v1892 = vsel %vm1005, %v1885, 0
        %v1895 = vsel %vm1005, %v1886, 0
        %v1898 = vsel %vm1005, %v1887, 0
        %1900 = vmatprep.subr.bf16.mxu0 0
        %1901 = vmatpush1.bf16.msra.mxu0 %v1175
        %1902 = vmatprep.subr.bf16.mxu0 0
        %1903 = vmatpush1.bf16.msra.mxu0 0
        %1904 = vmatprep.subr.bf16.mxu0 0
        %1905 = vmatpush1.bf16.msra.mxu0 0
        %1906 = vmatprep.subr.bf16.mxu0 0
        %1907 = vmatpush1.bf16.msra.mxu0 0
        %1908 = vmatprep.subr.bf16.mxu0 0
        %1909 = vmatpush1.bf16.msra.mxu0 0
        %1910 = vmatprep.subr.bf16.mxu0 0
        %1911 = vmatpush1.bf16.msra.mxu0 0
        %1912 = vmatprep.subr.bf16.mxu0 0
        %1913 = vmatpush1.bf16.msra.mxu0 0
        %1914 = vmatprep.subr.bf16.mxu0 0
        %1915 = vmatpush1.bf16.msra.mxu0 0
        %1916 = vmatprep.subr.bf16.mxu0 0
        %1917 = vmatpush1.bf16.msra.mxu0 0
        %1918 = vmatprep.subr.bf16.mxu0 0
        %1919 = vmatpush1.bf16.msra.mxu0 0
        %1920 = vmatprep.subr.bf16.mxu0 0
        %1921 = vmatpush1.bf16.msra.mxu0 0
        %1922 = vmatprep.subr.bf16.mxu0 0
        %1923 = vmatpush1.bf16.msra.mxu0 0
        %1924 = vmatprep.subr.bf16.mxu0 0
        %1925 = vmatpush1.bf16.msra.mxu0 0
        %1926 = vmatprep.subr.bf16.mxu0 0
        %1927 = vmatpush1.bf16.msra.mxu0 0
        %1928 = vmatprep.subr.bf16.mxu0 0
        %1929 = vmatpush1.bf16.msra.mxu0 0
        %1930 = vmatprep.subr.bf16.mxu0 0
        %1931 = vmatpush1.bf16.msra.mxu0 0
        %1932 = vmatprep.mubr.bf16.mxu0 0
        %1933 = vmatmul.mubr.bf16.gmra.mrb[0].mxu0 %v1889
        %v1934 = vpop.f32.mrb[0].mxu0
        %v1935 = vadd.f32 0.0, %v1934
        %v1936 = vpop.f32.mrb[0].mxu0
        %v1937 = vpop.f32.mrb[0].mxu0
        %v1938 = vadd.f32 0.0, %v1937
        %v1939 = vpop.f32.mrb[0].mxu0
        %1940 = vmatprep.mubr.bf16.mxu0 0
        %1941 = vmatmul.mubr.bf16.gmra.mrb[0].mxu0 %v1892
        %v1942 = vpop.f32.mrb[0].mxu0
        %v1943 = vadd.f32 0.0, %v1942
        %v1944 = vpop.f32.mrb[0].mxu0
        %v1945 = vpop.f32.mrb[0].mxu0
        %v1946 = vadd.f32 0.0, %v1945
        %v1947 = vpop.f32.mrb[0].mxu0
        %1948 = vmatprep.mubr.bf16.mxu0 0
        %1949 = vmatmul.mubr.bf16.gmra.mrb[0].mxu0 %v1895
        %v1950 = vpop.f32.mrb[0].mxu0
        %v1951 = vadd.f32 0.0, %v1950
        %v1952 = vpop.f32.mrb[0].mxu0
        %v1953 = vpop.f32.mrb[0].mxu0
        %v1954 = vadd.f32 0.0, %v1953
        %v1955 = vpop.f32.mrb[0].mxu0
        %1956 = vmatprep.mubr.bf16.mxu0 0
        %1957 = vmatmul.mubr.bf16.gmra.mrb[0].mxu0 %v1898
        %v1958 = vpop.f32.mrb[0].mxu0
        %v1959 = vadd.f32 0.0, %v1958
        %v1960 = vpop.f32.mrb[0].mxu0
        %v1961 = vpop.f32.mrb[0].mxu0
        %v1962 = vadd.f32 0.0, %v1961
        %v1963 = vpop.f32.mrb[0].mxu0
        %1964 = vdwg.mxu0
        %v1965 = vpack.c.bf16 %v1540, %v1540
        %v1967 = vsel %vm912, %v1965, 0
        %1969 = vmatprep.subr.bf16.mxu0 0
        %1970 = vmatpush1.bf16.msra.mxu0 %v1967
        %1971 = vmatprep.subr.bf16.mxu0 0
        %1972 = vmatpush1.bf16.msra.mxu0 0
        %1973 = vmatprep.subr.bf16.mxu0 0
        %1974 = vmatpush1.bf16.msra.mxu0 0
        %1975 = vmatprep.subr.bf16.mxu0 0
        %1976 = vmatpush1.bf16.msra.mxu0 0
        %1977 = vmatprep.subr.bf16.mxu0 0
        %1978 = vmatpush1.bf16.msra.mxu0 0
        %1979 = vmatprep.subr.bf16.mxu0 0
        %1980 = vmatpush1.bf16.msra.mxu0 0
        %1981 = vmatprep.subr.bf16.mxu0 0
        %1982 = vmatpush1.bf16.msra.mxu0 0
        %1983 = vmatprep.subr.bf16.mxu0 0
        %1984 = vmatpush1.bf16.msra.mxu0 0
        %1985 = vmatprep.subr.bf16.mxu0 0
        %1986 = vmatpush1.bf16.msra.mxu0 0
        %1987 = vmatprep.subr.bf16.mxu0 0
        %1988 = vmatpush1.bf16.msra.mxu0 0
        %1989 = vmatprep.subr.bf16.mxu0 0
        %1990 = vmatpush1.bf16.msra.mxu0 0
        %1991 = vmatprep.subr.bf16.mxu0 0
        %1992 = vmatpush1.bf16.msra.mxu0 0
        %1993 = vmatprep.subr.bf16.mxu0 0
        %1994 = vmatpush1.bf16.msra.mxu0 0
        %1995 = vmatprep.subr.bf16.mxu0 0
        %1996 = vmatpush1.bf16.msra.mxu0 0
        %1997 = vmatprep.subr.bf16.mxu0 0
        %1998 = vmatpush1.bf16.msra.mxu0 0
        %1999 = vmatprep.subr.bf16.mxu0 0
        %2000 = vmatpush1.bf16.msra.mxu0 0
        %2001 = vmatprep.mubr.bf16.mxu0 0
        %2002 = vmatmul.mubr.bf16.gmra.mrb[0].mxu0 %v1252
        %v2003 = vpop.f32.mrb[0].mxu0
        %v2004 = vadd.f32 0.0, %v2003
        %v2005 = vpop.f32.mrb[0].mxu0
        %v2006 = vpop.f32.mrb[0].mxu0
        %v2007 = vadd.f32 0.0, %v2006
        %v2008 = vpop.f32.mrb[0].mxu0
        %2009 = vmatprep.mubr.bf16.mxu0 0
        %2010 = vmatmul.mubr.bf16.gmra.mrb[0].mxu0 %v1255
        %v2011 = vpop.f32.mrb[0].mxu0
        %v2012 = vadd.f32 0.0, %v2011
        %v2013 = vpop.f32.mrb[0].mxu0
        %v2014 = vpop.f32.mrb[0].mxu0
        %v2015 = vadd.f32 0.0, %v2014
        %v2016 = vpop.f32.mrb[0].mxu0
        %2017 = vmatprep.mubr.bf16.mxu0 0
        %2018 = vmatmul.mubr.bf16.gmra.mrb[0].mxu0 %v1258
        %v2019 = vpop.f32.mrb[0].mxu0
        %v2020 = vadd.f32 0.0, %v2019
        %v2021 = vpop.f32.mrb[0].mxu0
        %v2022 = vpop.f32.mrb[0].mxu0
        %v2023 = vadd.f32 0.0, %v2022
        %v2024 = vpop.f32.mrb[0].mxu0
        %2025 = vmatprep.mubr.bf16.mxu0 0
        %2026 = vmatmul.mubr.bf16.gmra.mrb[0].mxu0 %v1261
        %v2027 = vpop.f32.mrb[0].mxu0
        %v2028 = vadd.f32 0.0, %v2027
        %v2029 = vpop.f32.mrb[0].mxu0
        %v2030 = vpop.f32.mrb[0].mxu0
        %v2031 = vadd.f32 0.0, %v2030
        %v2032 = vpop.f32.mrb[0].mxu0
        %2033 = vdwg.mxu0
        %v2034 = vmul.f32 %v1935, %v2004
        %v2035 = vmul.f32 %v1938, %v2007
        %v2036 = vmul.f32 %v1943, %v2012
        %v2037 = vmul.f32 %v1946, %v2015
        %v2038 = vmul.f32 %v1951, %v2020
        %v2039 = vmul.f32 %v1954, %v2023
        %v2040 = vmul.f32 %v1959, %v2028
        %v2041 = vmul.f32 %v1962, %v2031
        %v2042 = vpack.c.bf16 %v2035, %v2034
        %v2043 = vpack.c.bf16 %v2037, %v2036
        %v2044 = vpack.c.bf16 %v2039, %v2038
        %v2045 = vpack.c.bf16 %v2041, %v2040
        %s2046 = scalar_lea.vmem %s7, 1
        %v2047 = vld [vmem:[%s2046] sm:$0x1]
        %v2049 = vlaneseq
        %v2050 = vshrl.u32 %v2049, 7
        %v2051 = vsub.s32 0, %v2050
        %v2052 = vrot.slane %v2047, %v2051
        %2054 = vmatprep.subr.bf16.mxu0 0
        %2055 = vmatpush1.bf16.msra.mxu0 %v2042
        %2056 = vmatprep.subr.bf16.mxu0 0
        %2057 = vmatpush1.bf16.msra.mxu0 %v2043
        %2058 = vmatprep.subr.bf16.mxu0 0
        %2059 = vmatpush1.bf16.msra.mxu0 %v2044
        %2060 = vmatprep.subr.bf16.mxu0 0
        %2061 = vmatpush1.bf16.msra.mxu0 %v2045
        %2062 = vmatprep.subr.bf16.mxu0 0
        %2063 = vmatpush1.bf16.msra.mxu0 0
        %2064 = vmatprep.subr.bf16.mxu0 0
        %2065 = vmatpush1.bf16.msra.mxu0 0
        %2066 = vmatprep.subr.bf16.mxu0 0
        %2067 = vmatpush1.bf16.msra.mxu0 0
        %2068 = vmatprep.subr.bf16.mxu0 0
        %2069 = vmatpush1.bf16.msra.mxu0 0
        %2070 = vmatprep.subr.bf16.mxu0 0
        %2071 = vmatpush1.bf16.msra.mxu0 0
        %2072 = vmatprep.subr.bf16.mxu0 0
        %2073 = vmatpush1.bf16.msra.mxu0 0
        %2074 = vmatprep.subr.bf16.mxu0 0
        %2075 = vmatpush1.bf16.msra.mxu0 0
        %2076 = vmatprep.subr.bf16.mxu0 0
        %2077 = vmatpush1.bf16.msra.mxu0 0
        %2078 = vmatprep.subr.bf16.mxu0 0
        %2079 = vmatpush1.bf16.msra.mxu0 0
        %2080 = vmatprep.subr.bf16.mxu0 0
        %2081 = vmatpush1.bf16.msra.mxu0 0
        %2082 = vmatprep.subr.bf16.mxu0 0
        %2083 = vmatpush1.bf16.msra.mxu0 0
        %2084 = vmatprep.subr.bf16.mxu0 0
        %2085 = vmatpush1.bf16.msra.mxu0 0
        %2086 = vmatprep.mubr.bf16.mxu0 0
        %2087 = vmatmul.mubr.bf16.gmra.mrb[0].mxu0 %v1352
        %v2088 = vpop.f32.mrb[0].mxu0
        %v2089 = vadd.f32 %v2052, %v2088
        %v2090 = vpop.f32.mrb[0].mxu0
        %v2091 = vpop.f32.mrb[0].mxu0
        %v2092 = vpop.f32.mrb[0].mxu0
        %2093 = vdwg.mxu0
        %s2094 = scalar_lea.vmem %s9, 4
        %v2095 = vld [vmem:[%s2094] sm:$0x7]
        %s2096 = scalar_lea.vmem %s8, 16
        %v2097 = vld [vmem:[%s2096] sm:$0xf]
        %v2098 = vld [vmem:[%s2096 + $0x4] sm:$0xf]
        %v2099 = vld [vmem:[%s2096 + $0x8] sm:$0xf]
        %v2100 = vld [vmem:[%s2096 + $0xc] sm:$0xf]
        %v2101 = vpack.c.bf16 %v2089, %v2089
        %v2102 = vlaneseq
        %v2103 = vshrl.u32 %v2102, 7
        %v2104 = vsub.s32 0, %v2103
        %v2105 = vrot.slane %v2095, %v2104
        %v2110 = vunpack.c.l.b16 %v2097
        %v2111 = vunpack.c.l.b16 %v2098
        %v2112 = vunpack.c.l.b16 %v2099
        %v2113 = vunpack.c.l.b16 %v2100
        %v2114 = vpack.c.b16 %v2111, %v2110
        %v2115 = vpack.c.b16 %v2113, %v2112
        %v2119 = vsel %vm708, %v2101, 0
        %2121 = vmatprep.subr.bf16.mxu0 0
        %2122 = vmatpush1.bf16.msra.mxu0 %v2114
        %2123 = vmatprep.subr.bf16.mxu0 0
        %2124 = vmatpush1.bf16.msra.mxu0 %v2115
        %2125 = vmatprep.subr.bf16.mxu0 0
        %2126 = vmatpush1.bf16.msra.mxu0 0
        %2127 = vmatprep.subr.bf16.mxu0 0
        %2128 = vmatpush1.bf16.msra.mxu0 0
        %2129 = vmatprep.subr.bf16.mxu0 0
        %2130 = vmatpush1.bf16.msra.mxu0 0
        %2131 = vmatprep.subr.bf16.mxu0 0
        %2132 = vmatpush1.bf16.msra.mxu0 0
        %2133 = vmatprep.subr.bf16.mxu0 0
        %2134 = vmatpush1.bf16.msra.mxu0 0
        %2135 = vmatprep.subr.bf16.mxu0 0
        %2136 = vmatpush1.bf16.msra.mxu0 0
        %2137 = vmatprep.subr.bf16.mxu0 0
        %2138 = vmatpush1.bf16.msra.mxu0 0
        %2139 = vmatprep.subr.bf16.mxu0 0
        %2140 = vmatpush1.bf16.msra.mxu0 0
        %2141 = vmatprep.subr.bf16.mxu0 0
        %2142 = vmatpush1.bf16.msra.mxu0 0
        %2143 = vmatprep.subr.bf16.mxu0 0
        %2144 = vmatpush1.bf16.msra.mxu0 0
        %2145 = vmatprep.subr.bf16.mxu0 0
        %2146 = vmatpush1.bf16.msra.mxu0 0
        %2147 = vmatprep.subr.bf16.mxu0 0
        %2148 = vmatpush1.bf16.msra.mxu0 0
        %2149 = vmatprep.subr.bf16.mxu0 0
        %2150 = vmatpush1.bf16.msra.mxu0 0
        %2151 = vmatprep.subr.bf16.mxu0 0
        %2152 = vmatpush1.bf16.msra.mxu0 0
        %2153 = vmatprep.mubr.bf16.mxu0 0
        %2154 = vmatmul.mubr.bf16.gmra.mrb[0].mxu0 %v2119
        %v2155 = vpop.f32.mrb[0].mxu0
        %v2156 = vadd.f32 %v2105, %v2155
        %v2157 = vpop.f32.mrb[0].mxu0
        %v2158 = vpop.f32.mrb[0].mxu0
        %v2159 = vpop.f32.mrb[0].mxu0
        %2160 = vdwg.mxu0
        %v2161 = vsel %vm708, %v2156, 0.0
        %2162 = vadd.xlane.f32.xlu0 %v2161
        %v2163 = vpop.xlane.xlu0 %2162
        %v2164 = vmul.f32 %v2163, %v1462
        %v2165 = vsub.f32 %v2156, %v2164
        %v2166 = vmul.f32 %v2165, %v2165
        %v2167 = vsel %vm708, %v2166, 0.0
        %2168 = vadd.xlane.f32.xlu0 %v2167
        %v2169 = vpop.xlane.xlu0 %2168
        %v2170 = vmul.f32 %v2169, %v1462
        %v2171 = vadd.f32 %v2170, 1e-05
        %v2172 = vrsqrt.pop %v2171
        %v2173 = vmul.f32 %v2165, %v2172
        %v2174 = vlaneseq
        %v2175 = vshrl.u32 %v2174, 7
        %v2176 = vsub.s32 1, %v2175
        %v2177 = vrot.slane %v2095, %v2176
        %v2178 = vmul.f32 %v2173, %v2177
        %v2179 = vlaneseq
        %v2180 = vshrl.u32 %v2179, 7
        %v2181 = vsub.s32 2, %v2180
        %v2182 = vrot.slane %v2095, %v2181
        %v2183 = vadd.f32 %v2178, %v2182
        %v2184 = vmax.f32 %v2183, 0.0
        %v2185 = vld [vmem:[%s10] sm:$0xf]
        %v2186 = vld [vmem:[%s10 + $0x4] sm:$0xf]
        %v2187 = vld [vmem:[%s10 + $0x8] sm:$0xf]
        %v2188 = vld [vmem:[%s10 + $0xc] sm:$0xf]
        %v2189 = vpack.c.bf16 %v2184, %v2184
        %v2190 = vld [vmem:[%s11] sm:$0x1]
        %v2192 = vlaneseq
        %v2193 = vshrl.u32 %v2192, 7
        %v2194 = vsub.s32 0, %v2193
        %v2195 = vrot.slane %v2190, %v2194
        %v2201 = vunpack.c.l.b16 %v2185
        %v2202 = vunpack.c.l.b16 %v2186
        %v2203 = vunpack.c.l.b16 %v2187
        %v2204 = vunpack.c.l.b16 %v2188
        %v2205 = vpack.c.b16 %v2202, %v2201
        %v2206 = vpack.c.b16 %v2204, %v2203
        %v2210 = vsel %vm708, %v2189, 0
        %2212 = vmatprep.subr.bf16.mxu0 0
        %2213 = vmatpush1.bf16.msra.mxu0 %v2205
        %2214 = vmatprep.subr.bf16.mxu0 0
        %2215 = vmatpush1.bf16.msra.mxu0 %v2206
        %2216 = vmatprep.subr.bf16.mxu0 0
        %2217 = vmatpush1.bf16.msra.mxu0 0
        %2218 = vmatprep.subr.bf16.mxu0 0
        %2219 = vmatpush1.bf16.msra.mxu0 0
        %2220 = vmatprep.subr.bf16.mxu0 0
        %2221 = vmatpush1.bf16.msra.mxu0 0
        %2222 = vmatprep.subr.bf16.mxu0 0
        %2223 = vmatpush1.bf16.msra.mxu0 0
        %2224 = vmatprep.subr.bf16.mxu0 0
        %2225 = vmatpush1.bf16.msra.mxu0 0
        %2226 = vmatprep.subr.bf16.mxu0 0
        %2227 = vmatpush1.bf16.msra.mxu0 0
        %2228 = vmatprep.subr.bf16.mxu0 0
        %2229 = vmatpush1.bf16.msra.mxu0 0
        %2230 = vmatprep.subr.bf16.mxu0 0
        %2231 = vmatpush1.bf16.msra.mxu0 0
        %2232 = vmatprep.subr.bf16.mxu0 0
        %2233 = vmatpush1.bf16.msra.mxu0 0
        %2234 = vmatprep.subr.bf16.mxu0 0
        %2235 = vmatpush1.bf16.msra.mxu0 0
        %2236 = vmatprep.subr.bf16.mxu0 0
        %2237 = vmatpush1.bf16.msra.mxu0 0
        %2238 = vmatprep.subr.bf16.mxu0 0
        %2239 = vmatpush1.bf16.msra.mxu0 0
        %2240 = vmatprep.subr.bf16.mxu0 0
        %2241 = vmatpush1.bf16.msra.mxu0 0
        %2242 = vmatprep.subr.bf16.mxu0 0
        %2243 = vmatpush1.bf16.msra.mxu0 0
        %2244 = vmatprep.mubr.bf16.mxu0 0
        %2245 = vmatmul.mubr.bf16.gmra.mrb[0].mxu0 %v2210
        %v2246 = vpop.f32.mrb[0].mxu0
        %v2247 = vadd.f32 %v2195, %v2246
        %v2248 = vpop.f32.mrb[0].mxu0
        %v2249 = vpop.f32.mrb[0].mxu0
        %v2250 = vpop.f32.mrb[0].mxu0
        %2251 = vdwg.mxu0
        %v2252 = vpack.c.bf16 %v2247, %v2247
        %2254 = vrot.lane.b32.xlu0 %v2252, 96
        %v2255 = vpop.permute.xlu0 %2254
        %v2257 = vsel %vm1005, %v2252, 0
        %v2260 = vsel %vm1005, %v2255, 0
        %2262 = vmatprep.subr.bf16.mxu0 0
        %2263 = vmatpush1.bf16.xpose.msra.mxu0 %v2260
        %2264 = vmatprep.subr.bf16.mxu0 0
        %2265 = vmatpush1.bf16.xpose.msra.mxu0 0
        %2266 = vmatprep.subr.bf16.mxu0 0
        %2267 = vmatpush1.bf16.xpose.msra.mxu0 0
        %2268 = vmatprep.subr.bf16.mxu0 0
        %2269 = vmatpush1.bf16.xpose.msra.mxu0 0
        %2270 = vmatprep.subr.bf16.mxu0 0
        %2271 = vmatpush1.bf16.xpose.msra.mxu0 0
        %2272 = vmatprep.subr.bf16.mxu0 0
        %2273 = vmatpush1.bf16.xpose.msra.mxu0 0
        %2274 = vmatprep.subr.bf16.mxu0 0
        %2275 = vmatpush1.bf16.xpose.msra.mxu0 0
        %2276 = vmatprep.subr.bf16.mxu0 0
        %2277 = vmatpush1.bf16.xpose.msra.mxu0 0
        %2278 = vmatprep.subr.bf16.mxu0 0
        %2279 = vmatpush1.bf16.xpose.msra.mxu0 0
        %2280 = vmatprep.subr.bf16.mxu0 0
        %2281 = vmatpush1.bf16.xpose.msra.mxu0 0
        %2282 = vmatprep.subr.bf16.mxu0 0
        %2283 = vmatpush1.bf16.xpose.msra.mxu0 0
        %2284 = vmatprep.subr.bf16.mxu0 0
        %2285 = vmatpush1.bf16.xpose.msra.mxu0 0
        %2286 = vmatprep.subr.bf16.mxu0 0
        %2287 = vmatpush1.bf16.xpose.msra.mxu0 0
        %2288 = vmatprep.subr.bf16.mxu0 0
        %2289 = vmatpush1.bf16.xpose.msra.mxu0 0
        %2290 = vmatprep.subr.bf16.mxu0 0
        %2291 = vmatpush1.bf16.xpose.msra.mxu0 0
        %2292 = vmatprep.subr.bf16.mxu0 0
        %2293 = vmatpush1.bf16.xpose.msra.mxu0 0
        %2294 = vmatprep.mubr.bf16.mxu0 0
        %2295 = vmatmul.mubr.bf16.gmra.mrb[0].mxu0 %v2257
        %v2296 = vpop.f32.mrb[0].mxu0
        %v2297 = vadd.f32 0.0, %v2296
        %v2298 = vpop.f32.mrb[0].mxu0
        %v2299 = vpop.f32.mrb[0].mxu0
        %v2300 = vpop.f32.mrb[0].mxu0
        %2301 = vdwg.mxu0
        %v2302 = vmul.f32 %v2297, 0.35355338
        %v2303 = vsel %vm1005, %v2302, -inf
        %2304 = vmax.xlane.f32.xlu0 %v2303
        %v2305 = vpop.xlane.xlu0 %2304
        %v2306 = vsub.f32 %v2302, %v2305
        %v2307 = vmul.f32 %v2306, 1.442695
        %v2308 = vpow.pop %v2307
        %v2309 = vsel %vm1005, %v2308, 0.0
        %2310 = vadd.xlane.f32.xlu0 %v2309
        %v2311 = vpop.xlane.xlu0 %2310
        %v2312 = vrcp.pop %v2311
        %v2313 = vmul.f32 %v2308, %v2312
        %v2314 = vpack.c.bf16 %v2313, %v2313
        %2315 = vrot.lane.b32.xlu0 %v2252, 64
        %v2316 = vpop.permute.xlu0 %2315
        %v2318 = vsel %vm1005, %v2314, 0
        %v2321 = vsel %vm912, %v2316, 0
        %2323 = vmatprep.subr.bf16.mxu0 0
        %2324 = vmatpush1.bf16.msra.mxu0 %v2321
        %2325 = vmatprep.subr.bf16.mxu0 0
        %2326 = vmatpush1.bf16.msra.mxu0 0
        %2327 = vmatprep.subr.bf16.mxu0 0
        %2328 = vmatpush1.bf16.msra.mxu0 0
        %2329 = vmatprep.subr.bf16.mxu0 0
        %2330 = vmatpush1.bf16.msra.mxu0 0
        %2331 = vmatprep.subr.bf16.mxu0 0
        %2332 = vmatpush1.bf16.msra.mxu0 0
        %2333 = vmatprep.subr.bf16.mxu0 0
        %2334 = vmatpush1.bf16.msra.mxu0 0
        %2335 = vmatprep.subr.bf16.mxu0 0
        %2336 = vmatpush1.bf16.msra.mxu0 0
        %2337 = vmatprep.subr.bf16.mxu0 0
        %2338 = vmatpush1.bf16.msra.mxu0 0
        %2339 = vmatprep.subr.bf16.mxu0 0
        %2340 = vmatpush1.bf16.msra.mxu0 0
        %2341 = vmatprep.subr.bf16.mxu0 0
        %2342 = vmatpush1.bf16.msra.mxu0 0
        %2343 = vmatprep.subr.bf16.mxu0 0
        %2344 = vmatpush1.bf16.msra.mxu0 0
        %2345 = vmatprep.subr.bf16.mxu0 0
        %2346 = vmatpush1.bf16.msra.mxu0 0
        %2347 = vmatprep.subr.bf16.mxu0 0
        %2348 = vmatpush1.bf16.msra.mxu0 0
        %2349 = vmatprep.subr.bf16.mxu0 0
        %2350 = vmatpush1.bf16.msra.mxu0 0
        %2351 = vmatprep.subr.bf16.mxu0 0
        %2352 = vmatpush1.bf16.msra.mxu0 0
        %2353 = vmatprep.subr.bf16.mxu0 0
        %2354 = vmatpush1.bf16.msra.mxu0 0
        %2355 = vmatprep.mubr.bf16.mxu0 0
        %2356 = vmatmul.mubr.bf16.gmra.mrb[0].mxu0 %v2318
        %v2357 = vpop.f32.mrb[0].mxu0
        %v2358 = vadd.f32 0.0, %v2357
        %v2359 = vpop.f32.mrb[0].mxu0
        %v2360 = vpop.f32.mrb[0].mxu0
        %v2361 = vpop.f32.mrb[0].mxu0
        %2362 = vdwg.mxu0
        %2363 = vrot.lane.b32.xlu0 %v2252, 120
        %v2364 = vpop.permute.xlu0 %2363
        %2365 = vrot.lane.b32.xlu0 %v2252, 88
        %v2366 = vpop.permute.xlu0 %2365
        %v2368 = vsel %vm1005, %v2364, 0
        %v2371 = vsel %vm1005, %v2366, 0
        %2373 = vmatprep.subr.bf16.mxu0 0
        %2374 = vmatpush1.bf16.xpose.msra.mxu0 %v2371
        %2375 = vmatprep.subr.bf16.mxu0 0
        %2376 = vmatpush1.bf16.xpose.msra.mxu0 0
        %2377 = vmatprep.subr.bf16.mxu0 0
        %2378 = vmatpush1.bf16.xpose.msra.mxu0 0
        %2379 = vmatprep.subr.bf16.mxu0 0
        %2380 = vmatpush1.bf16.xpose.msra.mxu0 0
        %2381 = vmatprep.subr.bf16.mxu0 0
        %2382 = vmatpush1.bf16.xpose.msra.mxu0 0
        %2383 = vmatprep.subr.bf16.mxu0 0
        %2384 = vmatpush1.bf16.xpose.msra.mxu0 0
        %2385 = vmatprep.subr.bf16.mxu0 0
        %2386 = vmatpush1.bf16.xpose.msra.mxu0 0
        %2387 = vmatprep.subr.bf16.mxu0 0
        %2388 = vmatpush1.bf16.xpose.msra.mxu0 0
        %2389 = vmatprep.subr.bf16.mxu0 0
        %2390 = vmatpush1.bf16.xpose.msra.mxu0 0
        %2391 = vmatprep.subr.bf16.mxu0 0
        %2392 = vmatpush1.bf16.xpose.msra.mxu0 0
        %2393 = vmatprep.subr.bf16.mxu0 0
        %2394 = vmatpush1.bf16.xpose.msra.mxu0 0
        %2395 = vmatprep.subr.bf16.mxu0 0
        %2396 = vmatpush1.bf16.xpose.msra.mxu0 0
        %2397 = vmatprep.subr.bf16.mxu0 0
        %2398 = vmatpush1.bf16.xpose.msra.mxu0 0
        %2399 = vmatprep.subr.bf16.mxu0 0
        %2400 = vmatpush1.bf16.xpose.msra.mxu0 0
        %2401 = vmatprep.subr.bf16.mxu0 0
        %2402 = vmatpush1.bf16.xpose.msra.mxu0 0
        %2403 = vmatprep.subr.bf16.mxu0 0
        %2404 = vmatpush1.bf16.xpose.msra.mxu0 0
        %2405 = vmatprep.mubr.bf16.mxu0 0
        %2406 = vmatmul.mubr.bf16.gmra.mrb[0].mxu0 %v2368
        %v2407 = vpop.f32.mrb[0].mxu0
        %v2408 = vadd.f32 0.0, %v2407
        %v2409 = vpop.f32.mrb[0].mxu0
        %v2410 = vpop.f32.mrb[0].mxu0
        %v2411 = vpop.f32.mrb[0].mxu0
        %2412 = vdwg.mxu0
        %v2413 = vmul.f32 %v2408, 0.35355338
        %v2414 = vsel %vm1005, %v2413, -inf
        %2415 = vmax.xlane.f32.xlu0 %v2414
        %v2416 = vpop.xlane.xlu0 %2415
        %v2417 = vsub.f32 %v2413, %v2416
        %v2418 = vmul.f32 %v2417, 1.442695
        %v2419 = vpow.pop %v2418
        %v2420 = vsel %vm1005, %v2419, 0.0
        %2421 = vadd.xlane.f32.xlu0 %v2420
        %v2422 = vpop.xlane.xlu0 %2421
        %v2423 = vrcp.pop %v2422
        %v2424 = vmul.f32 %v2419, %v2423
        %v2425 = vpack.c.bf16 %v2424, %v2424
        %2426 = vrot.lane.b32.xlu0 %v2252, 56
        %v2427 = vpop.permute.xlu0 %2426
        %v2429 = vsel %vm1005, %v2425, 0
        %v2432 = vsel %vm912, %v2427, 0
        %2434 = vmatprep.subr.bf16.mxu0 0
        %2435 = vmatpush1.bf16.msra.mxu0 %v2432
        %2436 = vmatprep.subr.bf16.mxu0 0
        %2437 = vmatpush1.bf16.msra.mxu0 0
        %2438 = vmatprep.subr.bf16.mxu0 0
        %2439 = vmatpush1.bf16.msra.mxu0 0
        %2440 = vmatprep.subr.bf16.mxu0 0
        %2441 = vmatpush1.bf16.msra.mxu0 0
        %2442 = vmatprep.subr.bf16.mxu0 0
        %2443 = vmatpush1.bf16.msra.mxu0 0
        %2444 = vmatprep.subr.bf16.mxu0 0
        %2445 = vmatpush1.bf16.msra.mxu0 0
        %2446 = vmatprep.subr.bf16.mxu0 0
        %2447 = vmatpush1.bf16.msra.mxu0 0
        %2448 = vmatprep.subr.bf16.mxu0 0
        %2449 = vmatpush1.bf16.msra.mxu0 0
        %2450 = vmatprep.subr.bf16.mxu0 0
        %2451 = vmatpush1.bf16.msra.mxu0 0
        %2452 = vmatprep.subr.bf16.mxu0 0
        %2453 = vmatpush1.bf16.msra.mxu0 0
        %2454 = vmatprep.subr.bf16.mxu0 0
        %2455 = vmatpush1.bf16.msra.mxu0 0
        %2456 = vmatprep.subr.bf16.mxu0 0
        %2457 = vmatpush1.bf16.msra.mxu0 0
        %2458 = vmatprep.subr.bf16.mxu0 0
        %2459 = vmatpush1.bf16.msra.mxu0 0
        %2460 = vmatprep.subr.bf16.mxu0 0
        %2461 = vmatpush1.bf16.msra.mxu0 0
        %2462 = vmatprep.subr.bf16.mxu0 0
        %2463 = vmatpush1.bf16.msra.mxu0 0
        %2464 = vmatprep.subr.bf16.mxu0 0
        %2465 = vmatpush1.bf16.msra.mxu0 0
        %2466 = vmatprep.mubr.bf16.mxu0 0
        %2467 = vmatmul.mubr.bf16.gmra.mrb[0].mxu0 %v2429
        %v2468 = vpop.f32.mrb[0].mxu0
        %v2469 = vadd.f32 0.0, %v2468
        %v2470 = vpop.f32.mrb[0].mxu0
        %v2471 = vpop.f32.mrb[0].mxu0
        %v2472 = vpop.f32.mrb[0].mxu0
        %2473 = vdwg.mxu0
        %2474 = vrot.lane.b32.xlu0 %v2252, 112
        %v2475 = vpop.permute.xlu0 %2474
        %2476 = vrot.lane.b32.xlu0 %v2252, 80
        %v2477 = vpop.permute.xlu0 %2476
        %v2479 = vsel %vm1005, %v2475, 0
        %v2482 = vsel %vm1005, %v2477, 0
        %2484 = vmatprep.subr.bf16.mxu0 0
        %2485 = vmatpush1.bf16.xpose.msra.mxu0 %v2482
        %2486 = vmatprep.subr.bf16.mxu0 0
        %2487 = vmatpush1.bf16.xpose.msra.mxu0 0
        %2488 = vmatprep.subr.bf16.mxu0 0
        %2489 = vmatpush1.bf16.xpose.msra.mxu0 0
        %2490 = vmatprep.subr.bf16.mxu0 0
        %2491 = vmatpush1.bf16.xpose.msra.mxu0 0
        %2492 = vmatprep.subr.bf16.mxu0 0
        %2493 = vmatpush1.bf16.xpose.msra.mxu0 0
        %2494 = vmatprep.subr.bf16.mxu0 0
        %2495 = vmatpush1.bf16.xpose.msra.mxu0 0
        %2496 = vmatprep.subr.bf16.mxu0 0
        %2497 = vmatpush1.bf16.xpose.msra.mxu0 0
        %2498 = vmatprep.subr.bf16.mxu0 0
        %2499 = vmatpush1.bf16.xpose.msra.mxu0 0
        %2500 = vmatprep.subr.bf16.mxu0 0
        %2501 = vmatpush1.bf16.xpose.msra.mxu0 0
        %2502 = vmatprep.subr.bf16.mxu0 0
        %2503 = vmatpush1.bf16.xpose.msra.mxu0 0
        %2504 = vmatprep.subr.bf16.mxu0 0
        %2505 = vmatpush1.bf16.xpose.msra.mxu0 0
        %2506 = vmatprep.subr.bf16.mxu0 0
        %2507 = vmatpush1.bf16.xpose.msra.mxu0 0
        %2508 = vmatprep.subr.bf16.mxu0 0
        %2509 = vmatpush1.bf16.xpose.msra.mxu0 0
        %2510 = vmatprep.subr.bf16.mxu0 0
        %2511 = vmatpush1.bf16.xpose.msra.mxu0 0
        %2512 = vmatprep.subr.bf16.mxu0 0
        %2513 = vmatpush1.bf16.xpose.msra.mxu0 0
        %2514 = vmatprep.subr.bf16.mxu0 0
        %2515 = vmatpush1.bf16.xpose.msra.mxu0 0
        %2516 = vmatprep.mubr.bf16.mxu0 0
        %2517 = vmatmul.mubr.bf16.gmra.mrb[0].mxu0 %v2479
        %v2518 = vpop.f32.mrb[0].mxu0
        %v2519 = vadd.f32 0.0, %v2518
        %v2520 = vpop.f32.mrb[0].mxu0
        %v2521 = vpop.f32.mrb[0].mxu0
        %v2522 = vpop.f32.mrb[0].mxu0
        %2523 = vdwg.mxu0
        %v2524 = vmul.f32 %v2519, 0.35355338
        %v2525 = vsel %vm1005, %v2524, -inf
        %2526 = vmax.xlane.f32.xlu0 %v2525
        %v2527 = vpop.xlane.xlu0 %2526
        %v2528 = vsub.f32 %v2524, %v2527
        %v2529 = vmul.f32 %v2528, 1.442695
        %v2530 = vpow.pop %v2529
        %v2531 = vsel %vm1005, %v2530, 0.0
        %2532 = vadd.xlane.f32.xlu0 %v2531
        %v2533 = vpop.xlane.xlu0 %2532
        %v2534 = vrcp.pop %v2533
        %v2535 = vmul.f32 %v2530, %v2534
        %v2536 = vpack.c.bf16 %v2535, %v2535
        %2537 = vrot.lane.b32.xlu0 %v2252, 48
        %v2538 = vpop.permute.xlu0 %2537
        %v2540 = vsel %vm1005, %v2536, 0
        %v2543 = vsel %vm912, %v2538, 0
        %2545 = vmatprep.subr.bf16.mxu0 0
        %2546 = vmatpush1.bf16.msra.mxu0 %v2543
        %2547 = vmatprep.subr.bf16.mxu0 0
        %2548 = vmatpush1.bf16.msra.mxu0 0
        %2549 = vmatprep.subr.bf16.mxu0 0
        %2550 = vmatpush1.bf16.msra.mxu0 0
        %2551 = vmatprep.subr.bf16.mxu0 0
        %2552 = vmatpush1.bf16.msra.mxu0 0
        %2553 = vmatprep.subr.bf16.mxu0 0
        %2554 = vmatpush1.bf16.msra.mxu0 0
        %2555 = vmatprep.subr.bf16.mxu0 0
        %2556 = vmatpush1.bf16.msra.mxu0 0
        %2557 = vmatprep.subr.bf16.mxu0 0
        %2558 = vmatpush1.bf16.msra.mxu0 0
        %2559 = vmatprep.subr.bf16.mxu0 0
        %2560 = vmatpush1.bf16.msra.mxu0 0
        %2561 = vmatprep.subr.bf16.mxu0 0
        %2562 = vmatpush1.bf16.msra.mxu0 0
        %2563 = vmatprep.subr.bf16.mxu0 0
        %2564 = vmatpush1.bf16.msra.mxu0 0
        %2565 = vmatprep.subr.bf16.mxu0 0
        %2566 = vmatpush1.bf16.msra.mxu0 0
        %2567 = vmatprep.subr.bf16.mxu0 0
        %2568 = vmatpush1.bf16.msra.mxu0 0
        %2569 = vmatprep.subr.bf16.mxu0 0
        %2570 = vmatpush1.bf16.msra.mxu0 0
        %2571 = vmatprep.subr.bf16.mxu0 0
        %2572 = vmatpush1.bf16.msra.mxu0 0
        %2573 = vmatprep.subr.bf16.mxu0 0
        %2574 = vmatpush1.bf16.msra.mxu0 0
        %2575 = vmatprep.subr.bf16.mxu0 0
        %2576 = vmatpush1.bf16.msra.mxu0 0
        %2577 = vmatprep.mubr.bf16.mxu0 0
        %2578 = vmatmul.mubr.bf16.gmra.mrb[0].mxu0 %v2540
        %v2579 = vpop.f32.mrb[0].mxu0
        %v2580 = vadd.f32 0.0, %v2579
        %v2581 = vpop.f32.mrb[0].mxu0
        %v2582 = vpop.f32.mrb[0].mxu0
        %v2583 = vpop.f32.mrb[0].mxu0
        %2584 = vdwg.mxu0
        %2585 = vrot.lane.b32.xlu0 %v2252, 104
        %v2586 = vpop.permute.xlu0 %2585
        %2587 = vrot.lane.b32.xlu0 %v2252, 72
        %v2588 = vpop.permute.xlu0 %2587
        %v2590 = vsel %vm1005, %v2586, 0
        %v2593 = vsel %vm1005, %v2588, 0
        %2595 = vmatprep.subr.bf16.mxu0 0
        %2596 = vmatpush1.bf16.xpose.msra.mxu0 %v2593
        %2597 = vmatprep.subr.bf16.mxu0 0
        %2598 = vmatpush1.bf16.xpose.msra.mxu0 0
        %2599 = vmatprep.subr.bf16.mxu0 0
        %2600 = vmatpush1.bf16.xpose.msra.mxu0 0
        %2601 = vmatprep.subr.bf16.mxu0 0
        %2602 = vmatpush1.bf16.xpose.msra.mxu0 0
        %2603 = vmatprep.subr.bf16.mxu0 0
        %2604 = vmatpush1.bf16.xpose.msra.mxu0 0
        %2605 = vmatprep.subr.bf16.mxu0 0
        %2606 = vmatpush1.bf16.xpose.msra.mxu0 0
        %2607 = vmatprep.subr.bf16.mxu0 0
        %2608 = vmatpush1.bf16.xpose.msra.mxu0 0
        %2609 = vmatprep.subr.bf16.mxu0 0
        %2610 = vmatpush1.bf16.xpose.msra.mxu0 0
        %2611 = vmatprep.subr.bf16.mxu0 0
        %2612 = vmatpush1.bf16.xpose.msra.mxu0 0
        %2613 = vmatprep.subr.bf16.mxu0 0
        %2614 = vmatpush1.bf16.xpose.msra.mxu0 0
        %2615 = vmatprep.subr.bf16.mxu0 0
        %2616 = vmatpush1.bf16.xpose.msra.mxu0 0
        %2617 = vmatprep.subr.bf16.mxu0 0
        %2618 = vmatpush1.bf16.xpose.msra.mxu0 0
        %2619 = vmatprep.subr.bf16.mxu0 0
        %2620 = vmatpush1.bf16.xpose.msra.mxu0 0
        %2621 = vmatprep.subr.bf16.mxu0 0
        %2622 = vmatpush1.bf16.xpose.msra.mxu0 0
        %2623 = vmatprep.subr.bf16.mxu0 0
        %2624 = vmatpush1.bf16.xpose.msra.mxu0 0
        %2625 = vmatprep.subr.bf16.mxu0 0
        %2626 = vmatpush1.bf16.xpose.msra.mxu0 0
        %2627 = vmatprep.mubr.bf16.mxu0 0
        %2628 = vmatmul.mubr.bf16.gmra.mrb[0].mxu0 %v2590
        %v2629 = vpop.f32.mrb[0].mxu0
        %v2630 = vadd.f32 0.0, %v2629
        %v2631 = vpop.f32.mrb[0].mxu0
        %v2632 = vpop.f32.mrb[0].mxu0
        %v2633 = vpop.f32.mrb[0].mxu0
        %2634 = vdwg.mxu0
        %v2635 = vmul.f32 %v2630, 0.35355338
        %v2636 = vsel %vm1005, %v2635, -inf
        %2637 = vmax.xlane.f32.xlu0 %v2636
        %v2638 = vpop.xlane.xlu0 %2637
        %v2639 = vsub.f32 %v2635, %v2638
        %v2640 = vmul.f32 %v2639, 1.442695
        %v2641 = vpow.pop %v2640
        %v2642 = vsel %vm1005, %v2641, 0.0
        %2643 = vadd.xlane.f32.xlu0 %v2642
        %v2644 = vpop.xlane.xlu0 %2643
        %v2645 = vrcp.pop %v2644
        %v2646 = vmul.f32 %v2641, %v2645
        %v2647 = vpack.c.bf16 %v2646, %v2646
        %2648 = vrot.lane.b32.xlu0 %v2252, 40
        %v2649 = vpop.permute.xlu0 %2648
        %v2651 = vsel %vm1005, %v2647, 0
        %v2654 = vsel %vm912, %v2649, 0
        %2656 = vmatprep.subr.bf16.mxu0 0
        %2657 = vmatpush1.bf16.msra.mxu0 %v2654
        %2658 = vmatprep.subr.bf16.mxu0 0
        %2659 = vmatpush1.bf16.msra.mxu0 0
        %2660 = vmatprep.subr.bf16.mxu0 0
        %2661 = vmatpush1.bf16.msra.mxu0 0
        %2662 = vmatprep.subr.bf16.mxu0 0
        %2663 = vmatpush1.bf16.msra.mxu0 0
        %2664 = vmatprep.subr.bf16.mxu0 0
        %2665 = vmatpush1.bf16.msra.mxu0 0
        %2666 = vmatprep.subr.bf16.mxu0 0
        %2667 = vmatpush1.bf16.msra.mxu0 0
        %2668 = vmatprep.subr.bf16.mxu0 0
        %2669 = vmatpush1.bf16.msra.mxu0 0
        %2670 = vmatprep.subr.bf16.mxu0 0
        %2671 = vmatpush1.bf16.msra.mxu0 0
        %2672 = vmatprep.subr.bf16.mxu0 0
        %2673 = vmatpush1.bf16.msra.mxu0 0
        %2674 = vmatprep.subr.bf16.mxu0 0
        %2675 = vmatpush1.bf16.msra.mxu0 0
        %2676 = vmatprep.subr.bf16.mxu0 0
        %2677 = vmatpush1.bf16.msra.mxu0 0
        %2678 = vmatprep.subr.bf16.mxu0 0
        %2679 = vmatpush1.bf16.msra.mxu0 0
        %2680 = vmatprep.subr.bf16.mxu0 0
        %2681 = vmatpush1.bf16.msra.mxu0 0
        %2682 = vmatprep.subr.bf16.mxu0 0
        %2683 = vmatpush1.bf16.msra.mxu0 0
        %2684 = vmatprep.subr.bf16.mxu0 0
        %2685 = vmatpush1.bf16.msra.mxu0 0
        %2686 = vmatprep.subr.bf16.mxu0 0
        %2687 = vmatpush1.bf16.msra.mxu0 0
        %2688 = vmatprep.mubr.bf16.mxu0 0
        %2689 = vmatmul.mubr.bf16.gmra.mrb[0].mxu0 %v2651
        %v2690 = vpop.f32.mrb[0].mxu0
        %v2691 = vadd.f32 0.0, %v2690
        %v2692 = vpop.f32.mrb[0].mxu0
        %v2693 = vpop.f32.mrb[0].mxu0
        %v2694 = vpop.f32.mrb[0].mxu0
        %2695 = vdwg.mxu0
        %2697 = vrot.lane.b32.xlu0 %v2469, 8
        %v2698 = vpop.permute.xlu0 %2697
        %2701 = vrot.lane.b32.xlu0 %v2580, 16
        %v2702 = vpop.permute.xlu0 %2701
        %2705 = vrot.lane.b32.xlu0 %v2691, 24
        %v2706 = vpop.permute.xlu0 %2705
        %v2708 = vsel %vm1005, %v2358, %v2698
        %v2709 = vsel %vm786, %v2708, %v2702
        %vm2710 = vcmask 195584
        %v2711 = vsel %vm2710, %v2709, %v2706
        %v2712 = vld [vmem:[%s12] sm:$0xf]
        %v2713 = vld [vmem:[%s12 + $0x4] sm:$0xf]
        %v2714 = vld [vmem:[%s12 + $0x8] sm:$0xf]
        %v2715 = vld [vmem:[%s12 + $0xc] sm:$0xf]
        %v2716 = vpack.c.bf16 %v2711, %v2711
        %v2717 = vld [vmem:[%s13] sm:$0x1]
        %v2719 = vlaneseq
        %v2720 = vshrl.u32 %v2719, 7
        %v2721 = vsub.s32 0, %v2720
        %v2722 = vrot.slane %v2717, %v2721
        %v2728 = vunpack.c.l.b16 %v2712
        %v2729 = vunpack.c.l.b16 %v2713
        %v2730 = vunpack.c.l.b16 %v2714
        %v2731 = vunpack.c.l.b16 %v2715
        %v2732 = vpack.c.b16 %v2729, %v2728
        %v2733 = vpack.c.b16 %v2731, %v2730
        %v2737 = vsel %vm708, %v2716, 0
        %2739 = vmatprep.subr.bf16.mxu0 0
        %2740 = vmatpush1.bf16.msra.mxu0 %v2732
        %2741 = vmatprep.subr.bf16.mxu0 0
        %2742 = vmatpush1.bf16.msra.mxu0 %v2733
        %2743 = vmatprep.subr.bf16.mxu0 0
        %2744 = vmatpush1.bf16.msra.mxu0 0
        %2745 = vmatprep.subr.bf16.mxu0 0
        %2746 = vmatpush1.bf16.msra.mxu0 0
        %2747 = vmatprep.subr.bf16.mxu0 0
        %2748 = vmatpush1.bf16.msra.mxu0 0
        %2749 = vmatprep.subr.bf16.mxu0 0
        %2750 = vmatpush1.bf16.msra.mxu0 0
        %2751 = vmatprep.subr.bf16.mxu0 0
        %2752 = vmatpush1.bf16.msra.mxu0 0
        %2753 = vmatprep.subr.bf16.mxu0 0
        %2754 = vmatpush1.bf16.msra.mxu0 0
        %2755 = vmatprep.subr.bf16.mxu0 0
        %2756 = vmatpush1.bf16.msra.mxu0 0
        %2757 = vmatprep.subr.bf16.mxu0 0
        %2758 = vmatpush1.bf16.msra.mxu0 0
        %2759 = vmatprep.subr.bf16.mxu0 0
        %2760 = vmatpush1.bf16.msra.mxu0 0
        %2761 = vmatprep.subr.bf16.mxu0 0
        %2762 = vmatpush1.bf16.msra.mxu0 0
        %2763 = vmatprep.subr.bf16.mxu0 0
        %2764 = vmatpush1.bf16.msra.mxu0 0
        %2765 = vmatprep.subr.bf16.mxu0 0
        %2766 = vmatpush1.bf16.msra.mxu0 0
        %2767 = vmatprep.subr.bf16.mxu0 0
        %2768 = vmatpush1.bf16.msra.mxu0 0
        %2769 = vmatprep.subr.bf16.mxu0 0
        %2770 = vmatpush1.bf16.msra.mxu0 0
        %2771 = vmatprep.mubr.bf16.mxu0 0
        %2772 = vmatmul.mubr.bf16.gmra.mrb[0].mxu0 %v2737
        %v2773 = vpop.f32.mrb[0].mxu0
        %v2774 = vadd.f32 %v2722, %v2773
        %v2775 = vpop.f32.mrb[0].mxu0
        %v2776 = vpop.f32.mrb[0].mxu0
        %v2777 = vpop.f32.mrb[0].mxu0
        %2778 = vdwg.mxu0
        %v2779 = vld [vmem:[%s18] sm:$0xf]
        %v2780 = vadd.f32 %v2184, %v2774
        %v2781 = vsel %vm708, %v2780, 0.0
        %2782 = vadd.xlane.f32.xlu0 %v2781
        %v2783 = vpop.xlane.xlu0 %2782
        %v2784 = vmul.f32 %v2783, %v1462
        %v2785 = vsub.f32 %v2780, %v2784
        %v2786 = vmul.f32 %v2785, %v2785
        %v2787 = vsel %vm708, %v2786, 0.0
        %2788 = vadd.xlane.f32.xlu0 %v2787
        %v2789 = vpop.xlane.xlu0 %2788
        %v2790 = vmul.f32 %v2789, %v1462
        %v2791 = vadd.f32 %v2790, 1e-05
        %v2792 = vrsqrt.pop %v2791
        %v2793 = vmul.f32 %v2785, %v2792
        %v2794 = vlaneseq
        %v2795 = vshrl.u32 %v2794, 7
        %v2796 = vsub.s32 0, %v2795
        %v2797 = vrot.slane %v2779, %v2796
        %v2798 = vmul.f32 %v2793, %v2797
        %v2799 = vlaneseq
        %v2800 = vshrl.u32 %v2799, 7
        %v2801 = vsub.s32 1, %v2800
        %v2802 = vrot.slane %v2779, %v2801
        %v2803 = vadd.f32 %v2798, %v2802
        %v2804 = vld [vmem:[%s14] sm:$0xf]
        %v2805 = vld [vmem:[%s14 + $0x4] sm:$0xf]
        %v2806 = vld [vmem:[%s14 + $0x8] sm:$0xf]
        %v2807 = vld [vmem:[%s14 + $0xc] sm:$0xf]
        %v2808 = vpack.c.bf16 %v2803, %v2803
        %v2809 = vld [vmem:[%s15] sm:$0x1]
        %v2811 = vlaneseq
        %v2812 = vshrl.u32 %v2811, 7
        %v2813 = vsub.s32 0, %v2812
        %v2814 = vrot.slane %v2809, %v2813
        %v2820 = vunpack.c.l.b16 %v2804
        %v2821 = vunpack.c.l.b16 %v2805
        %v2822 = vunpack.c.l.b16 %v2806
        %v2823 = vunpack.c.l.b16 %v2807
        %v2824 = vpack.c.b16 %v2821, %v2820
        %v2825 = vpack.c.b16 %v2823, %v2822
        %v2829 = vsel %vm708, %v2808, 0
        %2831 = vmatprep.subr.bf16.mxu0 0
        %2832 = vmatpush1.bf16.msra.mxu0 %v2824
        %2833 = vmatprep.subr.bf16.mxu0 0
        %2834 = vmatpush1.bf16.msra.mxu0 %v2825
        %2835 = vmatprep.subr.bf16.mxu0 0
        %2836 = vmatpush1.bf16.msra.mxu0 0
        %2837 = vmatprep.subr.bf16.mxu0 0
        %2838 = vmatpush1.bf16.msra.mxu0 0
        %2839 = vmatprep.subr.bf16.mxu0 0
        %2840 = vmatpush1.bf16.msra.mxu0 0
        %2841 = vmatprep.subr.bf16.mxu0 0
        %2842 = vmatpush1.bf16.msra.mxu0 0
        %2843 = vmatprep.subr.bf16.mxu0 0
        %2844 = vmatpush1.bf16.msra.mxu0 0
        %2845 = vmatprep.subr.bf16.mxu0 0
        %2846 = vmatpush1.bf16.msra.mxu0 0
        %2847 = vmatprep.subr.bf16.mxu0 0
        %2848 = vmatpush1.bf16.msra.mxu0 0
        %2849 = vmatprep.subr.bf16.mxu0 0
        %2850 = vmatpush1.bf16.msra.mxu0 0
        %2851 = vmatprep.subr.bf16.mxu0 0
        %2852 = vmatpush1.bf16.msra.mxu0 0
        %2853 = vmatprep.subr.bf16.mxu0 0
        %2854 = vmatpush1.bf16.msra.mxu0 0
        %2855 = vmatprep.subr.bf16.mxu0 0
        %2856 = vmatpush1.bf16.msra.mxu0 0
        %2857 = vmatprep.subr.bf16.mxu0 0
        %2858 = vmatpush1.bf16.msra.mxu0 0
        %2859 = vmatprep.subr.bf16.mxu0 0
        %2860 = vmatpush1.bf16.msra.mxu0 0
        %2861 = vmatprep.subr.bf16.mxu0 0
        %2862 = vmatpush1.bf16.msra.mxu0 0
        %2863 = vmatprep.mubr.bf16.mxu0 0
        %2864 = vmatmul.mubr.bf16.gmra.mrb[0].mxu0 %v2829
        %v2865 = vpop.f32.mrb[0].mxu0
        %v2866 = vadd.f32 %v2814, %v2865
        %v2867 = vpop.f32.mrb[0].mxu0
        %v2868 = vpop.f32.mrb[0].mxu0
        %v2869 = vpop.f32.mrb[0].mxu0
        %2870 = vdwg.mxu0
        %v2871 = vmax.f32 %v2866, 0.0
        %v2872 = vld [vmem:[%s16] sm:$0xf]
        %v2873 = vld [vmem:[%s16 + $0x4] sm:$0xf]
        %v2874 = vld [vmem:[%s16 + $0x8] sm:$0xf]
        %v2875 = vld [vmem:[%s16 + $0xc] sm:$0xf]
        %v2876 = vld [vmem:[%s16 + $0x10] sm:$0xf]
        %v2877 = vld [vmem:[%s16 + $0x14] sm:$0xf]
        %v2878 = vld [vmem:[%s16 + $0x18] sm:$0xf]
        %v2879 = vld [vmem:[%s16 + $0x1c] sm:$0xf]
        %v2880 = vpack.c.bf16 %v2871, %v2871
        %v2881 = vld [vmem:[%s17] sm:$0x1]
        %v2883 = vlaneseq
        %v2884 = vshrl.u32 %v2883, 7
        %v2885 = vsub.s32 0, %v2884
        %v2886 = vrot.slane %v2881, %v2885
        %v2896 = vunpack.c.l.b16 %v2872
        %v2897 = vunpack.c.l.b16 %v2873
        %v2898 = vunpack.c.l.b16 %v2874
        %v2899 = vunpack.c.l.b16 %v2875
        %v2900 = vunpack.c.l.b16 %v2876
        %v2901 = vunpack.c.l.b16 %v2877
        %v2902 = vunpack.c.l.b16 %v2878
        %v2903 = vunpack.c.l.b16 %v2879
        %v2904 = vpack.c.b16 %v2897, %v2896
        %v2905 = vpack.c.b16 %v2899, %v2898
        %v2906 = vpack.c.b16 %v2901, %v2900
        %v2907 = vpack.c.b16 %v2903, %v2902
        %v2913 = vsel %vm1350, %v2880, 0
        %2915 = vmatprep.subr.bf16.mxu0 0
        %2916 = vmatpush1.bf16.msra.mxu0 %v2904
        %2917 = vmatprep.subr.bf16.mxu0 0
        %2918 = vmatpush1.bf16.msra.mxu0 %v2905
        %2919 = vmatprep.subr.bf16.mxu0 0
        %2920 = vmatpush1.bf16.msra.mxu0 %v2906
        %2921 = vmatprep.subr.bf16.mxu0 0
        %2922 = vmatpush1.bf16.msra.mxu0 %v2907
        %2923 = vmatprep.subr.bf16.mxu0 0
        %2924 = vmatpush1.bf16.msra.mxu0 0
        %2925 = vmatprep.subr.bf16.mxu0 0
        %2926 = vmatpush1.bf16.msra.mxu0 0
        %2927 = vmatprep.subr.bf16.mxu0 0
        %2928 = vmatpush1.bf16.msra.mxu0 0
        %2929 = vmatprep.subr.bf16.mxu0 0
        %2930 = vmatpush1.bf16.msra.mxu0 0
        %2931 = vmatprep.subr.bf16.mxu0 0
        %2932 = vmatpush1.bf16.msra.mxu0 0
        %2933 = vmatprep.subr.bf16.mxu0 0
        %2934 = vmatpush1.bf16.msra.mxu0 0
        %2935 = vmatprep.subr.bf16.mxu0 0
        %2936 = vmatpush1.bf16.msra.mxu0 0
        %2937 = vmatprep.subr.bf16.mxu0 0
        %2938 = vmatpush1.bf16.msra.mxu0 0
        %2939 = vmatprep.subr.bf16.mxu0 0
        %2940 = vmatpush1.bf16.msra.mxu0 0
        %2941 = vmatprep.subr.bf16.mxu0 0
        %2942 = vmatpush1.bf16.msra.mxu0 0
        %2943 = vmatprep.subr.bf16.mxu0 0
        %2944 = vmatpush1.bf16.msra.mxu0 0
        %2945 = vmatprep.subr.bf16.mxu0 0
        %2946 = vmatpush1.bf16.msra.mxu0 0
        %2947 = vmatprep.mubr.bf16.mxu0 0
        %2948 = vmatmul.mubr.bf16.gmra.mrb[0].mxu0 %v2913
        %v2949 = vpop.f32.mrb[0].mxu0
        %v2950 = vadd.f32 %v2886, %v2949
        %v2951 = vpop.f32.mrb[0].mxu0
        %v2952 = vpop.f32.mrb[0].mxu0
        %v2953 = vpop.f32.mrb[0].mxu0
        %2954 = vdwg.mxu0
        %v2955 = vadd.f32 %v2803, %v2950
        %v2956 = vsel %vm708, %v2955, 0.0
        %2957 = vadd.xlane.f32.xlu0 %v2956
        %v2958 = vpop.xlane.xlu0 %2957
        %v2959 = vmul.f32 %v2958, %v1462
        %v2960 = vsub.f32 %v2955, %v2959
        %v2961 = vmul.f32 %v2960, %v2960
        %v2962 = vsel %vm708, %v2961, 0.0
        %2963 = vadd.xlane.f32.xlu0 %v2962
        %v2964 = vpop.xlane.xlu0 %2963
        %v2965 = vmul.f32 %v2964, %v1462
        %v2966 = vadd.f32 %v2965, 1e-05
        %v2967 = vrsqrt.pop %v2966
        %v2968 = vmul.f32 %v2960, %v2967
        %v2969 = vlaneseq
        %v2970 = vshrl.u32 %v2969, 7
        %v2971 = vsub.s32 2, %v2970
        %v2972 = vrot.slane %v2779, %v2971
        %v2973 = vmul.f32 %v2968, %v2972
        %v2974 = vlaneseq
        %v2975 = vshrl.u32 %v2974, 7
        %v2976 = vsub.s32 3, %v2975
        %v2977 = vrot.slane %v2779, %v2976
        %v2978 = vadd.f32 %v2973, %v2977
        %s2979 = scalar_lea.vmem %s10, 16
        %v2980 = vld [vmem:[%s2979] sm:$0xf]
        %v2981 = vld [vmem:[%s2979 + $0x4] sm:$0xf]
        %v2982 = vld [vmem:[%s2979 + $0x8] sm:$0xf]
        %v2983 = vld [vmem:[%s2979 + $0xc] sm:$0xf]
        %v2984 = vpack.c.bf16 %v2978, %v2978
        %s2985 = scalar_lea.vmem %s11, 1
        %v2986 = vld [vmem:[%s2985] sm:$0x1]
        %v2988 = vlaneseq
        %v2989 = vshrl.u32 %v2988, 7
        %v2990 = vsub.s32 0, %v2989
        %v2991 = vrot.slane %v2986, %v2990
        %v2997 = vunpack.c.l.b16 %v2980
        %v2998 = vunpack.c.l.b16 %v2981
        %v2999 = vunpack.c.l.b16 %v2982
        %v3000 = vunpack.c.l.b16 %v2983
        %v3001 = vpack.c.b16 %v2998, %v2997
        %v3002 = vpack.c.b16 %v3000, %v2999
        %v3006 = vsel %vm708, %v2984, 0
        %3008 = vmatprep.subr.bf16.mxu0 0
        %3009 = vmatpush1.bf16.msra.mxu0 %v3001
        %3010 = vmatprep.subr.bf16.mxu0 0
        %3011 = vmatpush1.bf16.msra.mxu0 %v3002
        %3012 = vmatprep.subr.bf16.mxu0 0
        %3013 = vmatpush1.bf16.msra.mxu0 0
        %3014 = vmatprep.subr.bf16.mxu0 0
        %3015 = vmatpush1.bf16.msra.mxu0 0
        %3016 = vmatprep.subr.bf16.mxu0 0
        %3017 = vmatpush1.bf16.msra.mxu0 0
        %3018 = vmatprep.subr.bf16.mxu0 0
        %3019 = vmatpush1.bf16.msra.mxu0 0
        %3020 = vmatprep.subr.bf16.mxu0 0
        %3021 = vmatpush1.bf16.msra.mxu0 0
        %3022 = vmatprep.subr.bf16.mxu0 0
        %3023 = vmatpush1.bf16.msra.mxu0 0
        %3024 = vmatprep.subr.bf16.mxu0 0
        %3025 = vmatpush1.bf16.msra.mxu0 0
        %3026 = vmatprep.subr.bf16.mxu0 0
        %3027 = vmatpush1.bf16.msra.mxu0 0
        %3028 = vmatprep.subr.bf16.mxu0 0
        %3029 = vmatpush1.bf16.msra.mxu0 0
        %3030 = vmatprep.subr.bf16.mxu0 0
        %3031 = vmatpush1.bf16.msra.mxu0 0
        %3032 = vmatprep.subr.bf16.mxu0 0
        %3033 = vmatpush1.bf16.msra.mxu0 0
        %3034 = vmatprep.subr.bf16.mxu0 0
        %3035 = vmatpush1.bf16.msra.mxu0 0
        %3036 = vmatprep.subr.bf16.mxu0 0
        %3037 = vmatpush1.bf16.msra.mxu0 0
        %3038 = vmatprep.subr.bf16.mxu0 0
        %3039 = vmatpush1.bf16.msra.mxu0 0
        %3040 = vmatprep.mubr.bf16.mxu0 0
        %3041 = vmatmul.mubr.bf16.gmra.mrb[0].mxu0 %v3006
        %v3042 = vpop.f32.mrb[0].mxu0
        %v3043 = vadd.f32 %v2991, %v3042
        %v3044 = vpop.f32.mrb[0].mxu0
        %v3045 = vpop.f32.mrb[0].mxu0
        %v3046 = vpop.f32.mrb[0].mxu0
        %3047 = vdwg.mxu0
        %v3048 = vpack.c.bf16 %v3043, %v3043
        %3050 = vrot.lane.b32.xlu0 %v3048, 96
        %v3051 = vpop.permute.xlu0 %3050
        %v3053 = vsel %vm1005, %v3048, 0
        %v3056 = vsel %vm1005, %v3051, 0
        %3058 = vmatprep.subr.bf16.mxu0 0
        %3059 = vmatpush1.bf16.xpose.msra.mxu0 %v3056
        %3060 = vmatprep.subr.bf16.mxu0 0
        %3061 = vmatpush1.bf16.xpose.msra.mxu0 0
        %3062 = vmatprep.subr.bf16.mxu0 0
        %3063 = vmatpush1.bf16.xpose.msra.mxu0 0
        %3064 = vmatprep.subr.bf16.mxu0 0
        %3065 = vmatpush1.bf16.xpose.msra.mxu0 0
        %3066 = vmatprep.subr.bf16.mxu0 0
        %3067 = vmatpush1.bf16.xpose.msra.mxu0 0
        %3068 = vmatprep.subr.bf16.mxu0 0
        %3069 = vmatpush1.bf16.xpose.msra.mxu0 0
        %3070 = vmatprep.subr.bf16.mxu0 0
        %3071 = vmatpush1.bf16.xpose.msra.mxu0 0
        %3072 = vmatprep.subr.bf16.mxu0 0
        %3073 = vmatpush1.bf16.xpose.msra.mxu0 0
        %3074 = vmatprep.subr.bf16.mxu0 0
        %3075 = vmatpush1.bf16.xpose.msra.mxu0 0
        %3076 = vmatprep.subr.bf16.mxu0 0
        %3077 = vmatpush1.bf16.xpose.msra.mxu0 0
        %3078 = vmatprep.subr.bf16.mxu0 0
        %3079 = vmatpush1.bf16.xpose.msra.mxu0 0
        %3080 = vmatprep.subr.bf16.mxu0 0
        %3081 = vmatpush1.bf16.xpose.msra.mxu0 0
        %3082 = vmatprep.subr.bf16.mxu0 0
        %3083 = vmatpush1.bf16.xpose.msra.mxu0 0
        %3084 = vmatprep.subr.bf16.mxu0 0
        %3085 = vmatpush1.bf16.xpose.msra.mxu0 0
        %3086 = vmatprep.subr.bf16.mxu0 0
        %3087 = vmatpush1.bf16.xpose.msra.mxu0 0
        %3088 = vmatprep.subr.bf16.mxu0 0
        %3089 = vmatpush1.bf16.xpose.msra.mxu0 0
        %3090 = vmatprep.mubr.bf16.mxu0 0
        %3091 = vmatmul.mubr.bf16.gmra.mrb[0].mxu0 %v3053
        %v3092 = vpop.f32.mrb[0].mxu0
        %v3093 = vadd.f32 0.0, %v3092
        %v3094 = vpop.f32.mrb[0].mxu0
        %v3095 = vpop.f32.mrb[0].mxu0
        %v3096 = vpop.f32.mrb[0].mxu0
        %3097 = vdwg.mxu0
        %v3098 = vmul.f32 %v3093, 0.35355338
        %v3099 = vsel %vm1005, %v3098, -inf
        %3100 = vmax.xlane.f32.xlu0 %v3099
        %v3101 = vpop.xlane.xlu0 %3100
        %v3102 = vsub.f32 %v3098, %v3101
        %v3103 = vmul.f32 %v3102, 1.442695
        %v3104 = vpow.pop %v3103
        %v3105 = vsel %vm1005, %v3104, 0.0
        %3106 = vadd.xlane.f32.xlu0 %v3105
        %v3107 = vpop.xlane.xlu0 %3106
        %v3108 = vrcp.pop %v3107
        %v3109 = vmul.f32 %v3104, %v3108
        %v3110 = vpack.c.bf16 %v3109, %v3109
        %3111 = vrot.lane.b32.xlu0 %v3048, 64
        %v3112 = vpop.permute.xlu0 %3111
        %v3114 = vsel %vm1005, %v3110, 0
        %v3117 = vsel %vm912, %v3112, 0
        %3119 = vmatprep.subr.bf16.mxu0 0
        %3120 = vmatpush1.bf16.msra.mxu0 %v3117
        %3121 = vmatprep.subr.bf16.mxu0 0
        %3122 = vmatpush1.bf16.msra.mxu0 0
        %3123 = vmatprep.subr.bf16.mxu0 0
        %3124 = vmatpush1.bf16.msra.mxu0 0
        %3125 = vmatprep.subr.bf16.mxu0 0
        %3126 = vmatpush1.bf16.msra.mxu0 0
        %3127 = vmatprep.subr.bf16.mxu0 0
        %3128 = vmatpush1.bf16.msra.mxu0 0
        %3129 = vmatprep.subr.bf16.mxu0 0
        %3130 = vmatpush1.bf16.msra.mxu0 0
        %3131 = vmatprep.subr.bf16.mxu0 0
        %3132 = vmatpush1.bf16.msra.mxu0 0
        %3133 = vmatprep.subr.bf16.mxu0 0
        %3134 = vmatpush1.bf16.msra.mxu0 0
        %3135 = vmatprep.subr.bf16.mxu0 0
        %3136 = vmatpush1.bf16.msra.mxu0 0
        %3137 = vmatprep.subr.bf16.mxu0 0
        %3138 = vmatpush1.bf16.msra.mxu0 0
        %3139 = vmatprep.subr.bf16.mxu0 0
        %3140 = vmatpush1.bf16.msra.mxu0 0
        %3141 = vmatprep.subr.bf16.mxu0 0
        %3142 = vmatpush1.bf16.msra.mxu0 0
        %3143 = vmatprep.subr.bf16.mxu0 0
        %3144 = vmatpush1.bf16.msra.mxu0 0
        %3145 = vmatprep.subr.bf16.mxu0 0
        %3146 = vmatpush1.bf16.msra.mxu0 0
        %3147 = vmatprep.subr.bf16.mxu0 0
        %3148 = vmatpush1.bf16.msra.mxu0 0
        %3149 = vmatprep.subr.bf16.mxu0 0
        %3150 = vmatpush1.bf16.msra.mxu0 0
        %3151 = vmatprep.mubr.bf16.mxu0 0
        %3152 = vmatmul.mubr.bf16.gmra.mrb[0].mxu0 %v3114
        %v3153 = vpop.f32.mrb[0].mxu0
        %v3154 = vadd.f32 0.0, %v3153
        %v3155 = vpop.f32.mrb[0].mxu0
        %v3156 = vpop.f32.mrb[0].mxu0
        %v3157 = vpop.f32.mrb[0].mxu0
        %3158 = vdwg.mxu0
        %3159 = vrot.lane.b32.xlu0 %v3048, 120
        %v3160 = vpop.permute.xlu0 %3159
        %3161 = vrot.lane.b32.xlu0 %v3048, 88
        %v3162 = vpop.permute.xlu0 %3161
        %v3164 = vsel %vm1005, %v3160, 0
        %v3167 = vsel %vm1005, %v3162, 0
        %3169 = vmatprep.subr.bf16.mxu0 0
        %3170 = vmatpush1.bf16.xpose.msra.mxu0 %v3167
        %3171 = vmatprep.subr.bf16.mxu0 0
        %3172 = vmatpush1.bf16.xpose.msra.mxu0 0
        %3173 = vmatprep.subr.bf16.mxu0 0
        %3174 = vmatpush1.bf16.xpose.msra.mxu0 0
        %3175 = vmatprep.subr.bf16.mxu0 0
        %3176 = vmatpush1.bf16.xpose.msra.mxu0 0
        %3177 = vmatprep.subr.bf16.mxu0 0
        %3178 = vmatpush1.bf16.xpose.msra.mxu0 0
        %3179 = vmatprep.subr.bf16.mxu0 0
        %3180 = vmatpush1.bf16.xpose.msra.mxu0 0
        %3181 = vmatprep.subr.bf16.mxu0 0
        %3182 = vmatpush1.bf16.xpose.msra.mxu0 0
        %3183 = vmatprep.subr.bf16.mxu0 0
        %3184 = vmatpush1.bf16.xpose.msra.mxu0 0
        %3185 = vmatprep.subr.bf16.mxu0 0
        %3186 = vmatpush1.bf16.xpose.msra.mxu0 0
        %3187 = vmatprep.subr.bf16.mxu0 0
        %3188 = vmatpush1.bf16.xpose.msra.mxu0 0
        %3189 = vmatprep.subr.bf16.mxu0 0
        %3190 = vmatpush1.bf16.xpose.msra.mxu0 0
        %3191 = vmatprep.subr.bf16.mxu0 0
        %3192 = vmatpush1.bf16.xpose.msra.mxu0 0
        %3193 = vmatprep.subr.bf16.mxu0 0
        %3194 = vmatpush1.bf16.xpose.msra.mxu0 0
        %3195 = vmatprep.subr.bf16.mxu0 0
        %3196 = vmatpush1.bf16.xpose.msra.mxu0 0
        %3197 = vmatprep.subr.bf16.mxu0 0
        %3198 = vmatpush1.bf16.xpose.msra.mxu0 0
        %3199 = vmatprep.subr.bf16.mxu0 0
        %3200 = vmatpush1.bf16.xpose.msra.mxu0 0
        %3201 = vmatprep.mubr.bf16.mxu0 0
        %3202 = vmatmul.mubr.bf16.gmra.mrb[0].mxu0 %v3164
        %v3203 = vpop.f32.mrb[0].mxu0
        %v3204 = vadd.f32 0.0, %v3203
        %v3205 = vpop.f32.mrb[0].mxu0
        %v3206 = vpop.f32.mrb[0].mxu0
        %v3207 = vpop.f32.mrb[0].mxu0
        %3208 = vdwg.mxu0
        %v3209 = vmul.f32 %v3204, 0.35355338
        %v3210 = vsel %vm1005, %v3209, -inf
        %3211 = vmax.xlane.f32.xlu0 %v3210
        %v3212 = vpop.xlane.xlu0 %3211
        %v3213 = vsub.f32 %v3209, %v3212
        %v3214 = vmul.f32 %v3213, 1.442695
        %v3215 = vpow.pop %v3214
        %v3216 = vsel %vm1005, %v3215, 0.0
        %3217 = vadd.xlane.f32.xlu0 %v3216
        %v3218 = vpop.xlane.xlu0 %3217
        %v3219 = vrcp.pop %v3218
        %v3220 = vmul.f32 %v3215, %v3219
        %v3221 = vpack.c.bf16 %v3220, %v3220
        %3222 = vrot.lane.b32.xlu0 %v3048, 56
        %v3223 = vpop.permute.xlu0 %3222
        %v3225 = vsel %vm1005, %v3221, 0
        %v3228 = vsel %vm912, %v3223, 0
        %3230 = vmatprep.subr.bf16.mxu0 0
        %3231 = vmatpush1.bf16.msra.mxu0 %v3228
        %3232 = vmatprep.subr.bf16.mxu0 0
        %3233 = vmatpush1.bf16.msra.mxu0 0
        %3234 = vmatprep.subr.bf16.mxu0 0
        %3235 = vmatpush1.bf16.msra.mxu0 0
        %3236 = vmatprep.subr.bf16.mxu0 0
        %3237 = vmatpush1.bf16.msra.mxu0 0
        %3238 = vmatprep.subr.bf16.mxu0 0
        %3239 = vmatpush1.bf16.msra.mxu0 0
        %3240 = vmatprep.subr.bf16.mxu0 0
        %3241 = vmatpush1.bf16.msra.mxu0 0
        %3242 = vmatprep.subr.bf16.mxu0 0
        %3243 = vmatpush1.bf16.msra.mxu0 0
        %3244 = vmatprep.subr.bf16.mxu0 0
        %3245 = vmatpush1.bf16.msra.mxu0 0
        %3246 = vmatprep.subr.bf16.mxu0 0
        %3247 = vmatpush1.bf16.msra.mxu0 0
        %3248 = vmatprep.subr.bf16.mxu0 0
        %3249 = vmatpush1.bf16.msra.mxu0 0
        %3250 = vmatprep.subr.bf16.mxu0 0
        %3251 = vmatpush1.bf16.msra.mxu0 0
        %3252 = vmatprep.subr.bf16.mxu0 0
        %3253 = vmatpush1.bf16.msra.mxu0 0
        %3254 = vmatprep.subr.bf16.mxu0 0
        %3255 = vmatpush1.bf16.msra.mxu0 0
        %3256 = vmatprep.subr.bf16.mxu0 0
        %3257 = vmatpush1.bf16.msra.mxu0 0
        %3258 = vmatprep.subr.bf16.mxu0 0
        %3259 = vmatpush1.bf16.msra.mxu0 0
        %3260 = vmatprep.subr.bf16.mxu0 0
        %3261 = vmatpush1.bf16.msra.mxu0 0
        %3262 = vmatprep.mubr.bf16.mxu0 0
        %3263 = vmatmul.mubr.bf16.gmra.mrb[0].mxu0 %v3225
        %v3264 = vpop.f32.mrb[0].mxu0
        %v3265 = vadd.f32 0.0, %v3264
        %v3266 = vpop.f32.mrb[0].mxu0
        %v3267 = vpop.f32.mrb[0].mxu0
        %v3268 = vpop.f32.mrb[0].mxu0
        %3269 = vdwg.mxu0
        %3270 = vrot.lane.b32.xlu0 %v3048, 112
        %v3271 = vpop.permute.xlu0 %3270
        %3272 = vrot.lane.b32.xlu0 %v3048, 80
        %v3273 = vpop.permute.xlu0 %3272
        %v3275 = vsel %vm1005, %v3271, 0
        %v3278 = vsel %vm1005, %v3273, 0
        %3280 = vmatprep.subr.bf16.mxu0 0
        %3281 = vmatpush1.bf16.xpose.msra.mxu0 %v3278
        %3282 = vmatprep.subr.bf16.mxu0 0
        %3283 = vmatpush1.bf16.xpose.msra.mxu0 0
        %3284 = vmatprep.subr.bf16.mxu0 0
        %3285 = vmatpush1.bf16.xpose.msra.mxu0 0
        %3286 = vmatprep.subr.bf16.mxu0 0
        %3287 = vmatpush1.bf16.xpose.msra.mxu0 0
        %3288 = vmatprep.subr.bf16.mxu0 0
        %3289 = vmatpush1.bf16.xpose.msra.mxu0 0
        %3290 = vmatprep.subr.bf16.mxu0 0
        %3291 = vmatpush1.bf16.xpose.msra.mxu0 0
        %3292 = vmatprep.subr.bf16.mxu0 0
        %3293 = vmatpush1.bf16.xpose.msra.mxu0 0
        %3294 = vmatprep.subr.bf16.mxu0 0
        %3295 = vmatpush1.bf16.xpose.msra.mxu0 0
        %3296 = vmatprep.subr.bf16.mxu0 0
        %3297 = vmatpush1.bf16.xpose.msra.mxu0 0
        %3298 = vmatprep.subr.bf16.mxu0 0
        %3299 = vmatpush1.bf16.xpose.msra.mxu0 0
        %3300 = vmatprep.subr.bf16.mxu0 0
        %3301 = vmatpush1.bf16.xpose.msra.mxu0 0
        %3302 = vmatprep.subr.bf16.mxu0 0
        %3303 = vmatpush1.bf16.xpose.msra.mxu0 0
        %3304 = vmatprep.subr.bf16.mxu0 0
        %3305 = vmatpush1.bf16.xpose.msra.mxu0 0
        %3306 = vmatprep.subr.bf16.mxu0 0
        %3307 = vmatpush1.bf16.xpose.msra.mxu0 0
        %3308 = vmatprep.subr.bf16.mxu0 0
        %3309 = vmatpush1.bf16.xpose.msra.mxu0 0
        %3310 = vmatprep.subr.bf16.mxu0 0
        %3311 = vmatpush1.bf16.xpose.msra.mxu0 0
        %3312 = vmatprep.mubr.bf16.mxu0 0
        %3313 = vmatmul.mubr.bf16.gmra.mrb[0].mxu0 %v3275
        %v3314 = vpop.f32.mrb[0].mxu0
        %v3315 = vadd.f32 0.0, %v3314
        %v3316 = vpop.f32.mrb[0].mxu0
        %v3317 = vpop.f32.mrb[0].mxu0
        %v3318 = vpop.f32.mrb[0].mxu0
        %3319 = vdwg.mxu0
        %v3320 = vmul.f32 %v3315, 0.35355338
        %v3321 = vsel %vm1005, %v3320, -inf
        %3322 = vmax.xlane.f32.xlu0 %v3321
        %v3323 = vpop.xlane.xlu0 %3322
        %v3324 = vsub.f32 %v3320, %v3323
        %v3325 = vmul.f32 %v3324, 1.442695
        %v3326 = vpow.pop %v3325
        %v3327 = vsel %vm1005, %v3326, 0.0
        %3328 = vadd.xlane.f32.xlu0 %v3327
        %v3329 = vpop.xlane.xlu0 %3328
        %v3330 = vrcp.pop %v3329
        %v3331 = vmul.f32 %v3326, %v3330
        %v3332 = vpack.c.bf16 %v3331, %v3331
        %3333 = vrot.lane.b32.xlu0 %v3048, 48
        %v3334 = vpop.permute.xlu0 %3333
        %v3336 = vsel %vm1005, %v3332, 0
        %v3339 = vsel %vm912, %v3334, 0
        %3341 = vmatprep.subr.bf16.mxu0 0
        %3342 = vmatpush1.bf16.msra.mxu0 %v3339
        %3343 = vmatprep.subr.bf16.mxu0 0
        %3344 = vmatpush1.bf16.msra.mxu0 0
        %3345 = vmatprep.subr.bf16.mxu0 0
        %3346 = vmatpush1.bf16.msra.mxu0 0
        %3347 = vmatprep.subr.bf16.mxu0 0
        %3348 = vmatpush1.bf16.msra.mxu0 0
        %3349 = vmatprep.subr.bf16.mxu0 0
        %3350 = vmatpush1.bf16.msra.mxu0 0
        %3351 = vmatprep.subr.bf16.mxu0 0
        %3352 = vmatpush1.bf16.msra.mxu0 0
        %3353 = vmatprep.subr.bf16.mxu0 0
        %3354 = vmatpush1.bf16.msra.mxu0 0
        %3355 = vmatprep.subr.bf16.mxu0 0
        %3356 = vmatpush1.bf16.msra.mxu0 0
        %3357 = vmatprep.subr.bf16.mxu0 0
        %3358 = vmatpush1.bf16.msra.mxu0 0
        %3359 = vmatprep.subr.bf16.mxu0 0
        %3360 = vmatpush1.bf16.msra.mxu0 0
        %3361 = vmatprep.subr.bf16.mxu0 0
        %3362 = vmatpush1.bf16.msra.mxu0 0
        %3363 = vmatprep.subr.bf16.mxu0 0
        %3364 = vmatpush1.bf16.msra.mxu0 0
        %3365 = vmatprep.subr.bf16.mxu0 0
        %3366 = vmatpush1.bf16.msra.mxu0 0
        %3367 = vmatprep.subr.bf16.mxu0 0
        %3368 = vmatpush1.bf16.msra.mxu0 0
        %3369 = vmatprep.subr.bf16.mxu0 0
        %3370 = vmatpush1.bf16.msra.mxu0 0
        %3371 = vmatprep.subr.bf16.mxu0 0
        %3372 = vmatpush1.bf16.msra.mxu0 0
        %3373 = vmatprep.mubr.bf16.mxu0 0
        %3374 = vmatmul.mubr.bf16.gmra.mrb[0].mxu0 %v3336
        %v3375 = vpop.f32.mrb[0].mxu0
        %v3376 = vadd.f32 0.0, %v3375
        %v3377 = vpop.f32.mrb[0].mxu0
        %v3378 = vpop.f32.mrb[0].mxu0
        %v3379 = vpop.f32.mrb[0].mxu0
        %3380 = vdwg.mxu0
        %3381 = vrot.lane.b32.xlu0 %v3048, 104
        %v3382 = vpop.permute.xlu0 %3381
        %3383 = vrot.lane.b32.xlu0 %v3048, 72
        %v3384 = vpop.permute.xlu0 %3383
        %v3386 = vsel %vm1005, %v3382, 0
        %v3389 = vsel %vm1005, %v3384, 0
        %3391 = vmatprep.subr.bf16.mxu0 0
        %3392 = vmatpush1.bf16.xpose.msra.mxu0 %v3389
        %3393 = vmatprep.subr.bf16.mxu0 0
        %3394 = vmatpush1.bf16.xpose.msra.mxu0 0
        %3395 = vmatprep.subr.bf16.mxu0 0
        %3396 = vmatpush1.bf16.xpose.msra.mxu0 0
        %3397 = vmatprep.subr.bf16.mxu0 0
        %3398 = vmatpush1.bf16.xpose.msra.mxu0 0
        %3399 = vmatprep.subr.bf16.mxu0 0
        %3400 = vmatpush1.bf16.xpose.msra.mxu0 0
        %3401 = vmatprep.subr.bf16.mxu0 0
        %3402 = vmatpush1.bf16.xpose.msra.mxu0 0
        %3403 = vmatprep.subr.bf16.mxu0 0
        %3404 = vmatpush1.bf16.xpose.msra.mxu0 0
        %3405 = vmatprep.subr.bf16.mxu0 0
        %3406 = vmatpush1.bf16.xpose.msra.mxu0 0
        %3407 = vmatprep.subr.bf16.mxu0 0
        %3408 = vmatpush1.bf16.xpose.msra.mxu0 0
        %3409 = vmatprep.subr.bf16.mxu0 0
        %3410 = vmatpush1.bf16.xpose.msra.mxu0 0
        %3411 = vmatprep.subr.bf16.mxu0 0
        %3412 = vmatpush1.bf16.xpose.msra.mxu0 0
        %3413 = vmatprep.subr.bf16.mxu0 0
        %3414 = vmatpush1.bf16.xpose.msra.mxu0 0
        %3415 = vmatprep.subr.bf16.mxu0 0
        %3416 = vmatpush1.bf16.xpose.msra.mxu0 0
        %3417 = vmatprep.subr.bf16.mxu0 0
        %3418 = vmatpush1.bf16.xpose.msra.mxu0 0
        %3419 = vmatprep.subr.bf16.mxu0 0
        %3420 = vmatpush1.bf16.xpose.msra.mxu0 0
        %3421 = vmatprep.subr.bf16.mxu0 0
        %3422 = vmatpush1.bf16.xpose.msra.mxu0 0
        %3423 = vmatprep.mubr.bf16.mxu0 0
        %3424 = vmatmul.mubr.bf16.gmra.mrb[0].mxu0 %v3386
        %v3425 = vpop.f32.mrb[0].mxu0
        %v3426 = vadd.f32 0.0, %v3425
        %v3427 = vpop.f32.mrb[0].mxu0
        %v3428 = vpop.f32.mrb[0].mxu0
        %v3429 = vpop.f32.mrb[0].mxu0
        %3430 = vdwg.mxu0
        %v3431 = vmul.f32 %v3426, 0.35355338
        %v3432 = vsel %vm1005, %v3431, -inf
        %3433 = vmax.xlane.f32.xlu0 %v3432
        %v3434 = vpop.xlane.xlu0 %3433
        %v3435 = vsub.f32 %v3431, %v3434
        %v3436 = vmul.f32 %v3435, 1.442695
        %v3437 = vpow.pop %v3436
        %v3438 = vsel %vm1005, %v3437, 0.0
        %3439 = vadd.xlane.f32.xlu0 %v3438
        %v3440 = vpop.xlane.xlu0 %3439
        %v3441 = vrcp.pop %v3440
        %v3442 = vmul.f32 %v3437, %v3441
        %v3443 = vpack.c.bf16 %v3442, %v3442
        %3444 = vrot.lane.b32.xlu0 %v3048, 40
        %v3445 = vpop.permute.xlu0 %3444
        %v3447 = vsel %vm1005, %v3443, 0
        %v3450 = vsel %vm912, %v3445, 0
        %3452 = vmatprep.subr.bf16.mxu0 0
        %3453 = vmatpush1.bf16.msra.mxu0 %v3450
        %3454 = vmatprep.subr.bf16.mxu0 0
        %3455 = vmatpush1.bf16.msra.mxu0 0
        %3456 = vmatprep.subr.bf16.mxu0 0
        %3457 = vmatpush1.bf16.msra.mxu0 0
        %3458 = vmatprep.subr.bf16.mxu0 0
        %3459 = vmatpush1.bf16.msra.mxu0 0
        %3460 = vmatprep.subr.bf16.mxu0 0
        %3461 = vmatpush1.bf16.msra.mxu0 0
        %3462 = vmatprep.subr.bf16.mxu0 0
        %3463 = vmatpush1.bf16.msra.mxu0 0
        %3464 = vmatprep.subr.bf16.mxu0 0
        %3465 = vmatpush1.bf16.msra.mxu0 0
        %3466 = vmatprep.subr.bf16.mxu0 0
        %3467 = vmatpush1.bf16.msra.mxu0 0
        %3468 = vmatprep.subr.bf16.mxu0 0
        %3469 = vmatpush1.bf16.msra.mxu0 0
        %3470 = vmatprep.subr.bf16.mxu0 0
        %3471 = vmatpush1.bf16.msra.mxu0 0
        %3472 = vmatprep.subr.bf16.mxu0 0
        %3473 = vmatpush1.bf16.msra.mxu0 0
        %3474 = vmatprep.subr.bf16.mxu0 0
        %3475 = vmatpush1.bf16.msra.mxu0 0
        %3476 = vmatprep.subr.bf16.mxu0 0
        %3477 = vmatpush1.bf16.msra.mxu0 0
        %3478 = vmatprep.subr.bf16.mxu0 0
        %3479 = vmatpush1.bf16.msra.mxu0 0
        %3480 = vmatprep.subr.bf16.mxu0 0
        %3481 = vmatpush1.bf16.msra.mxu0 0
        %3482 = vmatprep.subr.bf16.mxu0 0
        %3483 = vmatpush1.bf16.msra.mxu0 0
        %3484 = vmatprep.mubr.bf16.mxu0 0
        %3485 = vmatmul.mubr.bf16.gmra.mrb[0].mxu0 %v3447
        %v3486 = vpop.f32.mrb[0].mxu0
        %v3487 = vadd.f32 0.0, %v3486
        %v3488 = vpop.f32.mrb[0].mxu0
        %v3489 = vpop.f32.mrb[0].mxu0
        %v3490 = vpop.f32.mrb[0].mxu0
        %3491 = vdwg.mxu0
        %3493 = vrot.lane.b32.xlu0 %v3265, 8
        %v3494 = vpop.permute.xlu0 %3493
        %3497 = vrot.lane.b32.xlu0 %v3376, 16
        %v3498 = vpop.permute.xlu0 %3497
        %3501 = vrot.lane.b32.xlu0 %v3487, 24
        %v3502 = vpop.permute.xlu0 %3501
        %v3504 = vsel %vm1005, %v3154, %v3494
        %v3505 = vsel %vm786, %v3504, %v3498
        %v3506 = vsel %vm2710, %v3505, %v3502
        %s3507 = scalar_lea.vmem %s12, 16
        %v3508 = vld [vmem:[%s3507] sm:$0xf]
        %v3509 = vld [vmem:[%s3507 + $0x4] sm:$0xf]
        %v3510 = vld [vmem:[%s3507 + $0x8] sm:$0xf]
        %v3511 = vld [vmem:[%s3507 + $0xc] sm:$0xf]
        %v3512 = vpack.c.bf16 %v3506, %v3506
        %s3513 = scalar_lea.vmem %s13, 1
        %v3514 = vld [vmem:[%s3513] sm:$0x1]
        %v3516 = vlaneseq
        %v3517 = vshrl.u32 %v3516, 7
        %v3518 = vsub.s32 0, %v3517
        %v3519 = vrot.slane %v3514, %v3518
        %v3525 = vunpack.c.l.b16 %v3508
        %v3526 = vunpack.c.l.b16 %v3509
        %v3527 = vunpack.c.l.b16 %v3510
        %v3528 = vunpack.c.l.b16 %v3511
        %v3529 = vpack.c.b16 %v3526, %v3525
        %v3530 = vpack.c.b16 %v3528, %v3527
        %v3534 = vsel %vm708, %v3512, 0
        %3536 = vmatprep.subr.bf16.mxu0 0
        %3537 = vmatpush1.bf16.msra.mxu0 %v3529
        %3538 = vmatprep.subr.bf16.mxu0 0
        %3539 = vmatpush1.bf16.msra.mxu0 %v3530
        %3540 = vmatprep.subr.bf16.mxu0 0
        %3541 = vmatpush1.bf16.msra.mxu0 0
        %3542 = vmatprep.subr.bf16.mxu0 0
        %3543 = vmatpush1.bf16.msra.mxu0 0
        %3544 = vmatprep.subr.bf16.mxu0 0
        %3545 = vmatpush1.bf16.msra.mxu0 0
        %3546 = vmatprep.subr.bf16.mxu0 0
        %3547 = vmatpush1.bf16.msra.mxu0 0
        %3548 = vmatprep.subr.bf16.mxu0 0
        %3549 = vmatpush1.bf16.msra.mxu0 0
        %3550 = vmatprep.subr.bf16.mxu0 0
        %3551 = vmatpush1.bf16.msra.mxu0 0
        %3552 = vmatprep.subr.bf16.mxu0 0
        %3553 = vmatpush1.bf16.msra.mxu0 0
        %3554 = vmatprep.subr.bf16.mxu0 0
        %3555 = vmatpush1.bf16.msra.mxu0 0
        %3556 = vmatprep.subr.bf16.mxu0 0
        %3557 = vmatpush1.bf16.msra.mxu0 0
        %3558 = vmatprep.subr.bf16.mxu0 0
        %3559 = vmatpush1.bf16.msra.mxu0 0
        %3560 = vmatprep.subr.bf16.mxu0 0
        %3561 = vmatpush1.bf16.msra.mxu0 0
        %3562 = vmatprep.subr.bf16.mxu0 0
        %3563 = vmatpush1.bf16.msra.mxu0 0
        %3564 = vmatprep.subr.bf16.mxu0 0
        %3565 = vmatpush1.bf16.msra.mxu0 0
        %3566 = vmatprep.subr.bf16.mxu0 0
        %3567 = vmatpush1.bf16.msra.mxu0 0
        %3568 = vmatprep.mubr.bf16.mxu0 0
        %3569 = vmatmul.mubr.bf16.gmra.mrb[0].mxu0 %v3534
        %v3570 = vpop.f32.mrb[0].mxu0
        %v3571 = vadd.f32 %v3519, %v3570
        %v3572 = vpop.f32.mrb[0].mxu0
        %v3573 = vpop.f32.mrb[0].mxu0
        %v3574 = vpop.f32.mrb[0].mxu0
        %3575 = vdwg.mxu0
        %s3576 = scalar_lea.vmem %s18, 4
        %v3577 = vld [vmem:[%s3576] sm:$0xf]
        %v3578 = vadd.f32 %v2978, %v3571
        %v3579 = vsel %vm708, %v3578, 0.0
        %3580 = vadd.xlane.f32.xlu0 %v3579
        %v3581 = vpop.xlane.xlu0 %3580
        %v3582 = vmul.f32 %v3581, %v1462
        %v3583 = vsub.f32 %v3578, %v3582
        %v3584 = vmul.f32 %v3583, %v3583
        %v3585 = vsel %vm708, %v3584, 0.0
        %3586 = vadd.xlane.f32.xlu0 %v3585
        %v3587 = vpop.xlane.xlu0 %3586
        %v3588 = vmul.f32 %v3587, %v1462
        %v3589 = vadd.f32 %v3588, 1e-05
        %v3590 = vrsqrt.pop %v3589
        %v3591 = vmul.f32 %v3583, %v3590
        %v3592 = vlaneseq
        %v3593 = vshrl.u32 %v3592, 7
        %v3594 = vsub.s32 0, %v3593
        %v3595 = vrot.slane %v3577, %v3594
        %v3596 = vmul.f32 %v3591, %v3595
        %v3597 = vlaneseq
        %v3598 = vshrl.u32 %v3597, 7
        %v3599 = vsub.s32 1, %v3598
        %v3600 = vrot.slane %v3577, %v3599
        %v3601 = vadd.f32 %v3596, %v3600
        %s3602 = scalar_lea.vmem %s14, 16
        %v3603 = vld [vmem:[%s3602] sm:$0xf]
        %v3604 = vld [vmem:[%s3602 + $0x4] sm:$0xf]
        %v3605 = vld [vmem:[%s3602 + $0x8] sm:$0xf]
        %v3606 = vld [vmem:[%s3602 + $0xc] sm:$0xf]
        %v3607 = vpack.c.bf16 %v3601, %v3601
        %s3608 = scalar_lea.vmem %s15, 1
        %v3609 = vld [vmem:[%s3608] sm:$0x1]
        %v3611 = vlaneseq
        %v3612 = vshrl.u32 %v3611, 7
        %v3613 = vsub.s32 0, %v3612
        %v3614 = vrot.slane %v3609, %v3613
        %v3620 = vunpack.c.l.b16 %v3603
        %v3621 = vunpack.c.l.b16 %v3604
        %v3622 = vunpack.c.l.b16 %v3605
        %v3623 = vunpack.c.l.b16 %v3606
        %v3624 = vpack.c.b16 %v3621, %v3620
        %v3625 = vpack.c.b16 %v3623, %v3622
        %v3629 = vsel %vm708, %v3607, 0
        %3631 = vmatprep.subr.bf16.mxu0 0
        %3632 = vmatpush1.bf16.msra.mxu0 %v3624
        %3633 = vmatprep.subr.bf16.mxu0 0
        %3634 = vmatpush1.bf16.msra.mxu0 %v3625
        %3635 = vmatprep.subr.bf16.mxu0 0
        %3636 = vmatpush1.bf16.msra.mxu0 0
        %3637 = vmatprep.subr.bf16.mxu0 0
        %3638 = vmatpush1.bf16.msra.mxu0 0
        %3639 = vmatprep.subr.bf16.mxu0 0
        %3640 = vmatpush1.bf16.msra.mxu0 0
        %3641 = vmatprep.subr.bf16.mxu0 0
        %3642 = vmatpush1.bf16.msra.mxu0 0
        %3643 = vmatprep.subr.bf16.mxu0 0
        %3644 = vmatpush1.bf16.msra.mxu0 0
        %3645 = vmatprep.subr.bf16.mxu0 0
        %3646 = vmatpush1.bf16.msra.mxu0 0
        %3647 = vmatprep.subr.bf16.mxu0 0
        %3648 = vmatpush1.bf16.msra.mxu0 0
        %3649 = vmatprep.subr.bf16.mxu0 0
        %3650 = vmatpush1.bf16.msra.mxu0 0
        %3651 = vmatprep.subr.bf16.mxu0 0
        %3652 = vmatpush1.bf16.msra.mxu0 0
        %3653 = vmatprep.subr.bf16.mxu0 0
        %3654 = vmatpush1.bf16.msra.mxu0 0
        %3655 = vmatprep.subr.bf16.mxu0 0
        %3656 = vmatpush1.bf16.msra.mxu0 0
        %3657 = vmatprep.subr.bf16.mxu0 0
        %3658 = vmatpush1.bf16.msra.mxu0 0
        %3659 = vmatprep.subr.bf16.mxu0 0
        %3660 = vmatpush1.bf16.msra.mxu0 0
        %3661 = vmatprep.subr.bf16.mxu0 0
        %3662 = vmatpush1.bf16.msra.mxu0 0
        %3663 = vmatprep.mubr.bf16.mxu0 0
        %3664 = vmatmul.mubr.bf16.gmra.mrb[0].mxu0 %v3629
        %v3665 = vpop.f32.mrb[0].mxu0
        %v3666 = vadd.f32 %v3614, %v3665
        %v3667 = vpop.f32.mrb[0].mxu0
        %v3668 = vpop.f32.mrb[0].mxu0
        %v3669 = vpop.f32.mrb[0].mxu0
        %3670 = vdwg.mxu0
        %v3671 = vmax.f32 %v3666, 0.0
        %s3672 = scalar_lea.vmem %s16, 32
        %v3673 = vld [vmem:[%s3672] sm:$0xf]
        %v3674 = vld [vmem:[%s3672 + $0x4] sm:$0xf]
        %v3675 = vld [vmem:[%s3672 + $0x8] sm:$0xf]
        %v3676 = vld [vmem:[%s3672 + $0xc] sm:$0xf]
        %v3677 = vld [vmem:[%s3672 + $0x10] sm:$0xf]
        %v3678 = vld [vmem:[%s3672 + $0x14] sm:$0xf]
        %v3679 = vld [vmem:[%s3672 + $0x18] sm:$0xf]
        %v3680 = vld [vmem:[%s3672 + $0x1c] sm:$0xf]
        %v3681 = vpack.c.bf16 %v3671, %v3671
        %s3682 = scalar_lea.vmem %s17, 1
        %v3683 = vld [vmem:[%s3682] sm:$0x1]
        %v3685 = vlaneseq
        %v3686 = vshrl.u32 %v3685, 7
        %v3687 = vsub.s32 0, %v3686
        %v3688 = vrot.slane %v3683, %v3687
        %v3698 = vunpack.c.l.b16 %v3673
        %v3699 = vunpack.c.l.b16 %v3674
        %v3700 = vunpack.c.l.b16 %v3675
        %v3701 = vunpack.c.l.b16 %v3676
        %v3702 = vunpack.c.l.b16 %v3677
        %v3703 = vunpack.c.l.b16 %v3678
        %v3704 = vunpack.c.l.b16 %v3679
        %v3705 = vunpack.c.l.b16 %v3680
        %v3706 = vpack.c.b16 %v3699, %v3698
        %v3707 = vpack.c.b16 %v3701, %v3700
        %v3708 = vpack.c.b16 %v3703, %v3702
        %v3709 = vpack.c.b16 %v3705, %v3704
        %v3715 = vsel %vm1350, %v3681, 0
        %3717 = vmatprep.subr.bf16.mxu0 0
        %3718 = vmatpush1.bf16.msra.mxu0 %v3706
        %3719 = vmatprep.subr.bf16.mxu0 0
        %3720 = vmatpush1.bf16.msra.mxu0 %v3707
        %3721 = vmatprep.subr.bf16.mxu0 0
        %3722 = vmatpush1.bf16.msra.mxu0 %v3708
        %3723 = vmatprep.subr.bf16.mxu0 0
        %3724 = vmatpush1.bf16.msra.mxu0 %v3709
        %3725 = vmatprep.subr.bf16.mxu0 0
        %3726 = vmatpush1.bf16.msra.mxu0 0
        %3727 = vmatprep.subr.bf16.mxu0 0
        %3728 = vmatpush1.bf16.msra.mxu0 0
        %3729 = vmatprep.subr.bf16.mxu0 0
        %3730 = vmatpush1.bf16.msra.mxu0 0
        %3731 = vmatprep.subr.bf16.mxu0 0
        %3732 = vmatpush1.bf16.msra.mxu0 0
        %3733 = vmatprep.subr.bf16.mxu0 0
        %3734 = vmatpush1.bf16.msra.mxu0 0
        %3735 = vmatprep.subr.bf16.mxu0 0
        %3736 = vmatpush1.bf16.msra.mxu0 0
        %3737 = vmatprep.subr.bf16.mxu0 0
        %3738 = vmatpush1.bf16.msra.mxu0 0
        %3739 = vmatprep.subr.bf16.mxu0 0
        %3740 = vmatpush1.bf16.msra.mxu0 0
        %3741 = vmatprep.subr.bf16.mxu0 0
        %3742 = vmatpush1.bf16.msra.mxu0 0
        %3743 = vmatprep.subr.bf16.mxu0 0
        %3744 = vmatpush1.bf16.msra.mxu0 0
        %3745 = vmatprep.subr.bf16.mxu0 0
        %3746 = vmatpush1.bf16.msra.mxu0 0
        %3747 = vmatprep.subr.bf16.mxu0 0
        %3748 = vmatpush1.bf16.msra.mxu0 0
        %3749 = vmatprep.mubr.bf16.mxu0 0
        %3750 = vmatmul.mubr.bf16.gmra.mrb[0].mxu0 %v3715
        %v3751 = vpop.f32.mrb[0].mxu0
        %v3752 = vadd.f32 %v3688, %v3751
        %v3753 = vpop.f32.mrb[0].mxu0
        %v3754 = vpop.f32.mrb[0].mxu0
        %v3755 = vpop.f32.mrb[0].mxu0
        %3756 = vdwg.mxu0
        %v3757 = vadd.f32 %v3601, %v3752
        %v3758 = vsel %vm708, %v3757, 0.0
        %3759 = vadd.xlane.f32.xlu0 %v3758
        %v3760 = vpop.xlane.xlu0 %3759
        %v3761 = vmul.f32 %v3760, %v1462
        %v3762 = vsub.f32 %v3757, %v3761
        %v3763 = vmul.f32 %v3762, %v3762
        %v3764 = vsel %vm708, %v3763, 0.0
        %3765 = vadd.xlane.f32.xlu0 %v3764
        %v3766 = vpop.xlane.xlu0 %3765
        %v3767 = vmul.f32 %v3766, %v1462
        %v3768 = vadd.f32 %v3767, 1e-05
        %v3769 = vrsqrt.pop %v3768
        %v3770 = vmul.f32 %v3762, %v3769
        %v3771 = vlaneseq
        %v3772 = vshrl.u32 %v3771, 7
        %v3773 = vsub.s32 2, %v3772
        %v3774 = vrot.slane %v3577, %v3773
        %v3775 = vmul.f32 %v3770, %v3774
        %v3776 = vlaneseq
        %v3777 = vshrl.u32 %v3776, 7
        %v3778 = vsub.s32 3, %v3777
        %v3779 = vrot.slane %v3577, %v3778
        %v3780 = vadd.f32 %v3775, %v3779
        %v3781 = vsel %vm708, %v3780, 0.0
        %v3782 = vrot.slane %v3781, 4
        %v3783 = vadd.f32 %v3781, %v3782
        %v3784 = vrot.slane %v3783, 2
        %v3785 = vadd.f32 %v3783, %v3784
        %v3786 = vrot.slane %v3785, 1
        %v3787 = vadd.f32 %v3785, %v3786
        %v3788 = vrcp.pop 8.0
        %v3789 = vmul.f32 %v3787, %v3788
        %v3790 = vld [vmem:[%s19] sm:$0xf]
        %v3791 = vld [vmem:[%s19 + $0x4] sm:$0xf]
        %v3792 = vld [vmem:[%s19 + $0x8] sm:$0xf]
        %v3793 = vld [vmem:[%s19 + $0xc] sm:$0xf]
        %v3794 = vpack.c.bf16 %v3789, %v3789
        %v3795 = vld [vmem:[%s20] sm:$0x1]
        %v3800 = vunpack.c.l.b16 %v3790
        %v3801 = vunpack.c.l.b16 %v3791
        %v3802 = vunpack.c.l.b16 %v3792
        %v3803 = vunpack.c.l.b16 %v3793
        %v3804 = vpack.c.b16 %v3801, %v3800
        %v3805 = vpack.c.b16 %v3803, %v3802
        %v3809 = vsel %vm708, %v3794, 0
        %3811 = vmatprep.subr.bf16.mxu0 0
        %3812 = vmatpush1.bf16.msra.mxu0 %v3804
        %3813 = vmatprep.subr.bf16.mxu0 0
        %3814 = vmatpush1.bf16.msra.mxu0 %v3805
        %3815 = vmatprep.subr.bf16.mxu0 0
        %3816 = vmatpush1.bf16.msra.mxu0 0
        %3817 = vmatprep.subr.bf16.mxu0 0
        %3818 = vmatpush1.bf16.msra.mxu0 0
        %3819 = vmatprep.subr.bf16.mxu0 0
        %3820 = vmatpush1.bf16.msra.mxu0 0
        %3821 = vmatprep.subr.bf16.mxu0 0
        %3822 = vmatpush1.bf16.msra.mxu0 0
        %3823 = vmatprep.subr.bf16.mxu0 0
        %3824 = vmatpush1.bf16.msra.mxu0 0
        %3825 = vmatprep.subr.bf16.mxu0 0
        %3826 = vmatpush1.bf16.msra.mxu0 0
        %3827 = vmatprep.subr.bf16.mxu0 0
        %3828 = vmatpush1.bf16.msra.mxu0 0
        %3829 = vmatprep.subr.bf16.mxu0 0
        %3830 = vmatpush1.bf16.msra.mxu0 0
        %3831 = vmatprep.subr.bf16.mxu0 0
        %3832 = vmatpush1.bf16.msra.mxu0 0
        %3833 = vmatprep.subr.bf16.mxu0 0
        %3834 = vmatpush1.bf16.msra.mxu0 0
        %3835 = vmatprep.subr.bf16.mxu0 0
        %3836 = vmatpush1.bf16.msra.mxu0 0
        %3837 = vmatprep.subr.bf16.mxu0 0
        %3838 = vmatpush1.bf16.msra.mxu0 0
        %3839 = vmatprep.subr.bf16.mxu0 0
        %3840 = vmatpush1.bf16.msra.mxu0 0
        %3841 = vmatprep.subr.bf16.mxu0 0
        %3842 = vmatpush1.bf16.msra.mxu0 0
        %3843 = vmatprep.mubr.bf16.mxu0 0
        %3844 = vmatmul.mubr.bf16.gmra.mrb[0].mxu0 %v3809
        %v3845 = vpop.f32.mrb[0].mxu0
        %v3846 = vadd.f32 %v3795, %v3845
        %v3847 = vpop.f32.mrb[0].mxu0
        %v3848 = vpop.f32.mrb[0].mxu0
        %v3849 = vpop.f32.mrb[0].mxu0
        %3850 = vdwg.mxu0
        %vm3851 = vcmask 57344
        %3852 = vst.msk [vmem:[%s661] sm:$0x1] %vm3851, %v3846
        %s3853 = sand.u32 %s494, 1
        %s3854 = scalar_lea.sflag [#allocation3], %s3853
        %s3855 = sand.u32 %s494, 1
        %s3856 = scalar_lea.vmem [#allocation2], %s3855
        // Predicated region
        $region105: #{forward.1} parent=103 // pred_check
          %p3857 = pneg %p504
        $region106: #{forward.1} parent=103 // pred_check_branch
          %3859 = sbr.rel (%p3857) target = $region108
        $region107: #{forward.1} parent=103 // pred_region
          %s3861 = ssub.s32 16, 16
          %3862 = vsyncadd %s3854, %s3861
          %s3863 = smul.addr %s35, 16
          %s3864 = scalar_lea.hbm %s21, %s3863
          %s3866 = sshll.u32 %s3856, 4
          %s3867 = int_to_ptr.vmem [resolvable:$true] %s3866
          %3869 = dma.vmem_to_hbm [thread:$0]  %s3867, 16, %s3864, %s3854
        $region108: #{forward.1} parent=103 // pred_fallthru
          _
      $region104: #{forward.1} parent=5 // pred_fallthru
        _
      %p3870 = scmp.le.s32.totalorder 2, %s30
      // Predicated region
      $region109: #{forward.1} parent=5 // pred_check
        %p3871 = pneg %p3870
      $region110: #{forward.1} parent=5 // pred_check_branch
        %3873 = sbr.rel (%p3871) target = $region112
      $region111: #{forward.1} parent=5 // pred_region
        %s3874 = ssub.s32 %s30, 2
        // Predicated region
        $region113: #{forward.1} parent=111 // pred_check
          %p3875 = pneg %p510
        $region114: #{forward.1} parent=111 // pred_check_branch
          %3877 = sbr.rel (%p3875) target = $region116
        $region115: #{forward.1} parent=111 // pred_region
          %s3878 = sand.u32 %s495, 1
          %s3879 = scalar_lea.sflag [#allocation3], %s3878
          %s3880 = sand.u32 %s495, 1
          %s3881 = scalar_lea.vmem [#allocation2], %s3880
          %3882 = dma.done %s3879, 16
        $region116: #{forward.1} parent=111 // pred_fallthru
          _
      $region112: #{forward.1} parent=5 // pred_fallthru
        _
    $region6: #{forward.1} parent=1 // loop_footer
      %s34 = sadd.s32 1, %s30
    $region7: #{forward.1} parent=1 // loop_footer_branch
      %29 = sbr.rel target = $region3
    $region8: #{forward.1} parent=1 // loop_exit
      _
    %3883 = vsyncpa [#allocation3], 1
    %s3884 = scalar_lea.sflag [#allocation3], 1
    %3885 = vsyncpa %s3884, 1

</llo_original>
